<compile_context>
chip_gen: v7x
topology: tpu7x:2x2x1
jax: 0.10.0
libtpu: 0.0.40
codegen_flags: <defaults>
</compile_context>

<pallas_src>
import jax
import jax.numpy as jnp
import numpy as np
from jax.experimental import pallas as pl
from jax.experimental.pallas import tpu as pltpu

NUM_SPATIAL = 16     # 4 * 4 after adaptive_avg_pool2d
CONV_OUT = 128       # aux conv output channels
FC1_IN = NUM_SPATIAL * CONV_OUT   # 2048
FC1_OUT = 1024
BN_EPS = 1e-3
TN = 512             # FC1_OUT tile per grid step (2 MiB bf16 fc1-weight tile)


def _adaptive_pool_matrix(in_size, out_size):
    """(in_size, out_size) averaging matrix matching F.adaptive_avg_pool2d."""
    m = np.zeros((in_size, out_size), np.float32)
    for i in range(out_size):
        start = (i * in_size) // out_size
        end = -((-(i + 1) * in_size) // out_size)   # ceil((i+1)*in/out)
        m[start:end, i] = 1.0 / (end - start)
    return jnp.asarray(m)


def adaptive_avg_pool2d_to_4x4(x):
    """Exact PyTorch adaptive_avg_pool2d(x, (4,4)) for any H, W (JAX glue)."""
    ph = _adaptive_pool_matrix(x.shape[2], 4)
    pw = _adaptive_pool_matrix(x.shape[3], 4)
    return jnp.einsum("nchw,hi,wj->ncij", x, ph, pw)


def _p_split():
    """2-way split only on dual-TensorCore chips (v7x-class); 1 otherwise."""
    try:
        kind = jax.devices()[0].device_kind.lower()
    except Exception:
        return 1
    return 2 if ("v7" in kind or "tpu7" in kind) else 1


def inception_aux_kernel(x_ref, wc_ref, shift_ref, b1_ref, b2_ref,
                         w1_ref, w2_ref, out_ref, y_scr):
    p = pl.program_id(0)
    j = pl.program_id(1)
    nj = pl.num_programs(1)
    npad = y_scr.shape[0]

    # Conv(1x1, BN-scale folded) + shift + ReLU, computed once per core (first
    # tile) into a (Npad, 2048) bf16 scratch laid out [n, hw*128 + c]; the 16
    # relayout copies are whole sublane-aligned (8,128) slices (no masking).
    @pl.when(j == 0)
    def _():
        y = jnp.dot(x_ref[...], wc_ref[...], preferred_element_type=jnp.float32)
        y = jnp.maximum(y + shift_ref[...], 0.0)          # (16*Npad, 128)
        for hw in range(NUM_SPATIAL):
            y_scr[:, hw * CONV_OUT:(hw + 1) * CONV_OUT] = (
                y[hw * npad:(hw + 1) * npad, :].astype(jnp.bfloat16))

    tile = p * nj + j

    # fc1 tile: (Npad, 2048) bf16 @ (2048, TN) bf16 -> f32 accumulate, +bias, ReLU.
    h = jnp.dot(y_scr[...], w1_ref[...], preferred_element_type=jnp.float32)
    h = jnp.maximum(h + b1_ref[tile], 0.0)                # (Npad, TN)

    # F.dropout(p=0.7) is identity at inference time.
    # fc2 partial over this hidden slice, kept in f32 (tiny matmul).
    partial = jnp.dot(h, w2_ref[...], preferred_element_type=jnp.float32)

    @pl.when(j == 0)
    def _():
        out_ref[...] = partial

    @pl.when(j > 0)
    def _():
        out_ref[...] += partial

    # Fold the fc2 bias in on the last j, and only into the p == 0 partial.
    @pl.when((j == nj - 1) & (p == 0))
    def _():
        out_ref[...] += b2_ref[...]


def inception_aux_forward(x, params, num_classes):
    N, C, H, W = x.shape
    P = _p_split()
    assert FC1_OUT % (P * TN) == 0
    J = FC1_OUT // (P * TN)          # weight tiles per core
    J_total = FC1_OUT // TN          # total weight tiles

    # adaptive_avg_pool2d(x, (4,4)) — exact PyTorch semantics for any H, W.
    xp = adaptive_avg_pool2d_to_4x4(x)                    # (N, C, 4, 4)

    # Spatial-major layout, rows padded to a multiple of 8 per hw group:
    # row index = hw * Npad + n.  Padded rows are sliced off at the end.
    Np = max(8, ((N + 7) // 8) * 8)
    x3 = xp.reshape(N, C, NUM_SPATIAL).transpose(2, 0, 1)  # (16, N, C)
    x3 = jnp.pad(x3, ((0, 0), (0, Np - N), (0, 0)))
    x2d = x3.reshape(NUM_SPATIAL * Np, C)

    # Fold eval-mode BN into the conv weight (scale) and a per-channel shift.
    scale = params["bn_gamma"] / jnp.sqrt(params["bn_rvar"] + BN_EPS)
    shift = (params["bn_beta"] - params["bn_rmean"] * scale).reshape(1, CONV_OUT)
    wc = params["conv_w"][:, :, 0, 0].T * scale[None, :]  # (C, 128), f32

    # fc1 weight permuted so feature index is hw*128 + c (matches y_scr layout),
    # streamed as bf16.  PyTorch flatten index is f = c*16 + hw.
    w1p = (params["fc1_w"].T.reshape(CONV_OUT, NUM_SPATIAL, FC1_OUT)
           .transpose(1, 0, 2).reshape(FC1_IN, FC1_OUT)
           .astype(jnp.bfloat16))                          # (2048, 1024)
    b1r = params["fc1_b"].reshape(J_total, 1, TN)          # resident, per-tile indexed

    # fc2 weight / bias padded to a lane-dense (multiple of 128) output slab (f32).
    cpad = max(128, ((num_classes + 127) // 128) * 128)
    w2p = jnp.zeros((FC1_OUT, cpad), jnp.float32)
    w2p = w2p.at[:, :num_classes].set(params["fc2_w"].T)
    b2p = jnp.zeros((1, cpad), jnp.float32)
    b2p = b2p.at[:, :num_classes].set(params["fc2_b"])

    partials = pl.pallas_call(
        inception_aux_kernel,
        out_shape=jax.ShapeDtypeStruct((P, Np, cpad), jnp.float32),
        grid_spec=pltpu.PrefetchScalarGridSpec(
            num_scalar_prefetch=0,
            grid=(P, J),
            in_specs=[
                # resident (full-array) inputs
                pl.BlockSpec((NUM_SPATIAL * Np, C), lambda p, j: (0, 0)),  # x2d
                pl.BlockSpec((C, CONV_OUT), lambda p, j: (0, 0)),          # wc (BN-scaled)
                pl.BlockSpec((1, CONV_OUT), lambda p, j: (0, 0)),          # BN shift
                pl.BlockSpec((J_total, 1, TN), lambda p, j: (0, 0, 0)),    # fc1 bias (all tiles)
                pl.BlockSpec((1, cpad), lambda p, j: (0, 0)),              # fc2 bias (padded)
                # streamed FC weights (double-buffered by the pipeline)
                pl.BlockSpec((FC1_IN, TN), lambda p, j: (0, p * J + j)),   # fc1 w tile (bf16)
                pl.BlockSpec((TN, cpad), lambda p, j: (p * J + j, 0)),     # fc2 w tile (f32)
            ],
            out_specs=pl.BlockSpec((None, Np, cpad), lambda p, j: (p, 0, 0)),
            scratch_shapes=[pltpu.VMEM((Np, FC1_IN), jnp.bfloat16)],
        ),
        compiler_params=pltpu.CompilerParams(
            dimension_semantics=("parallel", "arbitrary"),
            vmem_limit_bytes=16 * 1024 * 1024,
        ),
    )(x2d, wc, shift, b1r, b2p, w1p, w2p)

    # P == 1: result already finished in-kernel (bias included) — just slice.
    out = partials[0] if P == 1 else partials.sum(axis=0)
    return out[:N, :num_classes]


def reference_forward(x, params):
    """Pure-JAX mirror of the PyTorch InceptionAux forward (eval mode)."""
    N = x.shape[0]
    xp = adaptive_avg_pool2d_to_4x4(x)                                    # adaptive pool
    y = jnp.einsum("nchw,kc->nkhw", xp, params["conv_w"][:, :, 0, 0])     # 1x1 conv, no bias
    y = (y - params["bn_rmean"][None, :, None, None]) \
        / jnp.sqrt(params["bn_rvar"][None, :, None, None] + BN_EPS) \
        * params["bn_gamma"][None, :, None, None] \
        + params["bn_beta"][None, :, None, None]
    y = jnp.maximum(y, 0.0)
    f = y.reshape(N, CONV_OUT * NUM_SPATIAL)                              # torch.flatten(x, 1)
    h = jnp.maximum(f @ params["fc1_w"].T + params["fc1_b"], 0.0)
    return h @ params["fc2_w"].T + params["fc2_b"]


if __name__ == "__main__":
    N, Cin, H, W = 2, 4, 16, 16
    num_classes = 10

    key = jax.random.PRNGKey(0)
    ks = jax.random.split(key, 10)
    x = jax.random.normal(ks[0], (N, Cin, H, W), jnp.float32)
    params = {
        "conv_w": 0.1 * jax.random.normal(ks[1], (CONV_OUT, Cin, 1, 1), jnp.float32),
        "bn_gamma": 1.0 + 0.1 * jax.random.normal(ks[2], (CONV_OUT,), jnp.float32),
        "bn_beta": 0.1 * jax.random.normal(ks[3], (CONV_OUT,), jnp.float32),
        "bn_rmean": 0.1 * jax.random.normal(ks[4], (CONV_OUT,), jnp.float32),
        "bn_rvar": jnp.abs(jax.random.normal(ks[5], (CONV_OUT,), jnp.float32)) + 0.5,
        "fc1_w": 0.02 * jax.random.normal(ks[6], (FC1_OUT, FC1_IN), jnp.float32),
        "fc1_b": 0.02 * jax.random.normal(ks[7], (FC1_OUT,), jnp.float32),
        "fc2_w": 0.02 * jax.random.normal(ks[8], (num_classes, FC1_OUT), jnp.float32),
        "fc2_b": 0.02 * jax.random.normal(ks[9], (num_classes,), jnp.float32),
    }

    out = inception_aux_forward(x, params, num_classes)
    out = jax.block_until_ready(out)

    ref = reference_forward(x, params)
    # bf16 fc1 weight streaming (f32 accumulation) → relaxed tolerance vs fp32 reference.
    np.testing.assert_allclose(np.asarray(out), np.asarray(ref), rtol=2e-2, atol=2e-2)
    print("KERNEL_OK")
</pallas_src>

<mosaic_0001>
module attributes {stable_mosaic.version = 11 : i64} {
  func.func @inception_aux_kernel(%arg0: i32, %arg1: i32, %arg2: memref<128x4xf32, #tpu.memory_space<vmem>>, %arg3: memref<4x128xf32, #tpu.memory_space<vmem>>, %arg4: memref<1x128xf32, #tpu.memory_space<vmem>>, %arg5: memref<2x1x512xf32, #tpu.memory_space<vmem>>, %arg6: memref<1x128xf32, #tpu.memory_space<vmem>>, %arg7: memref<2048x512xbf16, #tpu.memory_space<vmem>>, %arg8: memref<512x128xf32, #tpu.memory_space<vmem>>, %arg9: memref<1x8x128xf32, #tpu.memory_space<vmem>>, %arg10: memref<8x2048xbf16, #tpu.memory_space<vmem>>) attributes {dimension_semantics = [#tpu.dimension_semantics<parallel>, #tpu.dimension_semantics<arbitrary>], iteration_bounds = array<i64: 1, 2>, scalar_prefetch = 0 : i64, scratch_operands = 1 : i64, tpu.core_type = #tpu.core_type<tc>, window_params = [{pipeline_mode = #tpu.pipeline_mode<synchronous>, transform_indices = @transform_0, window_bounds = array<i64: 128, 4>}, {pipeline_mode = #tpu.pipeline_mode<synchronous>, transform_indices = @transform_1, window_bounds = array<i64: 4, 128>}, {pipeline_mode = #tpu.pipeline_mode<synchronous>, transform_indices = @transform_2, window_bounds = array<i64: 1, 128>}, {pipeline_mode = #tpu.pipeline_mode<synchronous>, transform_indices = @transform_3, window_bounds = array<i64: 2, 1, 512>}, {pipeline_mode = #tpu.pipeline_mode<synchronous>, transform_indices = @transform_4, window_bounds = array<i64: 1, 128>}, {transform_indices = @transform_5, window_bounds = array<i64: 2048, 512>}, {transform_indices = @transform_6, window_bounds = array<i64: 512, 128>}, {transform_indices = @transform_7, window_bounds = array<i64: 1, 8, 128>}]} {
    %c0_i32 = arith.constant 0 : i32
    %0 = arith.cmpi eq, %arg1, %c0_i32 : i32
    %1 = arith.extui %0 : i1 to i32
    %c0_i32_0 = arith.constant 0 : i32
    %2 = arith.cmpi ne, %1, %c0_i32_0 : i32
    scf.if %2 {
      %c0_16 = arith.constant 0 : index
      %c0_17 = arith.constant 0 : index
      %28 = vector.load %arg2[%c0_16, %c0_17] : memref<128x4xf32, #tpu.memory_space<vmem>>, vector<128x4xf32>
      %c0_18 = arith.constant 0 : index
      %c0_19 = arith.constant 0 : index
      %29 = vector.load %arg3[%c0_18, %c0_19] : memref<4x128xf32, #tpu.memory_space<vmem>>, vector<4x128xf32>
      %cst_20 = arith.constant dense<0.000000e+00> : vector<128x128xf32>
      %30 = tpu.matmul %28, %29, %cst_20 {dimension_numbers = #tpu.dot_dimension_numbers<[1], [0], [0], [1], [0, 0, 1, 1], [], []>} : vector<128x4xf32>, vector<4x128xf32>, vector<128x128xf32> -> vector<128x128xf32>
      %c0_21 = arith.constant 0 : index
      %c0_22 = arith.constant 0 : index
      %31 = vector.load %arg4[%c0_21, %c0_22] : memref<1x128xf32, #tpu.memory_space<vmem>>, vector<1x128xf32>
      %32 = vector.broadcast %31 : vector<1x128xf32> to vector<128x128xf32>
      %33 = arith.addf %30, %32 : vector<128x128xf32>
      %cst_23 = arith.constant 0.000000e+00 : f32
      %34 = vector.broadcast %cst_23 : f32 to vector<128x128xf32>
      %35 = arith.maximumf %33, %34 : vector<128x128xf32>
      %36 = vector.extract_strided_slice %35 {offsets = [0, 0], sizes = [8, 128], strides = [1, 1]} : vector<128x128xf32> to vector<8x128xf32>
      %37 = arith.truncf %36 : vector<8x128xf32> to vector<8x128xbf16>
      %c0_24 = arith.constant 0 : index
      %c0_25 = arith.constant 0 : index
      %38 = vector.load %arg10[%c0_24, %c0_25] : memref<8x2048xbf16, #tpu.memory_space<vmem>>, vector<8x128xbf16>
      tpu.vector_store %arg10[%c0_24, %c0_25], %37 {strides = array<i32>} : memref<8x2048xbf16, #tpu.memory_space<vmem>>, vector<8x128xbf16>,
      %39 = vector.extract_strided_slice %35 {offsets = [8, 0], sizes = [8, 128], strides = [1, 1]} : vector<128x128xf32> to vector<8x128xf32>
      %40 = arith.truncf %39 : vector<8x128xf32> to vector<8x128xbf16>
      %c0_26 = arith.constant 0 : index
      %c128 = arith.constant 128 : index
      %41 = vector.load %arg10[%c0_26, %c128] : memref<8x2048xbf16, #tpu.memory_space<vmem>>, vector<8x128xbf16>
      tpu.vector_store %arg10[%c0_26, %c128], %40 {strides = array<i32>} : memref<8x2048xbf16, #tpu.memory_space<vmem>>, vector<8x128xbf16>,
      %42 = vector.extract_strided_slice %35 {offsets = [16, 0], sizes = [8, 128], strides = [1, 1]} : vector<128x128xf32> to vector<8x128xf32>
      %43 = arith.truncf %42 : vector<8x128xf32> to vector<8x128xbf16>
      %c0_27 = arith.constant 0 : index
      %c256 = arith.constant 256 : index
      %44 = vector.load %arg10[%c0_27, %c256] : memref<8x2048xbf16, #tpu.memory_space<vmem>>, vector<8x128xbf16>
      tpu.vector_store %arg10[%c0_27, %c256], %43 {strides = array<i32>} : memref<8x2048xbf16, #tpu.memory_space<vmem>>, vector<8x128xbf16>,
      %45 = vector.extract_strided_slice %35 {offsets = [24, 0], sizes = [8, 128], strides = [1, 1]} : vector<128x128xf32> to vector<8x128xf32>
      %46 = arith.truncf %45 : vector<8x128xf32> to vector<8x128xbf16>
      %c0_28 = arith.constant 0 : index
      %c384 = arith.constant 384 : index
      %47 = vector.load %arg10[%c0_28, %c384] : memref<8x2048xbf16, #tpu.memory_space<vmem>>, vector<8x128xbf16>
      tpu.vector_store %arg10[%c0_28, %c384], %46 {strides = array<i32>} : memref<8x2048xbf16, #tpu.memory_space<vmem>>, vector<8x128xbf16>,
      %48 = vector.extract_strided_slice %35 {offsets = [32, 0], sizes = [8, 128], strides = [1, 1]} : vector<128x128xf32> to vector<8x128xf32>
      %49 = arith.truncf %48 : vector<8x128xf32> to vector<8x128xbf16>
      %c0_29 = arith.constant 0 : index
      %c512 = arith.constant 512 : index
      %50 = vector.load %arg10[%c0_29, %c512] : memref<8x2048xbf16, #tpu.memory_space<vmem>>, vector<8x128xbf16>
      tpu.vector_store %arg10[%c0_29, %c512], %49 {strides = array<i32>} : memref<8x2048xbf16, #tpu.memory_space<vmem>>, vector<8x128xbf16>,
      %51 = vector.extract_strided_slice %35 {offsets = [40, 0], sizes = [8, 128], strides = [1, 1]} : vector<128x128xf32> to vector<8x128xf32>
      %52 = arith.truncf %51 : vector<8x128xf32> to vector<8x128xbf16>
      %c0_30 = arith.constant 0 : index
      %c640 = arith.constant 640 : index
      %53 = vector.load %arg10[%c0_30, %c640] : memref<8x2048xbf16, #tpu.memory_space<vmem>>, vector<8x128xbf16>
      tpu.vector_store %arg10[%c0_30, %c640], %52 {strides = array<i32>} : memref<8x2048xbf16, #tpu.memory_space<vmem>>, vector<8x128xbf16>,
      %54 = vector.extract_strided_slice %35 {offsets = [48, 0], sizes = [8, 128], strides = [1, 1]} : vector<128x128xf32> to vector<8x128xf32>
      %55 = arith.truncf %54 : vector<8x128xf32> to vector<8x128xbf16>
      %c0_31 = arith.constant 0 : index
      %c768 = arith.constant 768 : index
      %56 = vector.load %arg10[%c0_31, %c768] : memref<8x2048xbf16, #tpu.memory_space<vmem>>, vector<8x128xbf16>
      tpu.vector_store %arg10[%c0_31, %c768], %55 {strides = array<i32>} : memref<8x2048xbf16, #tpu.memory_space<vmem>>, vector<8x128xbf16>,
      %57 = vector.extract_strided_slice %35 {offsets = [56, 0], sizes = [8, 128], strides = [1, 1]} : vector<128x128xf32> to vector<8x128xf32>
      %58 = arith.truncf %57 : vector<8x128xf32> to vector<8x128xbf16>
      %c0_32 = arith.constant 0 : index
      %c896 = arith.constant 896 : index
      %59 = vector.load %arg10[%c0_32, %c896] : memref<8x2048xbf16, #tpu.memory_space<vmem>>, vector<8x128xbf16>
      tpu.vector_store %arg10[%c0_32, %c896], %58 {strides = array<i32>} : memref<8x2048xbf16, #tpu.memory_space<vmem>>, vector<8x128xbf16>,
      %60 = vector.extract_strided_slice %35 {offsets = [64, 0], sizes = [8, 128], strides = [1, 1]} : vector<128x128xf32> to vector<8x128xf32>
      %61 = arith.truncf %60 : vector<8x128xf32> to vector<8x128xbf16>
      %c0_33 = arith.constant 0 : index
      %c1024 = arith.constant 1024 : index
      %62 = vector.load %arg10[%c0_33, %c1024] : memref<8x2048xbf16, #tpu.memory_space<vmem>>, vector<8x128xbf16>
      tpu.vector_store %arg10[%c0_33, %c1024], %61 {strides = array<i32>} : memref<8x2048xbf16, #tpu.memory_space<vmem>>, vector<8x128xbf16>,
      %63 = vector.extract_strided_slice %35 {offsets = [72, 0], sizes = [8, 128], strides = [1, 1]} : vector<128x128xf32> to vector<8x128xf32>
      %64 = arith.truncf %63 : vector<8x128xf32> to vector<8x128xbf16>
      %c0_34 = arith.constant 0 : index
      %c1152 = arith.constant 1152 : index
      %65 = vector.load %arg10[%c0_34, %c1152] : memref<8x2048xbf16, #tpu.memory_space<vmem>>, vector<8x128xbf16>
      tpu.vector_store %arg10[%c0_34, %c1152], %64 {strides = array<i32>} : memref<8x2048xbf16, #tpu.memory_space<vmem>>, vector<8x128xbf16>,
      %66 = vector.extract_strided_slice %35 {offsets = [80, 0], sizes = [8, 128], strides = [1, 1]} : vector<128x128xf32> to vector<8x128xf32>
      %67 = arith.truncf %66 : vector<8x128xf32> to vector<8x128xbf16>
      %c0_35 = arith.constant 0 : index
      %c1280 = arith.constant 1280 : index
      %68 = vector.load %arg10[%c0_35, %c1280] : memref<8x2048xbf16, #tpu.memory_space<vmem>>, vector<8x128xbf16>
      tpu.vector_store %arg10[%c0_35, %c1280], %67 {strides = array<i32>} : memref<8x2048xbf16, #tpu.memory_space<vmem>>, vector<8x128xbf16>,
      %69 = vector.extract_strided_slice %35 {offsets = [88, 0], sizes = [8, 128], strides = [1, 1]} : vector<128x128xf32> to vector<8x128xf32>
      %70 = arith.truncf %69 : vector<8x128xf32> to vector<8x128xbf16>
      %c0_36 = arith.constant 0 : index
      %c1408 = arith.constant 1408 : index
      %71 = vector.load %arg10[%c0_36, %c1408] : memref<8x2048xbf16, #tpu.memory_space<vmem>>, vector<8x128xbf16>
      tpu.vector_store %arg10[%c0_36, %c1408], %70 {strides = array<i32>} : memref<8x2048xbf16, #tpu.memory_space<vmem>>, vector<8x128xbf16>,
      %72 = vector.extract_strided_slice %35 {offsets = [96, 0], sizes = [8, 128], strides = [1, 1]} : vector<128x128xf32> to vector<8x128xf32>
      %73 = arith.truncf %72 : vector<8x128xf32> to vector<8x128xbf16>
      %c0_37 = arith.constant 0 : index
      %c1536 = arith.constant 1536 : index
      %74 = vector.load %arg10[%c0_37, %c1536] : memref<8x2048xbf16, #tpu.memory_space<vmem>>, vector<8x128xbf16>
      tpu.vector_store %arg10[%c0_37, %c1536], %73 {strides = array<i32>} : memref<8x2048xbf16, #tpu.memory_space<vmem>>, vector<8x128xbf16>,
      %75 = vector.extract_strided_slice %35 {offsets = [104, 0], sizes = [8, 128], strides = [1, 1]} : vector<128x128xf32> to vector<8x128xf32>
      %76 = arith.truncf %75 : vector<8x128xf32> to vector<8x128xbf16>
      %c0_38 = arith.constant 0 : index
      %c1664 = arith.constant 1664 : index
      %77 = vector.load %arg10[%c0_38, %c1664] : memref<8x2048xbf16, #tpu.memory_space<vmem>>, vector<8x128xbf16>
      tpu.vector_store %arg10[%c0_38, %c1664], %76 {strides = array<i32>} : memref<8x2048xbf16, #tpu.memory_space<vmem>>, vector<8x128xbf16>,
      %78 = vector.extract_strided_slice %35 {offsets = [112, 0], sizes = [8, 128], strides = [1, 1]} : vector<128x128xf32> to vector<8x128xf32>
      %79 = arith.truncf %78 : vector<8x128xf32> to vector<8x128xbf16>
      %c0_39 = arith.constant 0 : index
      %c1792 = arith.constant 1792 : index
      %80 = vector.load %arg10[%c0_39, %c1792] : memref<8x2048xbf16, #tpu.memory_space<vmem>>, vector<8x128xbf16>
      tpu.vector_store %arg10[%c0_39, %c1792], %79 {strides = array<i32>} : memref<8x2048xbf16, #tpu.memory_space<vmem>>, vector<8x128xbf16>,
      %81 = vector.extract_strided_slice %35 {offsets = [120, 0], sizes = [8, 128], strides = [1, 1]} : vector<128x128xf32> to vector<8x128xf32>
      %82 = arith.truncf %81 : vector<8x128xf32> to vector<8x128xbf16>
      %c0_40 = arith.constant 0 : index
      %c1920 = arith.constant 1920 : index
      %83 = vector.load %arg10[%c0_40, %c1920] : memref<8x2048xbf16, #tpu.memory_space<vmem>>, vector<8x128xbf16>
      tpu.vector_store %arg10[%c0_40, %c1920], %82 {strides = array<i32>} : memref<8x2048xbf16, #tpu.memory_space<vmem>>, vector<8x128xbf16>,
    } else {
    }
    %c2_i32 = arith.constant 2 : i32
    %3 = arith.muli %arg0, %c2_i32 : i32
    %4 = arith.addi %3, %arg1 : i32
    %c0 = arith.constant 0 : index
    %c0_1 = arith.constant 0 : index
    %5 = vector.load %arg10[%c0, %c0_1] : memref<8x2048xbf16, #tpu.memory_space<vmem>>, vector<8x2048xbf16>
    %c0_2 = arith.constant 0 : index
    %c0_3 = arith.constant 0 : index
    %6 = vector.load %arg7[%c0_2, %c0_3] : memref<2048x512xbf16, #tpu.memory_space<vmem>>, vector<2048x512xbf16>
    %cst = arith.constant dense<0.000000e+00> : vector<8x512xf32>
    %7 = tpu.matmul %5, %6, %cst {dimension_numbers = #tpu.dot_dimension_numbers<[1], [0], [0], [1], [0, 0, 1, 1], [], []>} : vector<8x2048xbf16>, vector<2048x512xbf16>, vector<8x512xf32> -> vector<8x512xf32>
    %8 = arith.index_cast %4 : i32 to index
    %c0_4 = arith.constant 0 : index
    %c0_5 = arith.constant 0 : index
    %9 = vector.load %arg5[%8, %c0_4, %c0_5] : memref<2x1x512xf32, #tpu.memory_space<vmem>>, vector<1x1x512xf32>
    %10 = vector.shape_cast %9 : vector<1x1x512xf32> to vector<1x512xf32>
    %11 = vector.broadcast %10 : vector<1x512xf32> to vector<8x512xf32>
    %12 = arith.addf %7, %11 : vector<8x512xf32>
    %cst_6 = arith.constant 0.000000e+00 : f32
    %13 = vector.broadcast %cst_6 : f32 to vector<8x512xf32>
    %14 = arith.maximumf %12, %13 : vector<8x512xf32>
    %c0_7 = arith.constant 0 : index
    %c0_8 = arith.constant 0 : index
    %15 = vector.load %arg8[%c0_7, %c0_8] : memref<512x128xf32, #tpu.memory_space<vmem>>, vector<512x128xf32>
    %cst_9 = arith.constant dense<0.000000e+00> : vector<8x128xf32>
    %16 = tpu.matmul %14, %15, %cst_9 {dimension_numbers = #tpu.dot_dimension_numbers<[1], [0], [0], [1], [0, 0, 1, 1], [], []>} : vector<8x512xf32>, vector<512x128xf32>, vector<8x128xf32> -> vector<8x128xf32>
    %c0_i32_10 = arith.constant 0 : i32
    %17 = arith.cmpi eq, %arg1, %c0_i32_10 : i32
    %18 = arith.extui %17 : i1 to i32
    %c0_i32_11 = arith.constant 0 : i32
    %19 = arith.cmpi ne, %18, %c0_i32_11 : i32
    scf.if %19 {
      %c0_16 = arith.constant 0 : index
      %c0_17 = arith.constant 0 : index
      %c0_18 = arith.constant 0 : index
      %28 = vector.load %arg9[%c0_16, %c0_17, %c0_18] : memref<1x8x128xf32, #tpu.memory_space<vmem>>, vector<1x8x128xf32>
      %29 = vector.shape_cast %28 : vector<1x8x128xf32> to vector<8x128xf32>
      %30 = vector.shape_cast %16 : vector<8x128xf32> to vector<1x8x128xf32>
      tpu.vector_store %arg9[%c0_16, %c0_17, %c0_18], %30 {strides = array<i32>} : memref<1x8x128xf32, #tpu.memory_space<vmem>>, vector<1x8x128xf32>,
    } else {
    }
    %c0_i32_12 = arith.constant 0 : i32
    %20 = arith.cmpi sgt, %arg1, %c0_i32_12 : i32
    %21 = arith.extui %20 : i1 to i32
    %c0_i32_13 = arith.constant 0 : i32
    %22 = arith.cmpi ne, %21, %c0_i32_13 : i32
    scf.if %22 {
      %c0_16 = arith.constant 0 : index
      %c0_17 = arith.constant 0 : index
      %c0_18 = arith.constant 0 : index
      %28 = vector.load %arg9[%c0_16, %c0_17, %c0_18] : memref<1x8x128xf32, #tpu.memory_space<vmem>>, vector<1x8x128xf32>
      %29 = vector.shape_cast %28 : vector<1x8x128xf32> to vector<8x128xf32>
      %30 = arith.addf %29, %16 : vector<8x128xf32>
      %c0_19 = arith.constant 0 : index
      %c0_20 = arith.constant 0 : index
      %c0_21 = arith.constant 0 : index
      %31 = vector.load %arg9[%c0_19, %c0_20, %c0_21] : memref<1x8x128xf32, #tpu.memory_space<vmem>>, vector<1x8x128xf32>
      %32 = vector.shape_cast %31 : vector<1x8x128xf32> to vector<8x128xf32>
      %33 = vector.shape_cast %30 : vector<8x128xf32> to vector<1x8x128xf32>
      tpu.vector_store %arg9[%c0_19, %c0_20, %c0_21], %33 {strides = array<i32>} : memref<1x8x128xf32, #tpu.memory_space<vmem>>, vector<1x8x128xf32>,
    } else {
    }
    %c1_i32 = arith.constant 1 : i32
    %23 = arith.cmpi eq, %arg1, %c1_i32 : i32
    %c0_i32_14 = arith.constant 0 : i32
    %24 = arith.cmpi eq, %arg0, %c0_i32_14 : i32
    %25 = arith.andi %23, %24 : i1
    %26 = arith.extui %25 : i1 to i32
    %c0_i32_15 = arith.constant 0 : i32
    %27 = arith.cmpi ne, %26, %c0_i32_15 : i32
    scf.if %27 {
      %c0_16 = arith.constant 0 : index
      %c0_17 = arith.constant 0 : index
      %c0_18 = arith.constant 0 : index
      %28 = vector.load %arg9[%c0_16, %c0_17, %c0_18] : memref<1x8x128xf32, #tpu.memory_space<vmem>>, vector<1x8x128xf32>
      %29 = vector.shape_cast %28 : vector<1x8x128xf32> to vector<8x128xf32>
      %c0_19 = arith.constant 0 : index
      %c0_20 = arith.constant 0 : index
      %30 = vector.load %arg6[%c0_19, %c0_20] : memref<1x128xf32, #tpu.memory_space<vmem>>, vector<1x128xf32>
      %31 = vector.broadcast %30 : vector<1x128xf32> to vector<8x128xf32>
      %32 = arith.addf %29, %31 : vector<8x128xf32>
      %c0_21 = arith.constant 0 : index
      %c0_22 = arith.constant 0 : index
      %c0_23 = arith.constant 0 : index
      %33 = vector.load %arg9[%c0_21, %c0_22, %c0_23] : memref<1x8x128xf32, #tpu.memory_space<vmem>>, vector<1x8x128xf32>
      %34 = vector.shape_cast %33 : vector<1x8x128xf32> to vector<8x128xf32>
      %35 = vector.shape_cast %32 : vector<8x128xf32> to vector<1x8x128xf32>
      tpu.vector_store %arg9[%c0_21, %c0_22, %c0_23], %35 {strides = array<i32>} : memref<1x8x128xf32, #tpu.memory_space<vmem>>, vector<1x8x128xf32>,
    } else {
    }
    return
  }
  func.func @transform_0(%arg0: i32, %arg1: i32) -> (i32, i32) {
    %c0_i32 = arith.constant 0 : i32
    %c0_i32_0 = arith.constant 0 : i32
    %c0_i32_1 = arith.constant 0 : i32
    return %c0_i32, %c0_i32_0 : i32, i32
  }
  func.func @transform_1(%arg0: i32, %arg1: i32) -> (i32, i32) {
    %c0_i32 = arith.constant 0 : i32
    %c0_i32_0 = arith.constant 0 : i32
    %c0_i32_1 = arith.constant 0 : i32
    return %c0_i32, %c0_i32_0 : i32, i32
  }
  func.func @transform_2(%arg0: i32, %arg1: i32) -> (i32, i32) {
    %c0_i32 = arith.constant 0 : i32
    %c0_i32_0 = arith.constant 0 : i32
    %c0_i32_1 = arith.constant 0 : i32
    return %c0_i32, %c0_i32_0 : i32, i32
  }
  func.func @transform_3(%arg0: i32, %arg1: i32) -> (i32, i32, i32) {
    %c0_i32 = arith.constant 0 : i32
    %c0_i32_0 = arith.constant 0 : i32
    %c0_i32_1 = arith.constant 0 : i32
    %c0_i32_2 = arith.constant 0 : i32
    return %c0_i32, %c0_i32_0, %c0_i32_1 : i32, i32, i32
  }
  func.func @transform_4(%arg0: i32, %arg1: i32) -> (i32, i32) {
    %c0_i32 = arith.constant 0 : i32
    %c0_i32_0 = arith.constant 0 : i32
    %c0_i32_1 = arith.constant 0 : i32
    return %c0_i32, %c0_i32_0 : i32, i32
  }
  func.func @transform_5(%arg0: i32, %arg1: i32) -> (i32, i32) {
    %c2_i32 = arith.constant 2 : i32
    %0 = arith.muli %arg0, %c2_i32 : i32
    %1 = arith.addi %0, %arg1 : i32
    %c0_i32 = arith.constant 0 : i32
    %c0_i32_0 = arith.constant 0 : i32
    return %c0_i32, %1 : i32, i32
  }
  func.func @transform_6(%arg0: i32, %arg1: i32) -> (i32, i32) {
    %c2_i32 = arith.constant 2 : i32
    %0 = arith.muli %arg0, %c2_i32 : i32
    %1 = arith.addi %0, %arg1 : i32
    %c0_i32 = arith.constant 0 : i32
    %c0_i32_0 = arith.constant 0 : i32
    return %1, %c0_i32 : i32, i32
  }
  func.func @transform_7(%arg0: i32, %arg1: i32) -> (i32, i32, i32) {
    %c0_i32 = arith.constant 0 : i32
    %c0_i32_0 = arith.constant 0 : i32
    %c0_i32_1 = arith.constant 0 : i32
    return %arg0, %c0_i32, %c0_i32_0 : i32, i32, i32
  }
}

</mosaic_0001>

<llo_original>
// kernel: tpu_custom_call.1
$region0: #{tpu_custom_call.1}
  #allocation0 [shape = 'u32[]', space=smem, size = 0x4, offset = 0x4, fixed_abs, tag = 'smem constant byte address 0x4 - core index']
  #allocation1 [shape = 'u32[144,128]{1,0:T(1,128)}', space=vmem, size = 0x12000, scoped, tag = 'internal scratch']
  #allocation2 [shape = 'bf16[8,2048]{1,0:T(8,128)(2,1)}', space=vmem, size = 0x8000, scoped, tag = 'scratch operand']
  %s0 = inlined_call_operand.vmem [shape: f32[128,4], index: 0, kind: input, shape index: {}]
  %s1 = inlined_call_operand.hbm [shape: f32[4,128], index: 1, kind: input, shape index: {}]
  %s2 = inlined_call_operand.hbm [shape: f32[1,128], index: 2, kind: input, shape index: {}]
  %s3 = inlined_call_operand.hbm [shape: f32[2,1,512], index: 3, kind: input, shape index: {}]
  %s4 = inlined_call_operand.hbm [shape: f32[1,128], index: 4, kind: input, shape index: {}]
  %s5 = inlined_call_operand.hbm [shape: bf16[2048,1024], index: 5, kind: input, shape index: {}]
  %s6 = inlined_call_operand.hbm [shape: f32[1024,128], index: 6, kind: input, shape index: {}]
  %s7 = inlined_call_operand.hbm [shape: f32[1,8,128], index: 7, kind: output, shape index: {}]
  %s8 = sld [smem:[#allocation0]]
  $region101: #{tpu_custom_call.1} parent=0
    _
  %s10 = ssub.s32 1, %s8
  %s11 = scalar_select 0, %s10, %s8
  $region1: #{tpu_custom_call.1} parent=0
    #allocation3 [shape = 'u8[2048]{0}', space=vmem, size = 0x800, scoped, tag = 'input window, operand 1, single buffered']
    #allocation4 [shape = 's32[2]{0}', space=sflag, size = 0x8, scoped, tag = 'scoped memory for tpu_custom_call.1']
    #allocation5 [shape = 's32[2]{0}', space=sflag, size = 0x8, scoped, tag = 'scoped memory for tpu_custom_call.1']
    #allocation6 [shape = 'u8[512]{0}', space=vmem, size = 0x400, scoped, tag = 'input window, operand 2, single buffered']
    #allocation7 [shape = 's32[1]{0}', space=sflag, size = 0x4, scoped, tag = 'scoped memory for tpu_custom_call.1']
    #allocation8 [shape = 'u8[4096]{0}', space=vmem, size = 0x1000, scoped, tag = 'input window, operand 3, single buffered']
    #allocation9 [shape = 'u8[512]{0}', space=vmem, size = 0x400, scoped, tag = 'input window, operand 4, single buffered']
    #allocation10 [shape = 's32[1]{0}', space=sflag, size = 0x4, scoped, tag = 'scoped memory for tpu_custom_call.1']
    #allocation11 [shape = 'u8[4194304]{0}', space=vmem, size = 0x400000, scoped, tag = 'input window, operand 5']
    #allocation12 [shape = 'u8[524288]{0}', space=vmem, size = 0x80000, scoped, tag = 'input window, operand 6']
    #allocation13 [shape = 'u8[4096]{0}', space=vmem, size = 0x1000, scoped, tag = 'output window, operand 0, single buffered']
    %12 = vsyncpa [#allocation4], 0
    %13 = vsyncpa [#allocation7], 0
    %14 = vsyncpa [#allocation10], 0
    %15 = vsyncpa [#allocation5], 0
    loop: start=0, step=1, limit=4
    $region2: #{tpu_custom_call.1} parent=1 // loop_pre_header
      _
    $region3: #{tpu_custom_call.1} parent=1 // loop_header
      %s17 = sphi 0, %s21
      %p18 = scmp.ge.s32.totalorder %s17, 4
      %s24 = sphi 0, %s36
      %s25 = sphi 0, %s32
      %s26 = sphi 0, %s24
      %s27 = sphi 0, %s25
      %s28 = sphi 0, %s26
      %s29 = sphi 0, %s27
      %s37 = sphi 0, %s37
      %s39 = sphi 0, %s37
      %s40 = sphi 0, %s39
      %s54 = sphi 0, %s40
      %s58 = sphi 0, %s58
      %s60 = sphi 0, %s58
      %s61 = sphi 0, %s60
      %s75 = sphi 0, %s61
      %s79 = sphi 0, %s79
      %s81 = sphi 0, %s79
      %s82 = sphi 0, %s81
      %s96 = sphi 0, %s82
      %s100 = sphi 0, %s100
      %s102 = sphi 0, %s100
      %s103 = sphi 0, %s102
      %s117 = sphi 0, %s103
      %s121 = sphi 0, %s121
      %s123 = sphi 0, %s121
      %s124 = sphi 0, %s123
      %s138 = sphi 0, %s124
      %s148 = sphi 0, %s150
      %s151 = sphi 0, %s148
      %s152 = sphi 0, %s151
      %s168 = sphi 0, %s152
      %s178 = sphi 0, %s180
      %s181 = sphi 0, %s178
      %s182 = sphi 0, %s181
      %s198 = sphi 0, %s182
      %s204 = sphi 0, %s206
      %s207 = sphi 0, %s204
      %s208 = sphi 0, %s207
      %s224 = sphi 0, %s208
    $region4: #{tpu_custom_call.1} parent=1 // loop_header_branch
      %20 = sbr.rel (%p18) target = $region8
    $region5: #{tpu_custom_call.1} parent=1 // loop_body
      %s22 = ssub.s32 %s17, 1
      %s23 = ssub.s32 %s17, 2
      %s30 = sadd.s32 1, %s25
      %p31 = scmp.ge.s32.totalorder %s30, 2
      %s32 = scalar_select %p31, 0, %s30
      %s33 = sadd.s32 1, %s24
      %s34 = scalar_select %p31, %s33, %s24
      %p35 = scmp.ge.s32.totalorder %s34, 1
      %s36 = scalar_select %p35, 0, %s34
      %s38 = sadd.s32 %s37, 1
      %p41 = scmp.eq.s32.totalorder %s17, 1
      %p42 = scmp.ne.s32.totalorder %s37, %s39
      %p43 = scmp.eq.s32.totalorder %s17, 0
      %p44 = por %p42, %p43
      %p45 = scmp.ne.s32.totalorder %s37, %s39
      %p46 = scmp.eq.s32.totalorder %s22, 1
      %p47 = por %p45, %p46
      %p48 = scmp.ne.s32.totalorder %s39, %s40
      %p49 = scmp.eq.s32.totalorder %s22, 0
      %p50 = por %p48, %p49
      %p51 = scmp.ne.s32.totalorder %s39, %s40
      %p52 = scmp.eq.s32.totalorder %s23, 1
      %p53 = por %p51, %p52
      %p55 = scmp.ne.s32.totalorder %s40, %s54
      %p56 = scmp.eq.s32.totalorder %s23, 0
      %p57 = por %p55, %p56
      %s59 = sadd.s32 %s58, 1
      %p62 = scmp.eq.s32.totalorder %s17, 1
      %p63 = scmp.ne.s32.totalorder %s58, %s60
      %p64 = scmp.eq.s32.totalorder %s17, 0
      %p65 = por %p63, %p64
      %p66 = scmp.ne.s32.totalorder %s58, %s60
      %p67 = scmp.eq.s32.totalorder %s22, 1
      %p68 = por %p66, %p67
      %p69 = scmp.ne.s32.totalorder %s60, %s61
      %p70 = scmp.eq.s32.totalorder %s22, 0
      %p71 = por %p69, %p70
      %p72 = scmp.ne.s32.totalorder %s60, %s61
      %p73 = scmp.eq.s32.totalorder %s23, 1
      %p74 = por %p72, %p73
      %p76 = scmp.ne.s32.totalorder %s61, %s75
      %p77 = scmp.eq.s32.totalorder %s23, 0
      %p78 = por %p76, %p77
      %s80 = sadd.s32 %s79, 1
      %p83 = scmp.eq.s32.totalorder %s17, 1
      %p84 = scmp.ne.s32.totalorder %s79, %s81
      %p85 = scmp.eq.s32.totalorder %s17, 0
      %p86 = por %p84, %p85
      %p87 = scmp.ne.s32.totalorder %s79, %s81
      %p88 = scmp.eq.s32.totalorder %s22, 1
      %p89 = por %p87, %p88
      %p90 = scmp.ne.s32.totalorder %s81, %s82
      %p91 = scmp.eq.s32.totalorder %s22, 0
      %p92 = por %p90, %p91
      %p93 = scmp.ne.s32.totalorder %s81, %s82
      %p94 = scmp.eq.s32.totalorder %s23, 1
      %p95 = por %p93, %p94
      %p97 = scmp.ne.s32.totalorder %s82, %s96
      %p98 = scmp.eq.s32.totalorder %s23, 0
      %p99 = por %p97, %p98
      %s101 = sadd.s32 %s100, 1
      %p104 = scmp.eq.s32.totalorder %s17, 1
      %p105 = scmp.ne.s32.totalorder %s100, %s102
      %p106 = scmp.eq.s32.totalorder %s17, 0
      %p107 = por %p105, %p106
      %p108 = scmp.ne.s32.totalorder %s100, %s102
      %p109 = scmp.eq.s32.totalorder %s22, 1
      %p110 = por %p108, %p109
      %p111 = scmp.ne.s32.totalorder %s102, %s103
      %p112 = scmp.eq.s32.totalorder %s22, 0
      %p113 = por %p111, %p112
      %p114 = scmp.ne.s32.totalorder %s102, %s103
      %p115 = scmp.eq.s32.totalorder %s23, 1
      %p116 = por %p114, %p115
      %p118 = scmp.ne.s32.totalorder %s103, %s117
      %p119 = scmp.eq.s32.totalorder %s23, 0
      %p120 = por %p118, %p119
      %s122 = sadd.s32 %s121, 1
      %p125 = scmp.eq.s32.totalorder %s17, 1
      %p126 = scmp.ne.s32.totalorder %s121, %s123
      %p127 = scmp.eq.s32.totalorder %s17, 0
      %p128 = por %p126, %p127
      %p129 = scmp.ne.s32.totalorder %s121, %s123
      %p130 = scmp.eq.s32.totalorder %s22, 1
      %p131 = por %p129, %p130
      %p132 = scmp.ne.s32.totalorder %s123, %s124
      %p133 = scmp.eq.s32.totalorder %s22, 0
      %p134 = por %p132, %p133
      %p135 = scmp.ne.s32.totalorder %s123, %s124
      %p136 = scmp.eq.s32.totalorder %s23, 1
      %p137 = por %p135, %p136
      %p139 = scmp.ne.s32.totalorder %s124, %s138
      %p140 = scmp.eq.s32.totalorder %s23, 0
      %p141 = por %p139, %p140
      %s142 = smul.u32 %s24, 2
      %s143 = sadd.s32 %s142, %s25
      %s144 = smul.u32 %s36, 2
      %s145 = sadd.s32 %s144, %s32
      %s146 = ssub.s32 %s143, %s145
      %p147 = scmp.eq.s32.totalorder %s146, 0
      %s149 = sadd.s32 %s148, 1
      %s150 = scalar_select %p147, %s148, %s149
      %p153 = pneg %p147
      %p154 = scmp.eq.s32.totalorder %s17, 1
      %p155 = por %p153, %p154
      %p156 = scmp.ne.s32.totalorder %s148, %s151
      %p157 = scmp.eq.s32.totalorder %s17, 0
      %p158 = por %p156, %p157
      %p159 = scmp.ne.s32.totalorder %s148, %s151
      %p160 = scmp.eq.s32.totalorder %s22, 1
      %p161 = por %p159, %p160
      %p162 = scmp.ne.s32.totalorder %s151, %s152
      %p163 = scmp.eq.s32.totalorder %s22, 0
      %p164 = por %p162, %p163
      %p165 = scmp.ne.s32.totalorder %s151, %s152
      %p166 = scmp.eq.s32.totalorder %s23, 1
      %p167 = por %p165, %p166
      %p169 = scmp.ne.s32.totalorder %s152, %s168
      %p170 = scmp.eq.s32.totalorder %s23, 0
      %p171 = por %p169, %p170
      %s172 = smul.u32 %s24, 2
      %s173 = sadd.s32 %s172, %s25
      %s174 = smul.u32 %s36, 2
      %s175 = sadd.s32 %s174, %s32
      %s176 = ssub.s32 %s173, %s175
      %p177 = scmp.eq.s32.totalorder %s176, 0
      %s179 = sadd.s32 %s178, 1
      %s180 = scalar_select %p177, %s178, %s179
      %p183 = pneg %p177
      %p184 = scmp.eq.s32.totalorder %s17, 1
      %p185 = por %p183, %p184
      %p186 = scmp.ne.s32.totalorder %s178, %s181
      %p187 = scmp.eq.s32.totalorder %s17, 0
      %p188 = por %p186, %p187
      %p189 = scmp.ne.s32.totalorder %s178, %s181
      %p190 = scmp.eq.s32.totalorder %s22, 1
      %p191 = por %p189, %p190
      %p192 = scmp.ne.s32.totalorder %s181, %s182
      %p193 = scmp.eq.s32.totalorder %s22, 0
      %p194 = por %p192, %p193
      %p195 = scmp.ne.s32.totalorder %s181, %s182
      %p196 = scmp.eq.s32.totalorder %s23, 1
      %p197 = por %p195, %p196
      %p199 = scmp.ne.s32.totalorder %s182, %s198
      %p200 = scmp.eq.s32.totalorder %s23, 0
      %p201 = por %p199, %p200
      %s202 = ssub.s32 %s24, %s36
      %p203 = scmp.eq.s32.totalorder %s202, 0
      %s205 = sadd.s32 %s204, 1
      %s206 = scalar_select %p203, %s204, %s205
      %p209 = pneg %p203
      %p210 = scmp.eq.s32.totalorder %s17, 1
      %p211 = por %p209, %p210
      %p212 = scmp.ne.s32.totalorder %s204, %s207
      %p213 = scmp.eq.s32.totalorder %s17, 0
      %p214 = por %p212, %p213
      %p215 = scmp.ne.s32.totalorder %s204, %s207
      %p216 = scmp.eq.s32.totalorder %s22, 1
      %p217 = por %p215, %p216
      %p218 = scmp.ne.s32.totalorder %s207, %s208
      %p219 = scmp.eq.s32.totalorder %s22, 0
      %p220 = por %p218, %p219
      %p221 = scmp.ne.s32.totalorder %s207, %s208
      %p222 = scmp.eq.s32.totalorder %s23, 1
      %p223 = por %p221, %p222
      %p225 = scmp.ne.s32.totalorder %s208, %s224
      %p226 = scmp.eq.s32.totalorder %s23, 0
      %p227 = por %p225, %p226
      %p228 = scmp.le.s32.totalorder 1, %s17
      %p229 = scmp.lt.s32.totalorder %s17, 3
      %p230 = pnand %p228, %p229
      %p231 = pneg %p230
      // Predicated region
      $region9: #{tpu_custom_call.1} parent=5 // pred_check
        _
      $region10: #{tpu_custom_call.1} parent=5 // pred_check_branch
        %233 = sbr.rel (%p230) target = $region12
      $region11: #{tpu_custom_call.1} parent=5 // pred_region
        %s234 = ssub.s32 %s17, 1
        // Predicated region
        $region13: #{tpu_custom_call.1} parent=11 // pred_check
          %p235 = pneg %p50
        $region14: #{tpu_custom_call.1} parent=11 // pred_check_branch
          %237 = sbr.rel (%p235) target = $region16
        $region15: #{tpu_custom_call.1} parent=11 // pred_region
          _
        $region16: #{tpu_custom_call.1} parent=11 // pred_fallthru
          _
        // Predicated region
        $region17: #{tpu_custom_call.1} parent=11 // pred_check
          %p238 = pneg %p71
        $region18: #{tpu_custom_call.1} parent=11 // pred_check_branch
          %240 = sbr.rel (%p238) target = $region20
        $region19: #{tpu_custom_call.1} parent=11 // pred_region
          %s242 = ssub.s32 64, 64
          %243 = vsyncadd [#allocation4], %s242
          %s245 = sshll.u32 [#allocation3], 4
          %s246 = int_to_ptr.vmem [resolvable:$true] %s245
          %248 = dma.hbm_to_vmem [thread:$0]  %s1, 64, %s246, [#allocation4]
        $region20: #{tpu_custom_call.1} parent=11 // pred_fallthru
          _
        // Predicated region
        $region21: #{tpu_custom_call.1} parent=11 // pred_check
          %p249 = pneg %p92
        $region22: #{tpu_custom_call.1} parent=11 // pred_check_branch
          %251 = sbr.rel (%p249) target = $region24
        $region23: #{tpu_custom_call.1} parent=11 // pred_region
          %s253 = ssub.s32 16, 16
          %254 = vsyncadd [#allocation7], %s253
          %s256 = sshll.u32 [#allocation6], 4
          %s257 = int_to_ptr.vmem [resolvable:$true] %s256
          %259 = dma.hbm_to_vmem [thread:$0]  %s2, 16, %s257, [#allocation7]
        $region24: #{tpu_custom_call.1} parent=11 // pred_fallthru
          _
        // Predicated region
        $region25: #{tpu_custom_call.1} parent=11 // pred_check
          %p260 = pneg %p113
        $region26: #{tpu_custom_call.1} parent=11 // pred_check_branch
          %262 = sbr.rel (%p260) target = $region28
        $region27: #{tpu_custom_call.1} parent=11 // pred_region
          %s264 = ssub.s32 128, 128
          %265 = vsyncadd [#allocation7], %s264
          %s266 = sshll.u32 [#allocation8], 4
          %s267 = int_to_ptr.vmem [resolvable:$true] %s266
          %272 = dma.hbm_to_vmem [thread:$0]  %s3, 128, %s267, [#allocation7], 64, 64, 4
        $region28: #{tpu_custom_call.1} parent=11 // pred_fallthru
          _
        // Predicated region
        $region29: #{tpu_custom_call.1} parent=11 // pred_check
          %p273 = pneg %p134
        $region30: #{tpu_custom_call.1} parent=11 // pred_check_branch
          %275 = sbr.rel (%p273) target = $region32
        $region31: #{tpu_custom_call.1} parent=11 // pred_region
          %s277 = ssub.s32 16, 16
          %278 = vsyncadd [#allocation10], %s277
          %s280 = sshll.u32 [#allocation9], 4
          %s281 = int_to_ptr.vmem [resolvable:$true] %s280
          %283 = dma.hbm_to_vmem [thread:$0]  %s4, 16, %s281, [#allocation10]
        $region32: #{tpu_custom_call.1} parent=11 // pred_fallthru
          _
      $region12: #{tpu_custom_call.1} parent=5 // pred_fallthru
        _
      %p284 = scmp.lt.s32.totalorder %s17, 2
      // Predicated region
      $region33: #{tpu_custom_call.1} parent=5 // pred_check
        %p285 = pneg %p284
      $region34: #{tpu_custom_call.1} parent=5 // pred_check_branch
        %287 = sbr.rel (%p285) target = $region36
      $region35: #{tpu_custom_call.1} parent=5 // pred_region
        // Predicated region
        $region37: #{tpu_custom_call.1} parent=35 // pred_check
          %p288 = pneg %p158
        $region38: #{tpu_custom_call.1} parent=35 // pred_check_branch
          %290 = sbr.rel (%p288) target = $region40
        $region39: #{tpu_custom_call.1} parent=35 // pred_region
          %s291 = sand.u32 %s17, 1
          %s292 = scalar_lea.sflag [#allocation4], %s291
          %s293 = sand.u32 %s148, 1
          %s294 = smul.addr %s293, 4096
          %s295 = scalar_lea.vmem [#allocation11], %s294
          %s296 = smul.u32 %s24, 2
          %s297 = sadd.s32 %s296, %s25
          %s298 = smul.u32 4, %s297
          %s300 = ssub.s32 65536, 65536
          %301 = vsyncadd %s292, %s300
          %s302 = smul.addr %s298, 64
          %s303 = scalar_lea.hbm %s5, %s302
          %s304 = sshll.u32 %s295, 4
          %s305 = int_to_ptr.vmem [resolvable:$true] %s304
          %310 = dma.hbm_to_vmem [thread:$0]  %s303, 65536, %s305, %s292, 512, 256, 16
        $region40: #{tpu_custom_call.1} parent=35 // pred_fallthru
          _
        // Predicated region
        $region41: #{tpu_custom_call.1} parent=35 // pred_check
          %p311 = pneg %p188
        $region42: #{tpu_custom_call.1} parent=35 // pred_check_branch
          %313 = sbr.rel (%p311) target = $region44
        $region43: #{tpu_custom_call.1} parent=35 // pred_region
          %s314 = sand.u32 %s17, 1
          %s315 = scalar_lea.sflag [#allocation4], %s314
          %s316 = sand.u32 %s178, 1
          %s317 = smul.addr %s316, 512
          %s318 = scalar_lea.vmem [#allocation12], %s317
          %s319 = smul.u32 %s24, 2
          %s320 = sadd.s32 %s319, %s25
          %s321 = smul.u32 64, %s320
          %s323 = ssub.s32 8192, 8192
          %324 = vsyncadd %s315, %s323
          %s325 = smul.addr %s321, 128
          %s326 = scalar_lea.hbm %s6, %s325
          %s327 = sshll.u32 %s318, 4
          %s328 = int_to_ptr.vmem [resolvable:$true] %s327
          %333 = dma.hbm_to_vmem [thread:$0]  %s326, 8192, %s328, %s315, 128, 128, 8
        $region44: #{tpu_custom_call.1} parent=35 // pred_fallthru
          _
      $region36: #{tpu_custom_call.1} parent=5 // pred_fallthru
        _
      %p334 = scmp.le.s32.totalorder 1, %s17
      %p335 = scmp.lt.s32.totalorder %s17, 3
      %p336 = pnand %p334, %p335
      %p337 = pneg %p336
      // Predicated region
      $region45: #{tpu_custom_call.1} parent=5 // pred_check
        _
      $region46: #{tpu_custom_call.1} parent=5 // pred_check_branch
        %339 = sbr.rel (%p336) target = $region48
      $region47: #{tpu_custom_call.1} parent=5 // pred_region
        %s340 = ssub.s32 %s17, 1
        // Predicated region
        $region49: #{tpu_custom_call.1} parent=47 // pred_check
          %p341 = pneg %p71
        $region50: #{tpu_custom_call.1} parent=47 // pred_check_branch
          %343 = sbr.rel (%p341) target = $region52
        $region51: #{tpu_custom_call.1} parent=47 // pred_region
          %344 = dma.done [#allocation4], 64
        $region52: #{tpu_custom_call.1} parent=47 // pred_fallthru
          _
        // Predicated region
        $region53: #{tpu_custom_call.1} parent=47 // pred_check
          %p345 = pneg %p92
        $region54: #{tpu_custom_call.1} parent=47 // pred_check_branch
          %347 = sbr.rel (%p345) target = $region56
        $region55: #{tpu_custom_call.1} parent=47 // pred_region
          %348 = dma.done [#allocation7], 16
        $region56: #{tpu_custom_call.1} parent=47 // pred_fallthru
          _
        // Predicated region
        $region57: #{tpu_custom_call.1} parent=47 // pred_check
          %p349 = pneg %p113
        $region58: #{tpu_custom_call.1} parent=47 // pred_check_branch
          %351 = sbr.rel (%p349) target = $region60
        $region59: #{tpu_custom_call.1} parent=47 // pred_region
          %352 = dma.done [#allocation7], 128
        $region60: #{tpu_custom_call.1} parent=47 // pred_fallthru
          _
        // Predicated region
        $region61: #{tpu_custom_call.1} parent=47 // pred_check
          %p353 = pneg %p134
        $region62: #{tpu_custom_call.1} parent=47 // pred_check_branch
          %355 = sbr.rel (%p353) target = $region64
        $region63: #{tpu_custom_call.1} parent=47 // pred_region
          %356 = dma.done [#allocation10], 16
        $region64: #{tpu_custom_call.1} parent=47 // pred_fallthru
          _
        %s357 = sand.u32 %s22, 1
        %s358 = scalar_lea.sflag [#allocation4], %s357
        %s359 = sand.u32 %s151, 1
        %s360 = smul.addr %s359, 4096
        %s361 = scalar_lea.vmem [#allocation11], %s360
        // Predicated region
        $region65: #{tpu_custom_call.1} parent=47 // pred_check
          %p362 = pneg %p164
        $region66: #{tpu_custom_call.1} parent=47 // pred_check_branch
          %364 = sbr.rel (%p362) target = $region68
        $region67: #{tpu_custom_call.1} parent=47 // pred_region
          %365 = dma.done %s358, 65536
        $region68: #{tpu_custom_call.1} parent=47 // pred_fallthru
          _
        %s366 = sand.u32 %s22, 1
        %s367 = scalar_lea.sflag [#allocation4], %s366
        %s368 = sand.u32 %s181, 1
        %s369 = smul.addr %s368, 512
        %s370 = scalar_lea.vmem [#allocation12], %s369
        // Predicated region
        $region69: #{tpu_custom_call.1} parent=47 // pred_check
          %p371 = pneg %p194
        $region70: #{tpu_custom_call.1} parent=47 // pred_check_branch
          %373 = sbr.rel (%p371) target = $region72
        $region71: #{tpu_custom_call.1} parent=47 // pred_region
          %374 = dma.done %s367, 8192
        $region72: #{tpu_custom_call.1} parent=47 // pred_fallthru
          _
        %p375 = pneg %p50
        %p376 = pneg %p47
        %p377 = pneg %p71
        %p378 = pneg %p68
        %p379 = pneg %p92
        %p380 = pneg %p89
        %p381 = pneg %p113
        %p382 = pneg %p110
        %p383 = pneg %p134
        %p384 = pneg %p131
        %s385 = sand.u32 %s22, 1
        %s386 = scalar_lea.sflag [#allocation4], %s385
        %s387 = sand.u32 %s151, 1
        %s388 = smul.addr %s387, 4096
        %s389 = scalar_lea.vmem [#allocation11], %s388
        %p390 = pneg %p164
        %p391 = pneg %p161
        %s392 = sand.u32 %s22, 1
        %s393 = scalar_lea.sflag [#allocation4], %s392
        %s394 = sand.u32 %s181, 1
        %s395 = smul.addr %s394, 512
        %s396 = scalar_lea.vmem [#allocation12], %s395
        %p397 = pneg %p194
        %p398 = pneg %p191
        %p399 = pneg %p220
        %p400 = pneg %p217
        %s401 = smul.u32 %s26, 2
        %s402 = sadd.s32 %s401, %s27
        %s403 = smul.u32 4, %s402
        %s404 = smul.u32 %s26, 2
        %s405 = sadd.s32 %s404, %s27
        %s406 = smul.u32 64, %s405
        %p407 = scmp.eq.s32.totalorder %s27, 0
        // Predicated region
        $region73: #{tpu_custom_call.1} parent=47 // pred_check
          %p408 = pneg %p407
        $region74: #{tpu_custom_call.1} parent=47 // pred_check_branch
          %410 = sbr.rel (%p408) target = $region76
        $region75: #{tpu_custom_call.1} parent=47 // pred_region
          %v411 = vld [vmem:[%s0] sm:$0xff]
          %v412 = vld [vmem:[%s0 + $0x8] sm:$0xff]
          %v413 = vld [vmem:[%s0 + $0x10] sm:$0xff]
          %v414 = vld [vmem:[%s0 + $0x18] sm:$0xff]
          %v415 = vld [vmem:[%s0 + $0x20] sm:$0xff]
          %v416 = vld [vmem:[%s0 + $0x28] sm:$0xff]
          %v417 = vld [vmem:[%s0 + $0x30] sm:$0xff]
          %v418 = vld [vmem:[%s0 + $0x38] sm:$0xff]
          %v419 = vld [vmem:[%s0 + $0x40] sm:$0xff]
          %v420 = vld [vmem:[%s0 + $0x48] sm:$0xff]
          %v421 = vld [vmem:[%s0 + $0x50] sm:$0xff]
          %v422 = vld [vmem:[%s0 + $0x58] sm:$0xff]
          %v423 = vld [vmem:[%s0 + $0x60] sm:$0xff]
          %v424 = vld [vmem:[%s0 + $0x68] sm:$0xff]
          %v425 = vld [vmem:[%s0 + $0x70] sm:$0xff]
          %v426 = vld [vmem:[%s0 + $0x78] sm:$0xff]
          %v427 = vld [vmem:[#allocation3] sm:$0xf]
          %v428 = vld [vmem:[#allocation6] sm:$0x1]
          %v430 = vlaneseq
          %v431 = vshrl.u32 %v430, 7
          %v432 = vsub.s32 0, %v431
          %v433 = vrot.slane %v428, %v432
          %vm435 = vcmask 31744
          %v437 = vsel %vm435, %v411, 0
          %v440 = vsel %vm435, %v412, 0
          %v443 = vsel %vm435, %v413, 0
          %v446 = vsel %vm435, %v414, 0
          %v449 = vsel %vm435, %v415, 0
          %v452 = vsel %vm435, %v416, 0
          %v455 = vsel %vm435, %v417, 0
          %v458 = vsel %vm435, %v418, 0
          %v461 = vsel %vm435, %v419, 0
          %v464 = vsel %vm435, %v420, 0
          %v467 = vsel %vm435, %v421, 0
          %v470 = vsel %vm435, %v422, 0
          %v473 = vsel %vm435, %v423, 0
          %v476 = vsel %vm435, %v424, 0
          %v479 = vsel %vm435, %v425, 0
          %v482 = vsel %vm435, %v426, 0
          %vm484 = vcmask 1043456
          %v486 = vsel %vm484, %v427, 0
          %488 = vmatprep.subr.mxu0 0.0
          %489 = vmatpush1.msra.mxu0 %v486
          %490 = vmatprep.subr.mxu0 0.0
          %491 = vmatpush1.msra.mxu0 0.0
          %492 = vmatprep.subr.mxu0 0.0
          %493 = vmatpush1.msra.mxu0 0.0
          %494 = vmatprep.subr.mxu0 0.0
          %495 = vmatpush1.msra.mxu0 0.0
          %496 = vmatprep.subr.mxu0 0.0
          %497 = vmatpush1.msra.mxu0 0.0
          %498 = vmatprep.subr.mxu0 0.0
          %499 = vmatpush1.msra.mxu0 0.0
          %500 = vmatprep.subr.mxu0 0.0
          %501 = vmatpush1.msra.mxu0 0.0
          %502 = vmatprep.subr.mxu0 0.0
          %503 = vmatpush1.msra.mxu0 0.0
          %504 = vmatprep.subr.mxu0 0.0
          %505 = vmatpush1.msra.mxu0 0.0
          %506 = vmatprep.subr.mxu0 0.0
          %507 = vmatpush1.msra.mxu0 0.0
          %508 = vmatprep.subr.mxu0 0.0
          %509 = vmatpush1.msra.mxu0 0.0
          %510 = vmatprep.subr.mxu0 0.0
          %511 = vmatpush1.msra.mxu0 0.0
          %512 = vmatprep.subr.mxu0 0.0
          %513 = vmatpush1.msra.mxu0 0.0
          %514 = vmatprep.subr.mxu0 0.0
          %515 = vmatpush1.msra.mxu0 0.0
          %516 = vmatprep.subr.mxu0 0.0
          %517 = vmatpush1.msra.mxu0 0.0
          %518 = vmatprep.subr.mxu0 0.0
          %519 = vmatpush1.msra.mxu0 0.0
          %520 = vmatprep.subr.mxu0 0.0
          %521 = vmatpush1.msra.mxu0 0.0
          %522 = vmatprep.subr.mxu0 0.0
          %523 = vmatpush1.msra.mxu0 0.0
          %524 = vmatprep.subr.mxu0 0.0
          %525 = vmatpush1.msra.mxu0 0.0
          %526 = vmatprep.subr.mxu0 0.0
          %527 = vmatpush1.msra.mxu0 0.0
          %528 = vmatprep.subr.mxu0 0.0
          %529 = vmatpush1.msra.mxu0 0.0
          %530 = vmatprep.subr.mxu0 0.0
          %531 = vmatpush1.msra.mxu0 0.0
          %532 = vmatprep.subr.mxu0 0.0
          %533 = vmatpush1.msra.mxu0 0.0
          %534 = vmatprep.subr.mxu0 0.0
          %535 = vmatpush1.msra.mxu0 0.0
          %536 = vmatprep.subr.mxu0 0.0
          %537 = vmatpush1.msra.mxu0 0.0
          %538 = vmatprep.subr.mxu0 0.0
          %539 = vmatpush1.msra.mxu0 0.0
          %540 = vmatprep.subr.mxu0 0.0
          %541 = vmatpush1.msra.mxu0 0.0
          %542 = vmatprep.subr.mxu0 0.0
          %543 = vmatpush1.msra.mxu0 0.0
          %544 = vmatprep.subr.mxu0 0.0
          %545 = vmatpush1.msra.mxu0 0.0
          %546 = vmatprep.subr.mxu0 0.0
          %547 = vmatpush1.msra.mxu0 0.0
          %548 = vmatprep.subr.mxu0 0.0
          %549 = vmatpush1.msra.mxu0 0.0
          %550 = vmatprep.subr.mxu0 0.0
          %551 = vmatpush1.msra.mxu0 0.0
          %552 = vmatprep.mubr.f32.mxu0 0.0
          %553 = vmatmul.mubr.f32.gmra.mrb[0].mxu0 %v437
          %v554 = vpop.f32.mrb[0].mxu0
          %v555 = vadd.f32 %v433, %v554
          %v556 = vpop.f32.mrb[0].mxu0
          %557 = vmatprep.mubr.f32.mxu0 0.0
          %558 = vmatmul.mubr.f32.gmra.mrb[0].mxu0 %v440
          %v559 = vpop.f32.mrb[0].mxu0
          %v560 = vadd.f32 %v433, %v559
          %v561 = vpop.f32.mrb[0].mxu0
          %562 = vmatprep.mubr.f32.mxu0 0.0
          %563 = vmatmul.mubr.f32.gmra.mrb[0].mxu0 %v443
          %v564 = vpop.f32.mrb[0].mxu0
          %v565 = vadd.f32 %v433, %v564
          %v566 = vpop.f32.mrb[0].mxu0
          %567 = vmatprep.mubr.f32.mxu0 0.0
          %568 = vmatmul.mubr.f32.gmra.mrb[0].mxu0 %v446
          %v569 = vpop.f32.mrb[0].mxu0
          %v570 = vadd.f32 %v433, %v569
          %v571 = vpop.f32.mrb[0].mxu0
          %572 = vmatprep.mubr.f32.mxu0 0.0
          %573 = vmatmul.mubr.f32.gmra.mrb[0].mxu0 %v449
          %v574 = vpop.f32.mrb[0].mxu0
          %v575 = vadd.f32 %v433, %v574
          %v576 = vpop.f32.mrb[0].mxu0
          %577 = vmatprep.mubr.f32.mxu0 0.0
          %578 = vmatmul.mubr.f32.gmra.mrb[0].mxu0 %v452
          %v579 = vpop.f32.mrb[0].mxu0
          %v580 = vadd.f32 %v433, %v579
          %v581 = vpop.f32.mrb[0].mxu0
          %582 = vmatprep.mubr.f32.mxu0 0.0
          %583 = vmatmul.mubr.f32.gmra.mrb[0].mxu0 %v455
          %v584 = vpop.f32.mrb[0].mxu0
          %v585 = vadd.f32 %v433, %v584
          %v586 = vpop.f32.mrb[0].mxu0
          %587 = vmatprep.mubr.f32.mxu0 0.0
          %588 = vmatmul.mubr.f32.gmra.mrb[0].mxu0 %v458
          %v589 = vpop.f32.mrb[0].mxu0
          %v590 = vadd.f32 %v433, %v589
          %v591 = vpop.f32.mrb[0].mxu0
          %592 = vmatprep.mubr.f32.mxu0 0.0
          %593 = vmatmul.mubr.f32.gmra.mrb[0].mxu0 %v461
          %v594 = vpop.f32.mrb[0].mxu0
          %v595 = vadd.f32 %v433, %v594
          %v596 = vpop.f32.mrb[0].mxu0
          %597 = vmatprep.mubr.f32.mxu0 0.0
          %598 = vmatmul.mubr.f32.gmra.mrb[0].mxu0 %v464
          %v599 = vpop.f32.mrb[0].mxu0
          %v600 = vadd.f32 %v433, %v599
          %v601 = vpop.f32.mrb[0].mxu0
          %602 = vmatprep.mubr.f32.mxu0 0.0
          %603 = vmatmul.mubr.f32.gmra.mrb[0].mxu0 %v467
          %v604 = vpop.f32.mrb[0].mxu0
          %v605 = vadd.f32 %v433, %v604
          %v606 = vpop.f32.mrb[0].mxu0
          %607 = vmatprep.mubr.f32.mxu0 0.0
          %608 = vmatmul.mubr.f32.gmra.mrb[0].mxu0 %v470
          %v609 = vpop.f32.mrb[0].mxu0
          %v610 = vadd.f32 %v433, %v609
          %v611 = vpop.f32.mrb[0].mxu0
          %612 = vmatprep.mubr.f32.mxu0 0.0
          %613 = vmatmul.mubr.f32.gmra.mrb[0].mxu0 %v473
          %v614 = vpop.f32.mrb[0].mxu0
          %v615 = vadd.f32 %v433, %v614
          %v616 = vpop.f32.mrb[0].mxu0
          %617 = vmatprep.mubr.f32.mxu0 0.0
          %618 = vmatmul.mubr.f32.gmra.mrb[0].mxu0 %v476
          %v619 = vpop.f32.mrb[0].mxu0
          %v620 = vadd.f32 %v433, %v619
          %v621 = vpop.f32.mrb[0].mxu0
          %622 = vmatprep.mubr.f32.mxu0 0.0
          %623 = vmatmul.mubr.f32.gmra.mrb[0].mxu0 %v479
          %v624 = vpop.f32.mrb[0].mxu0
          %v625 = vadd.f32 %v433, %v624
          %v626 = vpop.f32.mrb[0].mxu0
          %627 = vmatprep.mubr.f32.mxu0 0.0
          %628 = vmatmul.mubr.f32.gmra.mrb[0].mxu0 %v482
          %v629 = vpop.f32.mrb[0].mxu0
          %v630 = vadd.f32 %v433, %v629
          %v631 = vpop.f32.mrb[0].mxu0
          %632 = vdwg.mxu0
          %v633 = vmax.f32 %v555, 0.0
          %v634 = vmax.f32 %v560, 0.0
          %v635 = vmax.f32 %v565, 0.0
          %v636 = vmax.f32 %v570, 0.0
          %v637 = vmax.f32 %v575, 0.0
          %v638 = vmax.f32 %v580, 0.0
          %v639 = vmax.f32 %v585, 0.0
          %v640 = vmax.f32 %v590, 0.0
          %v641 = vmax.f32 %v595, 0.0
          %v642 = vmax.f32 %v600, 0.0
          %v643 = vmax.f32 %v605, 0.0
          %v644 = vmax.f32 %v610, 0.0
          %v645 = vmax.f32 %v615, 0.0
          %v646 = vmax.f32 %v620, 0.0
          %v647 = vmax.f32 %v625, 0.0
          %v648 = vmax.f32 %v630, 0.0
          %v649 = vpack.c.bf16 %v633, %v633
          %650 = vst [vmem:[#allocation2] sm:$0xf] %v649
          %v651 = vpack.c.bf16 %v634, %v634
          %652 = vst [vmem:[#allocation2 + $0x4] sm:$0xf] %v651
          %v653 = vpack.c.bf16 %v635, %v635
          %654 = vst [vmem:[#allocation2 + $0x8] sm:$0xf] %v653
          %v655 = vpack.c.bf16 %v636, %v636
          %656 = vst [vmem:[#allocation2 + $0xc] sm:$0xf] %v655
          %v657 = vpack.c.bf16 %v637, %v637
          %658 = vst [vmem:[#allocation2 + $0x10] sm:$0xf] %v657
          %v659 = vpack.c.bf16 %v638, %v638
          %660 = vst [vmem:[#allocation2 + $0x14] sm:$0xf] %v659
          %v661 = vpack.c.bf16 %v639, %v639
          %662 = vst [vmem:[#allocation2 + $0x18] sm:$0xf] %v661
          %v663 = vpack.c.bf16 %v640, %v640
          %664 = vst [vmem:[#allocation2 + $0x1c] sm:$0xf] %v663
          %v665 = vpack.c.bf16 %v641, %v641
          %666 = vst [vmem:[#allocation2 + $0x20] sm:$0xf] %v665
          %v667 = vpack.c.bf16 %v642, %v642
          %668 = vst [vmem:[#allocation2 + $0x24] sm:$0xf] %v667
          %v669 = vpack.c.bf16 %v643, %v643
          %670 = vst [vmem:[#allocation2 + $0x28] sm:$0xf] %v669
          %v671 = vpack.c.bf16 %v644, %v644
          %672 = vst [vmem:[#allocation2 + $0x2c] sm:$0xf] %v671
          %v673 = vpack.c.bf16 %v645, %v645
          %674 = vst [vmem:[#allocation2 + $0x30] sm:$0xf] %v673
          %v675 = vpack.c.bf16 %v646, %v646
          %676 = vst [vmem:[#allocation2 + $0x34] sm:$0xf] %v675
          %v677 = vpack.c.bf16 %v647, %v647
          %678 = vst [vmem:[#allocation2 + $0x38] sm:$0xf] %v677
          %v679 = vpack.c.bf16 %v648, %v648
          %680 = vst [vmem:[#allocation2 + $0x3c] sm:$0xf] %v679
        $region76: #{tpu_custom_call.1} parent=47 // pred_fallthru
          _
        %s681 = smul.u32 %s26, 2
        %s682 = sadd.s32 %s681, %s27
        %v683 = vld [vmem:[#allocation2] sm:$0xff]
        %v684 = vld [vmem:[#allocation2 + $0x8] sm:$0xff]
        %v685 = vld [vmem:[#allocation2 + $0x10] sm:$0xff]
        %v686 = vld [vmem:[#allocation2 + $0x18] sm:$0xff]
        %v687 = vld [vmem:[#allocation2 + $0x20] sm:$0xff]
        %v688 = vld [vmem:[#allocation2 + $0x28] sm:$0xff]
        %v689 = vld [vmem:[#allocation2 + $0x30] sm:$0xff]
        %v690 = vld [vmem:[#allocation2 + $0x38] sm:$0xff]
        %v691 = vld [vmem:[%s361] sm:$0xff]
        %v692 = vld [vmem:[%s361 + $0x8] sm:$0xff]
        %v693 = vld [vmem:[%s361 + $0x10] sm:$0xff]
        %v694 = vld [vmem:[%s361 + $0x18] sm:$0xff]
        %v695 = vld [vmem:[%s361 + $0x20] sm:$0xff]
        %v696 = vld [vmem:[%s361 + $0x28] sm:$0xff]
        %v697 = vld [vmem:[%s361 + $0x30] sm:$0xff]
        %v698 = vld [vmem:[%s361 + $0x38] sm:$0xff]
        %v699 = vld [vmem:[%s361 + $0x40] sm:$0xff]
        %v700 = vld [vmem:[%s361 + $0x48] sm:$0xff]
        %v701 = vld [vmem:[%s361 + $0x50] sm:$0xff]
        %v702 = vld [vmem:[%s361 + $0x58] sm:$0xff]
        %v703 = vld [vmem:[%s361 + $0x60] sm:$0xff]
        %v704 = vld [vmem:[%s361 + $0x68] sm:$0xff]
        %v705 = vld [vmem:[%s361 + $0x70] sm:$0xff]
        %v706 = vld [vmem:[%s361 + $0x78] sm:$0xff]
        %v707 = vld [vmem:[%s361 + $0x80] sm:$0xff]
        %v708 = vld [vmem:[%s361 + $0x88] sm:$0xff]
        %v709 = vld [vmem:[%s361 + $0x90] sm:$0xff]
        %v710 = vld [vmem:[%s361 + $0x98] sm:$0xff]
        %v711 = vld [vmem:[%s361 + $0xa0] sm:$0xff]
        %v712 = vld [vmem:[%s361 + $0xa8] sm:$0xff]
        %v713 = vld [vmem:[%s361 + $0xb0] sm:$0xff]
        %v714 = vld [vmem:[%s361 + $0xb8] sm:$0xff]
        %v715 = vld [vmem:[%s361 + $0xc0] sm:$0xff]
        %v716 = vld [vmem:[%s361 + $0xc8] sm:$0xff]
        %v717 = vld [vmem:[%s361 + $0xd0] sm:$0xff]
        %v718 = vld [vmem:[%s361 + $0xd8] sm:$0xff]
        %v719 = vld [vmem:[%s361 + $0xe0] sm:$0xff]
        %v720 = vld [vmem:[%s361 + $0xe8] sm:$0xff]
        %v721 = vld [vmem:[%s361 + $0xf0] sm:$0xff]
        %v722 = vld [vmem:[%s361 + $0xf8] sm:$0xff]
        %v723 = vld [vmem:[%s361 + $0x100] sm:$0xff]
        %v724 = vld [vmem:[%s361 + $0x108] sm:$0xff]
        %v725 = vld [vmem:[%s361 + $0x110] sm:$0xff]
        %v726 = vld [vmem:[%s361 + $0x118] sm:$0xff]
        %v727 = vld [vmem:[%s361 + $0x120] sm:$0xff]
        %v728 = vld [vmem:[%s361 + $0x128] sm:$0xff]
        %v729 = vld [vmem:[%s361 + $0x130] sm:$0xff]
        %v730 = vld [vmem:[%s361 + $0x138] sm:$0xff]
        %v731 = vld [vmem:[%s361 + $0x140] sm:$0xff]
        %v732 = vld [vmem:[%s361 + $0x148] sm:$0xff]
        %v733 = vld [vmem:[%s361 + $0x150] sm:$0xff]
        %v734 = vld [vmem:[%s361 + $0x158] sm:$0xff]
        %v735 = vld [vmem:[%s361 + $0x160] sm:$0xff]
        %v736 = vld [vmem:[%s361 + $0x168] sm:$0xff]
        %v737 = vld [vmem:[%s361 + $0x170] sm:$0xff]
        %v738 = vld [vmem:[%s361 + $0x178] sm:$0xff]
        %v739 = vld [vmem:[%s361 + $0x180] sm:$0xff]
        %v740 = vld [vmem:[%s361 + $0x188] sm:$0xff]
        %v741 = vld [vmem:[%s361 + $0x190] sm:$0xff]
        %v742 = vld [vmem:[%s361 + $0x198] sm:$0xff]
        %v743 = vld [vmem:[%s361 + $0x1a0] sm:$0xff]
        %v744 = vld [vmem:[%s361 + $0x1a8] sm:$0xff]
        %v745 = vld [vmem:[%s361 + $0x1b0] sm:$0xff]
        %v746 = vld [vmem:[%s361 + $0x1b8] sm:$0xff]
        %v747 = vld [vmem:[%s361 + $0x1c0] sm:$0xff]
        %v748 = vld [vmem:[%s361 + $0x1c8] sm:$0xff]
        %v749 = vld [vmem:[%s361 + $0x1d0] sm:$0xff]
        %v750 = vld [vmem:[%s361 + $0x1d8] sm:$0xff]
        %v751 = vld [vmem:[%s361 + $0x1e0] sm:$0xff]
        %v752 = vld [vmem:[%s361 + $0x1e8] sm:$0xff]
        %v753 = vld [vmem:[%s361 + $0x1f0] sm:$0xff]
        %v754 = vld [vmem:[%s361 + $0x1f8] sm:$0xff]
        %v755 = vld [vmem:[%s361 + $0x200] sm:$0xff]
        %v756 = vld [vmem:[%s361 + $0x208] sm:$0xff]
        %v757 = vld [vmem:[%s361 + $0x210] sm:$0xff]
        %v758 = vld [vmem:[%s361 + $0x218] sm:$0xff]
        %v759 = vld [vmem:[%s361 + $0x220] sm:$0xff]
        %v760 = vld [vmem:[%s361 + $0x228] sm:$0xff]
        %v761 = vld [vmem:[%s361 + $0x230] sm:$0xff]
        %v762 = vld [vmem:[%s361 + $0x238] sm:$0xff]
        %v763 = vld [vmem:[%s361 + $0x240] sm:$0xff]
        %v764 = vld [vmem:[%s361 + $0x248] sm:$0xff]
        %v765 = vld [vmem:[%s361 + $0x250] sm:$0xff]
        %v766 = vld [vmem:[%s361 + $0x258] sm:$0xff]
        %v767 = vld [vmem:[%s361 + $0x260] sm:$0xff]
        %v768 = vld [vmem:[%s361 + $0x268] sm:$0xff]
        %v769 = vld [vmem:[%s361 + $0x270] sm:$0xff]
        %v770 = vld [vmem:[%s361 + $0x278] sm:$0xff]
        %v771 = vld [vmem:[%s361 + $0x280] sm:$0xff]
        %v772 = vld [vmem:[%s361 + $0x288] sm:$0xff]
        %v773 = vld [vmem:[%s361 + $0x290] sm:$0xff]
        %v774 = vld [vmem:[%s361 + $0x298] sm:$0xff]
        %v775 = vld [vmem:[%s361 + $0x2a0] sm:$0xff]
        %v776 = vld [vmem:[%s361 + $0x2a8] sm:$0xff]
        %v777 = vld [vmem:[%s361 + $0x2b0] sm:$0xff]
        %v778 = vld [vmem:[%s361 + $0x2b8] sm:$0xff]
        %v779 = vld [vmem:[%s361 + $0x2c0] sm:$0xff]
        %v780 = vld [vmem:[%s361 + $0x2c8] sm:$0xff]
        %v781 = vld [vmem:[%s361 + $0x2d0] sm:$0xff]
        %v782 = vld [vmem:[%s361 + $0x2d8] sm:$0xff]
        %v783 = vld [vmem:[%s361 + $0x2e0] sm:$0xff]
        %v784 = vld [vmem:[%s361 + $0x2e8] sm:$0xff]
        %v785 = vld [vmem:[%s361 + $0x2f0] sm:$0xff]
        %v786 = vld [vmem:[%s361 + $0x2f8] sm:$0xff]
        %v787 = vld [vmem:[%s361 + $0x300] sm:$0xff]
        %v788 = vld [vmem:[%s361 + $0x308] sm:$0xff]
        %v789 = vld [vmem:[%s361 + $0x310] sm:$0xff]
        %v790 = vld [vmem:[%s361 + $0x318] sm:$0xff]
        %v791 = vld [vmem:[%s361 + $0x320] sm:$0xff]
        %v792 = vld [vmem:[%s361 + $0x328] sm:$0xff]
        %v793 = vld [vmem:[%s361 + $0x330] sm:$0xff]
        %v794 = vld [vmem:[%s361 + $0x338] sm:$0xff]
        %v795 = vld [vmem:[%s361 + $0x340] sm:$0xff]
        %v796 = vld [vmem:[%s361 + $0x348] sm:$0xff]
        %v797 = vld [vmem:[%s361 + $0x350] sm:$0xff]
        %v798 = vld [vmem:[%s361 + $0x358] sm:$0xff]
        %v799 = vld [vmem:[%s361 + $0x360] sm:$0xff]
        %v800 = vld [vmem:[%s361 + $0x368] sm:$0xff]
        %v801 = vld [vmem:[%s361 + $0x370] sm:$0xff]
        %v802 = vld [vmem:[%s361 + $0x378] sm:$0xff]
        %v803 = vld [vmem:[%s361 + $0x380] sm:$0xff]
        %v804 = vld [vmem:[%s361 + $0x388] sm:$0xff]
        %v805 = vld [vmem:[%s361 + $0x390] sm:$0xff]
        %v806 = vld [vmem:[%s361 + $0x398] sm:$0xff]
        %v807 = vld [vmem:[%s361 + $0x3a0] sm:$0xff]
        %v808 = vld [vmem:[%s361 + $0x3a8] sm:$0xff]
        %v809 = vld [vmem:[%s361 + $0x3b0] sm:$0xff]
        %v810 = vld [vmem:[%s361 + $0x3b8] sm:$0xff]
        %v811 = vld [vmem:[%s361 + $0x3c0] sm:$0xff]
        %v812 = vld [vmem:[%s361 + $0x3c8] sm:$0xff]
        %v813 = vld [vmem:[%s361 + $0x3d0] sm:$0xff]
        %v814 = vld [vmem:[%s361 + $0x3d8] sm:$0xff]
        %v815 = vld [vmem:[%s361 + $0x3e0] sm:$0xff]
        %v816 = vld [vmem:[%s361 + $0x3e8] sm:$0xff]
        %v817 = vld [vmem:[%s361 + $0x3f0] sm:$0xff]
        %v818 = vld [vmem:[%s361 + $0x3f8] sm:$0xff]
        %v819 = vld [vmem:[%s361 + $0x400] sm:$0xff]
        %v820 = vld [vmem:[%s361 + $0x408] sm:$0xff]
        %v821 = vld [vmem:[%s361 + $0x410] sm:$0xff]
        %v822 = vld [vmem:[%s361 + $0x418] sm:$0xff]
        %v823 = vld [vmem:[%s361 + $0x420] sm:$0xff]
        %v824 = vld [vmem:[%s361 + $0x428] sm:$0xff]
        %v825 = vld [vmem:[%s361 + $0x430] sm:$0xff]
        %v826 = vld [vmem:[%s361 + $0x438] sm:$0xff]
        %v827 = vld [vmem:[%s361 + $0x440] sm:$0xff]
        %v828 = vld [vmem:[%s361 + $0x448] sm:$0xff]
        %v829 = vld [vmem:[%s361 + $0x450] sm:$0xff]
        %v830 = vld [vmem:[%s361 + $0x458] sm:$0xff]
        %v831 = vld [vmem:[%s361 + $0x460] sm:$0xff]
        %v832 = vld [vmem:[%s361 + $0x468] sm:$0xff]
        %v833 = vld [vmem:[%s361 + $0x470] sm:$0xff]
        %v834 = vld [vmem:[%s361 + $0x478] sm:$0xff]
        %v835 = vld [vmem:[%s361 + $0x480] sm:$0xff]
        %v836 = vld [vmem:[%s361 + $0x488] sm:$0xff]
        %v837 = vld [vmem:[%s361 + $0x490] sm:$0xff]
        %v838 = vld [vmem:[%s361 + $0x498] sm:$0xff]
        %v839 = vld [vmem:[%s361 + $0x4a0] sm:$0xff]
        %v840 = vld [vmem:[%s361 + $0x4a8] sm:$0xff]
        %v841 = vld [vmem:[%s361 + $0x4b0] sm:$0xff]
        %v842 = vld [vmem:[%s361 + $0x4b8] sm:$0xff]
        %v843 = vld [vmem:[%s361 + $0x4c0] sm:$0xff]
        %v844 = vld [vmem:[%s361 + $0x4c8] sm:$0xff]
        %v845 = vld [vmem:[%s361 + $0x4d0] sm:$0xff]
        %v846 = vld [vmem:[%s361 + $0x4d8] sm:$0xff]
        %v847 = vld [vmem:[%s361 + $0x4e0] sm:$0xff]
        %v848 = vld [vmem:[%s361 + $0x4e8] sm:$0xff]
        %v849 = vld [vmem:[%s361 + $0x4f0] sm:$0xff]
        %v850 = vld [vmem:[%s361 + $0x4f8] sm:$0xff]
        %v851 = vld [vmem:[%s361 + $0x500] sm:$0xff]
        %v852 = vld [vmem:[%s361 + $0x508] sm:$0xff]
        %v853 = vld [vmem:[%s361 + $0x510] sm:$0xff]
        %v854 = vld [vmem:[%s361 + $0x518] sm:$0xff]
        %v855 = vld [vmem:[%s361 + $0x520] sm:$0xff]
        %v856 = vld [vmem:[%s361 + $0x528] sm:$0xff]
        %v857 = vld [vmem:[%s361 + $0x530] sm:$0xff]
        %v858 = vld [vmem:[%s361 + $0x538] sm:$0xff]
        %v859 = vld [vmem:[%s361 + $0x540] sm:$0xff]
        %v860 = vld [vmem:[%s361 + $0x548] sm:$0xff]
        %v861 = vld [vmem:[%s361 + $0x550] sm:$0xff]
        %v862 = vld [vmem:[%s361 + $0x558] sm:$0xff]
        %v863 = vld [vmem:[%s361 + $0x560] sm:$0xff]
        %v864 = vld [vmem:[%s361 + $0x568] sm:$0xff]
        %v865 = vld [vmem:[%s361 + $0x570] sm:$0xff]
        %v866 = vld [vmem:[%s361 + $0x578] sm:$0xff]
        %v867 = vld [vmem:[%s361 + $0x580] sm:$0xff]
        %v868 = vld [vmem:[%s361 + $0x588] sm:$0xff]
        %v869 = vld [vmem:[%s361 + $0x590] sm:$0xff]
        %v870 = vld [vmem:[%s361 + $0x598] sm:$0xff]
        %v871 = vld [vmem:[%s361 + $0x5a0] sm:$0xff]
        %v872 = vld [vmem:[%s361 + $0x5a8] sm:$0xff]
        %v873 = vld [vmem:[%s361 + $0x5b0] sm:$0xff]
        %v874 = vld [vmem:[%s361 + $0x5b8] sm:$0xff]
        %v875 = vld [vmem:[%s361 + $0x5c0] sm:$0xff]
        %v876 = vld [vmem:[%s361 + $0x5c8] sm:$0xff]
        %v877 = vld [vmem:[%s361 + $0x5d0] sm:$0xff]
        %v878 = vld [vmem:[%s361 + $0x5d8] sm:$0xff]
        %v879 = vld [vmem:[%s361 + $0x5e0] sm:$0xff]
        %v880 = vld [vmem:[%s361 + $0x5e8] sm:$0xff]
        %v881 = vld [vmem:[%s361 + $0x5f0] sm:$0xff]
        %v882 = vld [vmem:[%s361 + $0x5f8] sm:$0xff]
        %v883 = vld [vmem:[%s361 + $0x600] sm:$0xff]
        %v884 = vld [vmem:[%s361 + $0x608] sm:$0xff]
        %v885 = vld [vmem:[%s361 + $0x610] sm:$0xff]
        %v886 = vld [vmem:[%s361 + $0x618] sm:$0xff]
        %v887 = vld [vmem:[%s361 + $0x620] sm:$0xff]
        %v888 = vld [vmem:[%s361 + $0x628] sm:$0xff]
        %v889 = vld [vmem:[%s361 + $0x630] sm:$0xff]
        %v890 = vld [vmem:[%s361 + $0x638] sm:$0xff]
        %v891 = vld [vmem:[%s361 + $0x640] sm:$0xff]
        %v892 = vld [vmem:[%s361 + $0x648] sm:$0xff]
        %v893 = vld [vmem:[%s361 + $0x650] sm:$0xff]
        %v894 = vld [vmem:[%s361 + $0x658] sm:$0xff]
        %v895 = vld [vmem:[%s361 + $0x660] sm:$0xff]
        %v896 = vld [vmem:[%s361 + $0x668] sm:$0xff]
        %v897 = vld [vmem:[%s361 + $0x670] sm:$0xff]
        %v898 = vld [vmem:[%s361 + $0x678] sm:$0xff]
        %v899 = vld [vmem:[%s361 + $0x680] sm:$0xff]
        %v900 = vld [vmem:[%s361 + $0x688] sm:$0xff]
        %v901 = vld [vmem:[%s361 + $0x690] sm:$0xff]
        %v902 = vld [vmem:[%s361 + $0x698] sm:$0xff]
        %v903 = vld [vmem:[%s361 + $0x6a0] sm:$0xff]
        %v904 = vld [vmem:[%s361 + $0x6a8] sm:$0xff]
        %v905 = vld [vmem:[%s361 + $0x6b0] sm:$0xff]
        %v906 = vld [vmem:[%s361 + $0x6b8] sm:$0xff]
        %v907 = vld [vmem:[%s361 + $0x6c0] sm:$0xff]
        %v908 = vld [vmem:[%s361 + $0x6c8] sm:$0xff]
        %v909 = vld [vmem:[%s361 + $0x6d0] sm:$0xff]
        %v910 = vld [vmem:[%s361 + $0x6d8] sm:$0xff]
        %v911 = vld [vmem:[%s361 + $0x6e0] sm:$0xff]
        %v912 = vld [vmem:[%s361 + $0x6e8] sm:$0xff]
        %v913 = vld [vmem:[%s361 + $0x6f0] sm:$0xff]
        %v914 = vld [vmem:[%s361 + $0x6f8] sm:$0xff]
        %v915 = vld [vmem:[%s361 + $0x700] sm:$0xff]
        %v916 = vld [vmem:[%s361 + $0x708] sm:$0xff]
        %v917 = vld [vmem:[%s361 + $0x710] sm:$0xff]
        %v918 = vld [vmem:[%s361 + $0x718] sm:$0xff]
        %v919 = vld [vmem:[%s361 + $0x720] sm:$0xff]
        %v920 = vld [vmem:[%s361 + $0x728] sm:$0xff]
        %v921 = vld [vmem:[%s361 + $0x730] sm:$0xff]
        %v922 = vld [vmem:[%s361 + $0x738] sm:$0xff]
        %v923 = vld [vmem:[%s361 + $0x740] sm:$0xff]
        %v924 = vld [vmem:[%s361 + $0x748] sm:$0xff]
        %v925 = vld [vmem:[%s361 + $0x750] sm:$0xff]
        %v926 = vld [vmem:[%s361 + $0x758] sm:$0xff]
        %v927 = vld [vmem:[%s361 + $0x760] sm:$0xff]
        %v928 = vld [vmem:[%s361 + $0x768] sm:$0xff]
        %v929 = vld [vmem:[%s361 + $0x770] sm:$0xff]
        %v930 = vld [vmem:[%s361 + $0x778] sm:$0xff]
        %v931 = vld [vmem:[%s361 + $0x780] sm:$0xff]
        %v932 = vld [vmem:[%s361 + $0x788] sm:$0xff]
        %v933 = vld [vmem:[%s361 + $0x790] sm:$0xff]
        %v934 = vld [vmem:[%s361 + $0x798] sm:$0xff]
        %v935 = vld [vmem:[%s361 + $0x7a0] sm:$0xff]
        %v936 = vld [vmem:[%s361 + $0x7a8] sm:$0xff]
        %v937 = vld [vmem:[%s361 + $0x7b0] sm:$0xff]
        %v938 = vld [vmem:[%s361 + $0x7b8] sm:$0xff]
        %v939 = vld [vmem:[%s361 + $0x7c0] sm:$0xff]
        %v940 = vld [vmem:[%s361 + $0x7c8] sm:$0xff]
        %v941 = vld [vmem:[%s361 + $0x7d0] sm:$0xff]
        %v942 = vld [vmem:[%s361 + $0x7d8] sm:$0xff]
        %v943 = vld [vmem:[%s361 + $0x7e0] sm:$0xff]
        %v944 = vld [vmem:[%s361 + $0x7e8] sm:$0xff]
        %v945 = vld [vmem:[%s361 + $0x7f0] sm:$0xff]
        %v946 = vld [vmem:[%s361 + $0x7f8] sm:$0xff]
        %v947 = vld [vmem:[%s361 + $0x800] sm:$0xff]
        %v948 = vld [vmem:[%s361 + $0x808] sm:$0xff]
        %v949 = vld [vmem:[%s361 + $0x810] sm:$0xff]
        %v950 = vld [vmem:[%s361 + $0x818] sm:$0xff]
        %v951 = vld [vmem:[%s361 + $0x820] sm:$0xff]
        %v952 = vld [vmem:[%s361 + $0x828] sm:$0xff]
        %v953 = vld [vmem:[%s361 + $0x830] sm:$0xff]
        %v954 = vld [vmem:[%s361 + $0x838] sm:$0xff]
        %v955 = vld [vmem:[%s361 + $0x840] sm:$0xff]
        %v956 = vld [vmem:[%s361 + $0x848] sm:$0xff]
        %v957 = vld [vmem:[%s361 + $0x850] sm:$0xff]
        %v958 = vld [vmem:[%s361 + $0x858] sm:$0xff]
        %v959 = vld [vmem:[%s361 + $0x860] sm:$0xff]
        %v960 = vld [vmem:[%s361 + $0x868] sm:$0xff]
        %v961 = vld [vmem:[%s361 + $0x870] sm:$0xff]
        %v962 = vld [vmem:[%s361 + $0x878] sm:$0xff]
        %v963 = vld [vmem:[%s361 + $0x880] sm:$0xff]
        %v964 = vld [vmem:[%s361 + $0x888] sm:$0xff]
        %v965 = vld [vmem:[%s361 + $0x890] sm:$0xff]
        %v966 = vld [vmem:[%s361 + $0x898] sm:$0xff]
        %v967 = vld [vmem:[%s361 + $0x8a0] sm:$0xff]
        %v968 = vld [vmem:[%s361 + $0x8a8] sm:$0xff]
        %v969 = vld [vmem:[%s361 + $0x8b0] sm:$0xff]
        %v970 = vld [vmem:[%s361 + $0x8b8] sm:$0xff]
        %v971 = vld [vmem:[%s361 + $0x8c0] sm:$0xff]
        %v972 = vld [vmem:[%s361 + $0x8c8] sm:$0xff]
        %v973 = vld [vmem:[%s361 + $0x8d0] sm:$0xff]
        %v974 = vld [vmem:[%s361 + $0x8d8] sm:$0xff]
        %v975 = vld [vmem:[%s361 + $0x8e0] sm:$0xff]
        %v976 = vld [vmem:[%s361 + $0x8e8] sm:$0xff]
        %v977 = vld [vmem:[%s361 + $0x8f0] sm:$0xff]
        %v978 = vld [vmem:[%s361 + $0x8f8] sm:$0xff]
        %v979 = vld [vmem:[%s361 + $0x900] sm:$0xff]
        %v980 = vld [vmem:[%s361 + $0x908] sm:$0xff]
        %v981 = vld [vmem:[%s361 + $0x910] sm:$0xff]
        %v982 = vld [vmem:[%s361 + $0x918] sm:$0xff]
        %v983 = vld [vmem:[%s361 + $0x920] sm:$0xff]
        %v984 = vld [vmem:[%s361 + $0x928] sm:$0xff]
        %v985 = vld [vmem:[%s361 + $0x930] sm:$0xff]
        %v986 = vld [vmem:[%s361 + $0x938] sm:$0xff]
        %v987 = vld [vmem:[%s361 + $0x940] sm:$0xff]
        %v988 = vld [vmem:[%s361 + $0x948] sm:$0xff]
        %v989 = vld [vmem:[%s361 + $0x950] sm:$0xff]
        %v990 = vld [vmem:[%s361 + $0x958] sm:$0xff]
        %v991 = vld [vmem:[%s361 + $0x960] sm:$0xff]
        %v992 = vld [vmem:[%s361 + $0x968] sm:$0xff]
        %v993 = vld [vmem:[%s361 + $0x970] sm:$0xff]
        %v994 = vld [vmem:[%s361 + $0x978] sm:$0xff]
        %v995 = vld [vmem:[%s361 + $0x980] sm:$0xff]
        %v996 = vld [vmem:[%s361 + $0x988] sm:$0xff]
        %v997 = vld [vmem:[%s361 + $0x990] sm:$0xff]
        %v998 = vld [vmem:[%s361 + $0x998] sm:$0xff]
        %v999 = vld [vmem:[%s361 + $0x9a0] sm:$0xff]
        %v1000 = vld [vmem:[%s361 + $0x9a8] sm:$0xff]
        %v1001 = vld [vmem:[%s361 + $0x9b0] sm:$0xff]
        %v1002 = vld [vmem:[%s361 + $0x9b8] sm:$0xff]
        %v1003 = vld [vmem:[%s361 + $0x9c0] sm:$0xff]
        %v1004 = vld [vmem:[%s361 + $0x9c8] sm:$0xff]
        %v1005 = vld [vmem:[%s361 + $0x9d0] sm:$0xff]
        %v1006 = vld [vmem:[%s361 + $0x9d8] sm:$0xff]
        %v1007 = vld [vmem:[%s361 + $0x9e0] sm:$0xff]
        %v1008 = vld [vmem:[%s361 + $0x9e8] sm:$0xff]
        %v1009 = vld [vmem:[%s361 + $0x9f0] sm:$0xff]
        %v1010 = vld [vmem:[%s361 + $0x9f8] sm:$0xff]
        %v1011 = vld [vmem:[%s361 + $0xa00] sm:$0xff]
        %v1012 = vld [vmem:[%s361 + $0xa08] sm:$0xff]
        %v1013 = vld [vmem:[%s361 + $0xa10] sm:$0xff]
        %v1014 = vld [vmem:[%s361 + $0xa18] sm:$0xff]
        %v1015 = vld [vmem:[%s361 + $0xa20] sm:$0xff]
        %v1016 = vld [vmem:[%s361 + $0xa28] sm:$0xff]
        %v1017 = vld [vmem:[%s361 + $0xa30] sm:$0xff]
        %v1018 = vld [vmem:[%s361 + $0xa38] sm:$0xff]
        %v1019 = vld [vmem:[%s361 + $0xa40] sm:$0xff]
        %v1020 = vld [vmem:[%s361 + $0xa48] sm:$0xff]
        %v1021 = vld [vmem:[%s361 + $0xa50] sm:$0xff]
        %v1022 = vld [vmem:[%s361 + $0xa58] sm:$0xff]
        %v1023 = vld [vmem:[%s361 + $0xa60] sm:$0xff]
        %v1024 = vld [vmem:[%s361 + $0xa68] sm:$0xff]
        %v1025 = vld [vmem:[%s361 + $0xa70] sm:$0xff]
        %v1026 = vld [vmem:[%s361 + $0xa78] sm:$0xff]
        %v1027 = vld [vmem:[%s361 + $0xa80] sm:$0xff]
        %v1028 = vld [vmem:[%s361 + $0xa88] sm:$0xff]
        %v1029 = vld [vmem:[%s361 + $0xa90] sm:$0xff]
        %v1030 = vld [vmem:[%s361 + $0xa98] sm:$0xff]
        %v1031 = vld [vmem:[%s361 + $0xaa0] sm:$0xff]
        %v1032 = vld [vmem:[%s361 + $0xaa8] sm:$0xff]
        %v1033 = vld [vmem:[%s361 + $0xab0] sm:$0xff]
        %v1034 = vld [vmem:[%s361 + $0xab8] sm:$0xff]
        %v1035 = vld [vmem:[%s361 + $0xac0] sm:$0xff]
        %v1036 = vld [vmem:[%s361 + $0xac8] sm:$0xff]
        %v1037 = vld [vmem:[%s361 + $0xad0] sm:$0xff]
        %v1038 = vld [vmem:[%s361 + $0xad8] sm:$0xff]
        %v1039 = vld [vmem:[%s361 + $0xae0] sm:$0xff]
        %v1040 = vld [vmem:[%s361 + $0xae8] sm:$0xff]
        %v1041 = vld [vmem:[%s361 + $0xaf0] sm:$0xff]
        %v1042 = vld [vmem:[%s361 + $0xaf8] sm:$0xff]
        %v1043 = vld [vmem:[%s361 + $0xb00] sm:$0xff]
        %v1044 = vld [vmem:[%s361 + $0xb08] sm:$0xff]
        %v1045 = vld [vmem:[%s361 + $0xb10] sm:$0xff]
        %v1046 = vld [vmem:[%s361 + $0xb18] sm:$0xff]
        %v1047 = vld [vmem:[%s361 + $0xb20] sm:$0xff]
        %v1048 = vld [vmem:[%s361 + $0xb28] sm:$0xff]
        %v1049 = vld [vmem:[%s361 + $0xb30] sm:$0xff]
        %v1050 = vld [vmem:[%s361 + $0xb38] sm:$0xff]
        %v1051 = vld [vmem:[%s361 + $0xb40] sm:$0xff]
        %v1052 = vld [vmem:[%s361 + $0xb48] sm:$0xff]
        %v1053 = vld [vmem:[%s361 + $0xb50] sm:$0xff]
        %v1054 = vld [vmem:[%s361 + $0xb58] sm:$0xff]
        %v1055 = vld [vmem:[%s361 + $0xb60] sm:$0xff]
        %v1056 = vld [vmem:[%s361 + $0xb68] sm:$0xff]
        %v1057 = vld [vmem:[%s361 + $0xb70] sm:$0xff]
        %v1058 = vld [vmem:[%s361 + $0xb78] sm:$0xff]
        %v1059 = vld [vmem:[%s361 + $0xb80] sm:$0xff]
        %v1060 = vld [vmem:[%s361 + $0xb88] sm:$0xff]
        %v1061 = vld [vmem:[%s361 + $0xb90] sm:$0xff]
        %v1062 = vld [vmem:[%s361 + $0xb98] sm:$0xff]
        %v1063 = vld [vmem:[%s361 + $0xba0] sm:$0xff]
        %v1064 = vld [vmem:[%s361 + $0xba8] sm:$0xff]
        %v1065 = vld [vmem:[%s361 + $0xbb0] sm:$0xff]
        %v1066 = vld [vmem:[%s361 + $0xbb8] sm:$0xff]
        %v1067 = vld [vmem:[%s361 + $0xbc0] sm:$0xff]
        %v1068 = vld [vmem:[%s361 + $0xbc8] sm:$0xff]
        %v1069 = vld [vmem:[%s361 + $0xbd0] sm:$0xff]
        %v1070 = vld [vmem:[%s361 + $0xbd8] sm:$0xff]
        %v1071 = vld [vmem:[%s361 + $0xbe0] sm:$0xff]
        %v1072 = vld [vmem:[%s361 + $0xbe8] sm:$0xff]
        %v1073 = vld [vmem:[%s361 + $0xbf0] sm:$0xff]
        %v1074 = vld [vmem:[%s361 + $0xbf8] sm:$0xff]
        %v1075 = vld [vmem:[%s361 + $0xc00] sm:$0xff]
        %v1076 = vld [vmem:[%s361 + $0xc08] sm:$0xff]
        %v1077 = vld [vmem:[%s361 + $0xc10] sm:$0xff]
        %v1078 = vld [vmem:[%s361 + $0xc18] sm:$0xff]
        %v1079 = vld [vmem:[%s361 + $0xc20] sm:$0xff]
        %v1080 = vld [vmem:[%s361 + $0xc28] sm:$0xff]
        %v1081 = vld [vmem:[%s361 + $0xc30] sm:$0xff]
        %v1082 = vld [vmem:[%s361 + $0xc38] sm:$0xff]
        %v1083 = vld [vmem:[%s361 + $0xc40] sm:$0xff]
        %v1084 = vld [vmem:[%s361 + $0xc48] sm:$0xff]
        %v1085 = vld [vmem:[%s361 + $0xc50] sm:$0xff]
        %v1086 = vld [vmem:[%s361 + $0xc58] sm:$0xff]
        %v1087 = vld [vmem:[%s361 + $0xc60] sm:$0xff]
        %v1088 = vld [vmem:[%s361 + $0xc68] sm:$0xff]
        %v1089 = vld [vmem:[%s361 + $0xc70] sm:$0xff]
        %v1090 = vld [vmem:[%s361 + $0xc78] sm:$0xff]
        %v1091 = vld [vmem:[%s361 + $0xc80] sm:$0xff]
        %v1092 = vld [vmem:[%s361 + $0xc88] sm:$0xff]
        %v1093 = vld [vmem:[%s361 + $0xc90] sm:$0xff]
        %v1094 = vld [vmem:[%s361 + $0xc98] sm:$0xff]
        %v1095 = vld [vmem:[%s361 + $0xca0] sm:$0xff]
        %v1096 = vld [vmem:[%s361 + $0xca8] sm:$0xff]
        %v1097 = vld [vmem:[%s361 + $0xcb0] sm:$0xff]
        %v1098 = vld [vmem:[%s361 + $0xcb8] sm:$0xff]
        %v1099 = vld [vmem:[%s361 + $0xcc0] sm:$0xff]
        %v1100 = vld [vmem:[%s361 + $0xcc8] sm:$0xff]
        %v1101 = vld [vmem:[%s361 + $0xcd0] sm:$0xff]
        %v1102 = vld [vmem:[%s361 + $0xcd8] sm:$0xff]
        %v1103 = vld [vmem:[%s361 + $0xce0] sm:$0xff]
        %v1104 = vld [vmem:[%s361 + $0xce8] sm:$0xff]
        %v1105 = vld [vmem:[%s361 + $0xcf0] sm:$0xff]
        %v1106 = vld [vmem:[%s361 + $0xcf8] sm:$0xff]
        %v1107 = vld [vmem:[%s361 + $0xd00] sm:$0xff]
        %v1108 = vld [vmem:[%s361 + $0xd08] sm:$0xff]
        %v1109 = vld [vmem:[%s361 + $0xd10] sm:$0xff]
        %v1110 = vld [vmem:[%s361 + $0xd18] sm:$0xff]
        %v1111 = vld [vmem:[%s361 + $0xd20] sm:$0xff]
        %v1112 = vld [vmem:[%s361 + $0xd28] sm:$0xff]
        %v1113 = vld [vmem:[%s361 + $0xd30] sm:$0xff]
        %v1114 = vld [vmem:[%s361 + $0xd38] sm:$0xff]
        %v1115 = vld [vmem:[%s361 + $0xd40] sm:$0xff]
        %v1116 = vld [vmem:[%s361 + $0xd48] sm:$0xff]
        %v1117 = vld [vmem:[%s361 + $0xd50] sm:$0xff]
        %v1118 = vld [vmem:[%s361 + $0xd58] sm:$0xff]
        %v1119 = vld [vmem:[%s361 + $0xd60] sm:$0xff]
        %v1120 = vld [vmem:[%s361 + $0xd68] sm:$0xff]
        %v1121 = vld [vmem:[%s361 + $0xd70] sm:$0xff]
        %v1122 = vld [vmem:[%s361 + $0xd78] sm:$0xff]
        %v1123 = vld [vmem:[%s361 + $0xd80] sm:$0xff]
        %v1124 = vld [vmem:[%s361 + $0xd88] sm:$0xff]
        %v1125 = vld [vmem:[%s361 + $0xd90] sm:$0xff]
        %v1126 = vld [vmem:[%s361 + $0xd98] sm:$0xff]
        %v1127 = vld [vmem:[%s361 + $0xda0] sm:$0xff]
        %v1128 = vld [vmem:[%s361 + $0xda8] sm:$0xff]
        %v1129 = vld [vmem:[%s361 + $0xdb0] sm:$0xff]
        %v1130 = vld [vmem:[%s361 + $0xdb8] sm:$0xff]
        %v1131 = vld [vmem:[%s361 + $0xdc0] sm:$0xff]
        %v1132 = vld [vmem:[%s361 + $0xdc8] sm:$0xff]
        %v1133 = vld [vmem:[%s361 + $0xdd0] sm:$0xff]
        %v1134 = vld [vmem:[%s361 + $0xdd8] sm:$0xff]
        %v1135 = vld [vmem:[%s361 + $0xde0] sm:$0xff]
        %v1136 = vld [vmem:[%s361 + $0xde8] sm:$0xff]
        %v1137 = vld [vmem:[%s361 + $0xdf0] sm:$0xff]
        %v1138 = vld [vmem:[%s361 + $0xdf8] sm:$0xff]
        %v1139 = vld [vmem:[%s361 + $0xe00] sm:$0xff]
        %v1140 = vld [vmem:[%s361 + $0xe08] sm:$0xff]
        %v1141 = vld [vmem:[%s361 + $0xe10] sm:$0xff]
        %v1142 = vld [vmem:[%s361 + $0xe18] sm:$0xff]
        %v1143 = vld [vmem:[%s361 + $0xe20] sm:$0xff]
        %v1144 = vld [vmem:[%s361 + $0xe28] sm:$0xff]
        %v1145 = vld [vmem:[%s361 + $0xe30] sm:$0xff]
        %v1146 = vld [vmem:[%s361 + $0xe38] sm:$0xff]
        %v1147 = vld [vmem:[%s361 + $0xe40] sm:$0xff]
        %v1148 = vld [vmem:[%s361 + $0xe48] sm:$0xff]
        %v1149 = vld [vmem:[%s361 + $0xe50] sm:$0xff]
        %v1150 = vld [vmem:[%s361 + $0xe58] sm:$0xff]
        %v1151 = vld [vmem:[%s361 + $0xe60] sm:$0xff]
        %v1152 = vld [vmem:[%s361 + $0xe68] sm:$0xff]
        %v1153 = vld [vmem:[%s361 + $0xe70] sm:$0xff]
        %v1154 = vld [vmem:[%s361 + $0xe78] sm:$0xff]
        %v1155 = vld [vmem:[%s361 + $0xe80] sm:$0xff]
        %v1156 = vld [vmem:[%s361 + $0xe88] sm:$0xff]
        %v1157 = vld [vmem:[%s361 + $0xe90] sm:$0xff]
        %v1158 = vld [vmem:[%s361 + $0xe98] sm:$0xff]
        %v1159 = vld [vmem:[%s361 + $0xea0] sm:$0xff]
        %v1160 = vld [vmem:[%s361 + $0xea8] sm:$0xff]
        %v1161 = vld [vmem:[%s361 + $0xeb0] sm:$0xff]
        %v1162 = vld [vmem:[%s361 + $0xeb8] sm:$0xff]
        %v1163 = vld [vmem:[%s361 + $0xec0] sm:$0xff]
        %v1164 = vld [vmem:[%s361 + $0xec8] sm:$0xff]
        %v1165 = vld [vmem:[%s361 + $0xed0] sm:$0xff]
        %v1166 = vld [vmem:[%s361 + $0xed8] sm:$0xff]
        %v1167 = vld [vmem:[%s361 + $0xee0] sm:$0xff]
        %v1168 = vld [vmem:[%s361 + $0xee8] sm:$0xff]
        %v1169 = vld [vmem:[%s361 + $0xef0] sm:$0xff]
        %v1170 = vld [vmem:[%s361 + $0xef8] sm:$0xff]
        %v1171 = vld [vmem:[%s361 + $0xf00] sm:$0xff]
        %v1172 = vld [vmem:[%s361 + $0xf08] sm:$0xff]
        %v1173 = vld [vmem:[%s361 + $0xf10] sm:$0xff]
        %v1174 = vld [vmem:[%s361 + $0xf18] sm:$0xff]
        %v1175 = vld [vmem:[%s361 + $0xf20] sm:$0xff]
        %v1176 = vld [vmem:[%s361 + $0xf28] sm:$0xff]
        %v1177 = vld [vmem:[%s361 + $0xf30] sm:$0xff]
        %v1178 = vld [vmem:[%s361 + $0xf38] sm:$0xff]
        %v1179 = vld [vmem:[%s361 + $0xf40] sm:$0xff]
        %v1180 = vld [vmem:[%s361 + $0xf48] sm:$0xff]
        %v1181 = vld [vmem:[%s361 + $0xf50] sm:$0xff]
        %v1182 = vld [vmem:[%s361 + $0xf58] sm:$0xff]
        %v1183 = vld [vmem:[%s361 + $0xf60] sm:$0xff]
        %v1184 = vld [vmem:[%s361 + $0xf68] sm:$0xff]
        %v1185 = vld [vmem:[%s361 + $0xf70] sm:$0xff]
        %v1186 = vld [vmem:[%s361 + $0xf78] sm:$0xff]
        %v1187 = vld [vmem:[%s361 + $0xf80] sm:$0xff]
        %v1188 = vld [vmem:[%s361 + $0xf88] sm:$0xff]
        %v1189 = vld [vmem:[%s361 + $0xf90] sm:$0xff]
        %v1190 = vld [vmem:[%s361 + $0xf98] sm:$0xff]
        %v1191 = vld [vmem:[%s361 + $0xfa0] sm:$0xff]
        %v1192 = vld [vmem:[%s361 + $0xfa8] sm:$0xff]
        %v1193 = vld [vmem:[%s361 + $0xfb0] sm:$0xff]
        %v1194 = vld [vmem:[%s361 + $0xfb8] sm:$0xff]
        %v1195 = vld [vmem:[%s361 + $0xfc0] sm:$0xff]
        %v1196 = vld [vmem:[%s361 + $0xfc8] sm:$0xff]
        %v1197 = vld [vmem:[%s361 + $0xfd0] sm:$0xff]
        %v1198 = vld [vmem:[%s361 + $0xfd8] sm:$0xff]
        %v1199 = vld [vmem:[%s361 + $0xfe0] sm:$0xff]
        %v1200 = vld [vmem:[%s361 + $0xfe8] sm:$0xff]
        %v1201 = vld [vmem:[%s361 + $0xff0] sm:$0xff]
        %v1202 = vld [vmem:[%s361 + $0xff8] sm:$0xff]
        %s1203 = smul.u32 %s682, 4
        %s1204 = scalar_lea.vmem [#allocation8], %s1203
        %v1205 = vld [vmem:[%s1204] sm:$0xf]
        %v1207 = vlaneseq
        %v1208 = vshrl.u32 %v1207, 7
        %v1209 = vsub.s32 0, %v1208
        %v1210 = vrot.slane %v1205, %v1209
        %v1211 = vlaneseq
        %v1212 = vshrl.u32 %v1211, 7
        %v1213 = vsub.s32 1, %v1212
        %v1214 = vrot.slane %v1205, %v1213
        %v1215 = vlaneseq
        %v1216 = vshrl.u32 %v1215, 7
        %v1217 = vsub.s32 2, %v1216
        %v1218 = vrot.slane %v1205, %v1217
        %v1219 = vlaneseq
        %v1220 = vshrl.u32 %v1219, 7
        %v1221 = vsub.s32 3, %v1220
        %v1222 = vrot.slane %v1205, %v1221
        %v1235 = vunpack.c.l.b16 %v683
        %v1236 = vunpack.c.h.b16 %v683
        %v1237 = vunpack.c.l.b16 %v684
        %v1238 = vunpack.c.h.b16 %v684
        %v1239 = vunpack.c.l.b16 %v685
        %v1240 = vunpack.c.h.b16 %v685
        %v1241 = vunpack.c.l.b16 %v686
        %v1242 = vunpack.c.h.b16 %v686
        %v1243 = vunpack.c.l.b16 %v687
        %v1244 = vunpack.c.h.b16 %v687
        %v1245 = vunpack.c.l.b16 %v688
        %v1246 = vunpack.c.h.b16 %v688
        %v1247 = vunpack.c.l.b16 %v689
        %v1248 = vunpack.c.h.b16 %v689
        %v1249 = vunpack.c.l.b16 %v690
        %v1250 = vunpack.c.h.b16 %v690
        %v1251 = vpack.c.b16 %v1235, %v1235
        %v1252 = vpack.c.b16 %v1236, %v1236
        %v1253 = vpack.c.b16 %v1237, %v1237
        %v1254 = vpack.c.b16 %v1238, %v1238
        %v1255 = vpack.c.b16 %v1239, %v1239
        %v1256 = vpack.c.b16 %v1240, %v1240
        %v1257 = vpack.c.b16 %v1241, %v1241
        %v1258 = vpack.c.b16 %v1242, %v1242
        %v1259 = vpack.c.b16 %v1243, %v1243
        %v1260 = vpack.c.b16 %v1244, %v1244
        %v1261 = vpack.c.b16 %v1245, %v1245
        %v1262 = vpack.c.b16 %v1246, %v1246
        %v1263 = vpack.c.b16 %v1247, %v1247
        %v1264 = vpack.c.b16 %v1248, %v1248
        %v1265 = vpack.c.b16 %v1249, %v1249
        %v1266 = vpack.c.b16 %v1250, %v1250
        %v1795 = vunpack.c.l.b16 %v691
        %v1796 = vunpack.c.h.b16 %v691
        %v1797 = vunpack.c.l.b16 %v692
        %v1798 = vunpack.c.h.b16 %v692
        %v1799 = vunpack.c.l.b16 %v693
        %v1800 = vunpack.c.h.b16 %v693
        %v1801 = vunpack.c.l.b16 %v694
        %v1802 = vunpack.c.h.b16 %v694
        %v1803 = vunpack.c.l.b16 %v695
        %v1804 = vunpack.c.h.b16 %v695
        %v1805 = vunpack.c.l.b16 %v696
        %v1806 = vunpack.c.h.b16 %v696
        %v1807 = vunpack.c.l.b16 %v697
        %v1808 = vunpack.c.h.b16 %v697
        %v1809 = vunpack.c.l.b16 %v698
        %v1810 = vunpack.c.h.b16 %v698
        %v1811 = vunpack.c.l.b16 %v699
        %v1812 = vunpack.c.h.b16 %v699
        %v1813 = vunpack.c.l.b16 %v700
        %v1814 = vunpack.c.h.b16 %v700
        %v1815 = vunpack.c.l.b16 %v701
        %v1816 = vunpack.c.h.b16 %v701
        %v1817 = vunpack.c.l.b16 %v702
        %v1818 = vunpack.c.h.b16 %v702
        %v1819 = vunpack.c.l.b16 %v703
        %v1820 = vunpack.c.h.b16 %v703
        %v1821 = vunpack.c.l.b16 %v704
        %v1822 = vunpack.c.h.b16 %v704
        %v1823 = vunpack.c.l.b16 %v705
        %v1824 = vunpack.c.h.b16 %v705
        %v1825 = vunpack.c.l.b16 %v706
        %v1826 = vunpack.c.h.b16 %v706
        %v1827 = vunpack.c.l.b16 %v707
        %v1828 = vunpack.c.h.b16 %v707
        %v1829 = vunpack.c.l.b16 %v708
        %v1830 = vunpack.c.h.b16 %v708
        %v1831 = vunpack.c.l.b16 %v709
        %v1832 = vunpack.c.h.b16 %v709
        %v1833 = vunpack.c.l.b16 %v710
        %v1834 = vunpack.c.h.b16 %v710
        %v1835 = vunpack.c.l.b16 %v711
        %v1836 = vunpack.c.h.b16 %v711
        %v1837 = vunpack.c.l.b16 %v712
        %v1838 = vunpack.c.h.b16 %v712
        %v1839 = vunpack.c.l.b16 %v713
        %v1840 = vunpack.c.h.b16 %v713
        %v1841 = vunpack.c.l.b16 %v714
        %v1842 = vunpack.c.h.b16 %v714
        %v1843 = vunpack.c.l.b16 %v715
        %v1844 = vunpack.c.h.b16 %v715
        %v1845 = vunpack.c.l.b16 %v716
        %v1846 = vunpack.c.h.b16 %v716
        %v1847 = vunpack.c.l.b16 %v717
        %v1848 = vunpack.c.h.b16 %v717
        %v1849 = vunpack.c.l.b16 %v718
        %v1850 = vunpack.c.h.b16 %v718
        %v1851 = vunpack.c.l.b16 %v719
        %v1852 = vunpack.c.h.b16 %v719
        %v1853 = vunpack.c.l.b16 %v720
        %v1854 = vunpack.c.h.b16 %v720
        %v1855 = vunpack.c.l.b16 %v721
        %v1856 = vunpack.c.h.b16 %v721
        %v1857 = vunpack.c.l.b16 %v722
        %v1858 = vunpack.c.h.b16 %v722
        %v1859 = vunpack.c.l.b16 %v723
        %v1860 = vunpack.c.h.b16 %v723
        %v1861 = vunpack.c.l.b16 %v724
        %v1862 = vunpack.c.h.b16 %v724
        %v1863 = vunpack.c.l.b16 %v725
        %v1864 = vunpack.c.h.b16 %v725
        %v1865 = vunpack.c.l.b16 %v726
        %v1866 = vunpack.c.h.b16 %v726
        %v1867 = vunpack.c.l.b16 %v727
        %v1868 = vunpack.c.h.b16 %v727
        %v1869 = vunpack.c.l.b16 %v728
        %v1870 = vunpack.c.h.b16 %v728
        %v1871 = vunpack.c.l.b16 %v729
        %v1872 = vunpack.c.h.b16 %v729
        %v1873 = vunpack.c.l.b16 %v730
        %v1874 = vunpack.c.h.b16 %v730
        %v1875 = vunpack.c.l.b16 %v731
        %v1876 = vunpack.c.h.b16 %v731
        %v1877 = vunpack.c.l.b16 %v732
        %v1878 = vunpack.c.h.b16 %v732
        %v1879 = vunpack.c.l.b16 %v733
        %v1880 = vunpack.c.h.b16 %v733
        %v1881 = vunpack.c.l.b16 %v734
        %v1882 = vunpack.c.h.b16 %v734
        %v1883 = vunpack.c.l.b16 %v735
        %v1884 = vunpack.c.h.b16 %v735
        %v1885 = vunpack.c.l.b16 %v736
        %v1886 = vunpack.c.h.b16 %v736
        %v1887 = vunpack.c.l.b16 %v737
        %v1888 = vunpack.c.h.b16 %v737
        %v1889 = vunpack.c.l.b16 %v738
        %v1890 = vunpack.c.h.b16 %v738
        %v1891 = vunpack.c.l.b16 %v739
        %v1892 = vunpack.c.h.b16 %v739
        %v1893 = vunpack.c.l.b16 %v740
        %v1894 = vunpack.c.h.b16 %v740
        %v1895 = vunpack.c.l.b16 %v741
        %v1896 = vunpack.c.h.b16 %v741
        %v1897 = vunpack.c.l.b16 %v742
        %v1898 = vunpack.c.h.b16 %v742
        %v1899 = vunpack.c.l.b16 %v743
        %v1900 = vunpack.c.h.b16 %v743
        %v1901 = vunpack.c.l.b16 %v744
        %v1902 = vunpack.c.h.b16 %v744
        %v1903 = vunpack.c.l.b16 %v745
        %v1904 = vunpack.c.h.b16 %v745
        %v1905 = vunpack.c.l.b16 %v746
        %v1906 = vunpack.c.h.b16 %v746
        %v1907 = vunpack.c.l.b16 %v747
        %v1908 = vunpack.c.h.b16 %v747
        %v1909 = vunpack.c.l.b16 %v748
        %v1910 = vunpack.c.h.b16 %v748
        %v1911 = vunpack.c.l.b16 %v749
        %v1912 = vunpack.c.h.b16 %v749
        %v1913 = vunpack.c.l.b16 %v750
        %v1914 = vunpack.c.h.b16 %v750
        %v1915 = vunpack.c.l.b16 %v751
        %v1916 = vunpack.c.h.b16 %v751
        %v1917 = vunpack.c.l.b16 %v752
        %v1918 = vunpack.c.h.b16 %v752
        %v1919 = vunpack.c.l.b16 %v753
        %v1920 = vunpack.c.h.b16 %v753
        %v1921 = vunpack.c.l.b16 %v754
        %v1922 = vunpack.c.h.b16 %v754
        %v1923 = vunpack.c.l.b16 %v755
        %v1924 = vunpack.c.h.b16 %v755
        %v1925 = vunpack.c.l.b16 %v756
        %v1926 = vunpack.c.h.b16 %v756
        %v1927 = vunpack.c.l.b16 %v757
        %v1928 = vunpack.c.h.b16 %v757
        %v1929 = vunpack.c.l.b16 %v758
        %v1930 = vunpack.c.h.b16 %v758
        %v1931 = vunpack.c.l.b16 %v759
        %v1932 = vunpack.c.h.b16 %v759
        %v1933 = vunpack.c.l.b16 %v760
        %v1934 = vunpack.c.h.b16 %v760
        %v1935 = vunpack.c.l.b16 %v761
        %v1936 = vunpack.c.h.b16 %v761
        %v1937 = vunpack.c.l.b16 %v762
        %v1938 = vunpack.c.h.b16 %v762
        %v1939 = vunpack.c.l.b16 %v763
        %v1940 = vunpack.c.h.b16 %v763
        %v1941 = vunpack.c.l.b16 %v764
        %v1942 = vunpack.c.h.b16 %v764
        %v1943 = vunpack.c.l.b16 %v765
        %v1944 = vunpack.c.h.b16 %v765
        %v1945 = vunpack.c.l.b16 %v766
        %v1946 = vunpack.c.h.b16 %v766
        %v1947 = vunpack.c.l.b16 %v767
        %v1948 = vunpack.c.h.b16 %v767
        %v1949 = vunpack.c.l.b16 %v768
        %v1950 = vunpack.c.h.b16 %v768
        %v1951 = vunpack.c.l.b16 %v769
        %v1952 = vunpack.c.h.b16 %v769
        %v1953 = vunpack.c.l.b16 %v770
        %v1954 = vunpack.c.h.b16 %v770
        %v1955 = vunpack.c.l.b16 %v771
        %v1956 = vunpack.c.h.b16 %v771
        %v1957 = vunpack.c.l.b16 %v772
        %v1958 = vunpack.c.h.b16 %v772
        %v1959 = vunpack.c.l.b16 %v773
        %v1960 = vunpack.c.h.b16 %v773
        %v1961 = vunpack.c.l.b16 %v774
        %v1962 = vunpack.c.h.b16 %v774
        %v1963 = vunpack.c.l.b16 %v775
        %v1964 = vunpack.c.h.b16 %v775
        %v1965 = vunpack.c.l.b16 %v776
        %v1966 = vunpack.c.h.b16 %v776
        %v1967 = vunpack.c.l.b16 %v777
        %v1968 = vunpack.c.h.b16 %v777
        %v1969 = vunpack.c.l.b16 %v778
        %v1970 = vunpack.c.h.b16 %v778
        %v1971 = vunpack.c.l.b16 %v779
        %v1972 = vunpack.c.h.b16 %v779
        %v1973 = vunpack.c.l.b16 %v780
        %v1974 = vunpack.c.h.b16 %v780
        %v1975 = vunpack.c.l.b16 %v781
        %v1976 = vunpack.c.h.b16 %v781
        %v1977 = vunpack.c.l.b16 %v782
        %v1978 = vunpack.c.h.b16 %v782
        %v1979 = vunpack.c.l.b16 %v783
        %v1980 = vunpack.c.h.b16 %v783
        %v1981 = vunpack.c.l.b16 %v784
        %v1982 = vunpack.c.h.b16 %v784
        %v1983 = vunpack.c.l.b16 %v785
        %v1984 = vunpack.c.h.b16 %v785
        %v1985 = vunpack.c.l.b16 %v786
        %v1986 = vunpack.c.h.b16 %v786
        %v1987 = vunpack.c.l.b16 %v787
        %v1988 = vunpack.c.h.b16 %v787
        %v1989 = vunpack.c.l.b16 %v788
        %v1990 = vunpack.c.h.b16 %v788
        %v1991 = vunpack.c.l.b16 %v789
        %v1992 = vunpack.c.h.b16 %v789
        %v1993 = vunpack.c.l.b16 %v790
        %v1994 = vunpack.c.h.b16 %v790
        %v1995 = vunpack.c.l.b16 %v791
        %v1996 = vunpack.c.h.b16 %v791
        %v1997 = vunpack.c.l.b16 %v792
        %v1998 = vunpack.c.h.b16 %v792
        %v1999 = vunpack.c.l.b16 %v793
        %v2000 = vunpack.c.h.b16 %v793
        %v2001 = vunpack.c.l.b16 %v794
        %v2002 = vunpack.c.h.b16 %v794
        %v2003 = vunpack.c.l.b16 %v795
        %v2004 = vunpack.c.h.b16 %v795
        %v2005 = vunpack.c.l.b16 %v796
        %v2006 = vunpack.c.h.b16 %v796
        %v2007 = vunpack.c.l.b16 %v797
        %v2008 = vunpack.c.h.b16 %v797
        %v2009 = vunpack.c.l.b16 %v798
        %v2010 = vunpack.c.h.b16 %v798
        %v2011 = vunpack.c.l.b16 %v799
        %v2012 = vunpack.c.h.b16 %v799
        %v2013 = vunpack.c.l.b16 %v800
        %v2014 = vunpack.c.h.b16 %v800
        %v2015 = vunpack.c.l.b16 %v801
        %v2016 = vunpack.c.h.b16 %v801
        %v2017 = vunpack.c.l.b16 %v802
        %v2018 = vunpack.c.h.b16 %v802
        %v2019 = vunpack.c.l.b16 %v803
        %v2020 = vunpack.c.h.b16 %v803
        %v2021 = vunpack.c.l.b16 %v804
        %v2022 = vunpack.c.h.b16 %v804
        %v2023 = vunpack.c.l.b16 %v805
        %v2024 = vunpack.c.h.b16 %v805
        %v2025 = vunpack.c.l.b16 %v806
        %v2026 = vunpack.c.h.b16 %v806
        %v2027 = vunpack.c.l.b16 %v807
        %v2028 = vunpack.c.h.b16 %v807
        %v2029 = vunpack.c.l.b16 %v808
        %v2030 = vunpack.c.h.b16 %v808
        %v2031 = vunpack.c.l.b16 %v809
        %v2032 = vunpack.c.h.b16 %v809
        %v2033 = vunpack.c.l.b16 %v810
        %v2034 = vunpack.c.h.b16 %v810
        %v2035 = vunpack.c.l.b16 %v811
        %v2036 = vunpack.c.h.b16 %v811
        %v2037 = vunpack.c.l.b16 %v812
        %v2038 = vunpack.c.h.b16 %v812
        %v2039 = vunpack.c.l.b16 %v813
        %v2040 = vunpack.c.h.b16 %v813
        %v2041 = vunpack.c.l.b16 %v814
        %v2042 = vunpack.c.h.b16 %v814
        %v2043 = vunpack.c.l.b16 %v815
        %v2044 = vunpack.c.h.b16 %v815
        %v2045 = vunpack.c.l.b16 %v816
        %v2046 = vunpack.c.h.b16 %v816
        %v2047 = vunpack.c.l.b16 %v817
        %v2048 = vunpack.c.h.b16 %v817
        %v2049 = vunpack.c.l.b16 %v818
        %v2050 = vunpack.c.h.b16 %v818
        %v2051 = vunpack.c.l.b16 %v819
        %v2052 = vunpack.c.h.b16 %v819
        %v2053 = vunpack.c.l.b16 %v820
        %v2054 = vunpack.c.h.b16 %v820
        %v2055 = vunpack.c.l.b16 %v821
        %v2056 = vunpack.c.h.b16 %v821
        %v2057 = vunpack.c.l.b16 %v822
        %v2058 = vunpack.c.h.b16 %v822
        %v2059 = vunpack.c.l.b16 %v823
        %v2060 = vunpack.c.h.b16 %v823
        %v2061 = vunpack.c.l.b16 %v824
        %v2062 = vunpack.c.h.b16 %v824
        %v2063 = vunpack.c.l.b16 %v825
        %v2064 = vunpack.c.h.b16 %v825
        %v2065 = vunpack.c.l.b16 %v826
        %v2066 = vunpack.c.h.b16 %v826
        %v2067 = vunpack.c.l.b16 %v827
        %v2068 = vunpack.c.h.b16 %v827
        %v2069 = vunpack.c.l.b16 %v828
        %v2070 = vunpack.c.h.b16 %v828
        %v2071 = vunpack.c.l.b16 %v829
        %v2072 = vunpack.c.h.b16 %v829
        %v2073 = vunpack.c.l.b16 %v830
        %v2074 = vunpack.c.h.b16 %v830
        %v2075 = vunpack.c.l.b16 %v831
        %v2076 = vunpack.c.h.b16 %v831
        %v2077 = vunpack.c.l.b16 %v832
        %v2078 = vunpack.c.h.b16 %v832
        %v2079 = vunpack.c.l.b16 %v833
        %v2080 = vunpack.c.h.b16 %v833
        %v2081 = vunpack.c.l.b16 %v834
        %v2082 = vunpack.c.h.b16 %v834
        %v2083 = vunpack.c.l.b16 %v835
        %v2084 = vunpack.c.h.b16 %v835
        %v2085 = vunpack.c.l.b16 %v836
        %v2086 = vunpack.c.h.b16 %v836
        %v2087 = vunpack.c.l.b16 %v837
        %v2088 = vunpack.c.h.b16 %v837
        %v2089 = vunpack.c.l.b16 %v838
        %v2090 = vunpack.c.h.b16 %v838
        %v2091 = vunpack.c.l.b16 %v839
        %v2092 = vunpack.c.h.b16 %v839
        %v2093 = vunpack.c.l.b16 %v840
        %v2094 = vunpack.c.h.b16 %v840
        %v2095 = vunpack.c.l.b16 %v841
        %v2096 = vunpack.c.h.b16 %v841
        %v2097 = vunpack.c.l.b16 %v842
        %v2098 = vunpack.c.h.b16 %v842
        %v2099 = vunpack.c.l.b16 %v843
        %v2100 = vunpack.c.h.b16 %v843
        %v2101 = vunpack.c.l.b16 %v844
        %v2102 = vunpack.c.h.b16 %v844
        %v2103 = vunpack.c.l.b16 %v845
        %v2104 = vunpack.c.h.b16 %v845
        %v2105 = vunpack.c.l.b16 %v846
        %v2106 = vunpack.c.h.b16 %v846
        %v2107 = vunpack.c.l.b16 %v847
        %v2108 = vunpack.c.h.b16 %v847
        %v2109 = vunpack.c.l.b16 %v848
        %v2110 = vunpack.c.h.b16 %v848
        %v2111 = vunpack.c.l.b16 %v849
        %v2112 = vunpack.c.h.b16 %v849
        %v2113 = vunpack.c.l.b16 %v850
        %v2114 = vunpack.c.h.b16 %v850
        %v2115 = vunpack.c.l.b16 %v851
        %v2116 = vunpack.c.h.b16 %v851
        %v2117 = vunpack.c.l.b16 %v852
        %v2118 = vunpack.c.h.b16 %v852
        %v2119 = vunpack.c.l.b16 %v853
        %v2120 = vunpack.c.h.b16 %v853
        %v2121 = vunpack.c.l.b16 %v854
        %v2122 = vunpack.c.h.b16 %v854
        %v2123 = vunpack.c.l.b16 %v855
        %v2124 = vunpack.c.h.b16 %v855
        %v2125 = vunpack.c.l.b16 %v856
        %v2126 = vunpack.c.h.b16 %v856
        %v2127 = vunpack.c.l.b16 %v857
        %v2128 = vunpack.c.h.b16 %v857
        %v2129 = vunpack.c.l.b16 %v858
        %v2130 = vunpack.c.h.b16 %v858
        %v2131 = vunpack.c.l.b16 %v859
        %v2132 = vunpack.c.h.b16 %v859
        %v2133 = vunpack.c.l.b16 %v860
        %v2134 = vunpack.c.h.b16 %v860
        %v2135 = vunpack.c.l.b16 %v861
        %v2136 = vunpack.c.h.b16 %v861
        %v2137 = vunpack.c.l.b16 %v862
        %v2138 = vunpack.c.h.b16 %v862
        %v2139 = vunpack.c.l.b16 %v863
        %v2140 = vunpack.c.h.b16 %v863
        %v2141 = vunpack.c.l.b16 %v864
        %v2142 = vunpack.c.h.b16 %v864
        %v2143 = vunpack.c.l.b16 %v865
        %v2144 = vunpack.c.h.b16 %v865
        %v2145 = vunpack.c.l.b16 %v866
        %v2146 = vunpack.c.h.b16 %v866
        %v2147 = vunpack.c.l.b16 %v867
        %v2148 = vunpack.c.h.b16 %v867
        %v2149 = vunpack.c.l.b16 %v868
        %v2150 = vunpack.c.h.b16 %v868
        %v2151 = vunpack.c.l.b16 %v869
        %v2152 = vunpack.c.h.b16 %v869
        %v2153 = vunpack.c.l.b16 %v870
        %v2154 = vunpack.c.h.b16 %v870
        %v2155 = vunpack.c.l.b16 %v871
        %v2156 = vunpack.c.h.b16 %v871
        %v2157 = vunpack.c.l.b16 %v872
        %v2158 = vunpack.c.h.b16 %v872
        %v2159 = vunpack.c.l.b16 %v873
        %v2160 = vunpack.c.h.b16 %v873
        %v2161 = vunpack.c.l.b16 %v874
        %v2162 = vunpack.c.h.b16 %v874
        %v2163 = vunpack.c.l.b16 %v875
        %v2164 = vunpack.c.h.b16 %v875
        %v2165 = vunpack.c.l.b16 %v876
        %v2166 = vunpack.c.h.b16 %v876
        %v2167 = vunpack.c.l.b16 %v877
        %v2168 = vunpack.c.h.b16 %v877
        %v2169 = vunpack.c.l.b16 %v878
        %v2170 = vunpack.c.h.b16 %v878
        %v2171 = vunpack.c.l.b16 %v879
        %v2172 = vunpack.c.h.b16 %v879
        %v2173 = vunpack.c.l.b16 %v880
        %v2174 = vunpack.c.h.b16 %v880
        %v2175 = vunpack.c.l.b16 %v881
        %v2176 = vunpack.c.h.b16 %v881
        %v2177 = vunpack.c.l.b16 %v882
        %v2178 = vunpack.c.h.b16 %v882
        %v2179 = vunpack.c.l.b16 %v883
        %v2180 = vunpack.c.h.b16 %v883
        %v2181 = vunpack.c.l.b16 %v884
        %v2182 = vunpack.c.h.b16 %v884
        %v2183 = vunpack.c.l.b16 %v885
        %v2184 = vunpack.c.h.b16 %v885
        %v2185 = vunpack.c.l.b16 %v886
        %v2186 = vunpack.c.h.b16 %v886
        %v2187 = vunpack.c.l.b16 %v887
        %v2188 = vunpack.c.h.b16 %v887
        %v2189 = vunpack.c.l.b16 %v888
        %v2190 = vunpack.c.h.b16 %v888
        %v2191 = vunpack.c.l.b16 %v889
        %v2192 = vunpack.c.h.b16 %v889
        %v2193 = vunpack.c.l.b16 %v890
        %v2194 = vunpack.c.h.b16 %v890
        %v2195 = vunpack.c.l.b16 %v891
        %v2196 = vunpack.c.h.b16 %v891
        %v2197 = vunpack.c.l.b16 %v892
        %v2198 = vunpack.c.h.b16 %v892
        %v2199 = vunpack.c.l.b16 %v893
        %v2200 = vunpack.c.h.b16 %v893
        %v2201 = vunpack.c.l.b16 %v894
        %v2202 = vunpack.c.h.b16 %v894
        %v2203 = vunpack.c.l.b16 %v895
        %v2204 = vunpack.c.h.b16 %v895
        %v2205 = vunpack.c.l.b16 %v896
        %v2206 = vunpack.c.h.b16 %v896
        %v2207 = vunpack.c.l.b16 %v897
        %v2208 = vunpack.c.h.b16 %v897
        %v2209 = vunpack.c.l.b16 %v898
        %v2210 = vunpack.c.h.b16 %v898
        %v2211 = vunpack.c.l.b16 %v899
        %v2212 = vunpack.c.h.b16 %v899
        %v2213 = vunpack.c.l.b16 %v900
        %v2214 = vunpack.c.h.b16 %v900
        %v2215 = vunpack.c.l.b16 %v901
        %v2216 = vunpack.c.h.b16 %v901
        %v2217 = vunpack.c.l.b16 %v902
        %v2218 = vunpack.c.h.b16 %v902
        %v2219 = vunpack.c.l.b16 %v903
        %v2220 = vunpack.c.h.b16 %v903
        %v2221 = vunpack.c.l.b16 %v904
        %v2222 = vunpack.c.h.b16 %v904
        %v2223 = vunpack.c.l.b16 %v905
        %v2224 = vunpack.c.h.b16 %v905
        %v2225 = vunpack.c.l.b16 %v906
        %v2226 = vunpack.c.h.b16 %v906
        %v2227 = vunpack.c.l.b16 %v907
        %v2228 = vunpack.c.h.b16 %v907
        %v2229 = vunpack.c.l.b16 %v908
        %v2230 = vunpack.c.h.b16 %v908
        %v2231 = vunpack.c.l.b16 %v909
        %v2232 = vunpack.c.h.b16 %v909
        %v2233 = vunpack.c.l.b16 %v910
        %v2234 = vunpack.c.h.b16 %v910
        %v2235 = vunpack.c.l.b16 %v911
        %v2236 = vunpack.c.h.b16 %v911
        %v2237 = vunpack.c.l.b16 %v912
        %v2238 = vunpack.c.h.b16 %v912
        %v2239 = vunpack.c.l.b16 %v913
        %v2240 = vunpack.c.h.b16 %v913
        %v2241 = vunpack.c.l.b16 %v914
        %v2242 = vunpack.c.h.b16 %v914
        %v2243 = vunpack.c.l.b16 %v915
        %v2244 = vunpack.c.h.b16 %v915
        %v2245 = vunpack.c.l.b16 %v916
        %v2246 = vunpack.c.h.b16 %v916
        %v2247 = vunpack.c.l.b16 %v917
        %v2248 = vunpack.c.h.b16 %v917
        %v2249 = vunpack.c.l.b16 %v918
        %v2250 = vunpack.c.h.b16 %v918
        %v2251 = vunpack.c.l.b16 %v919
        %v2252 = vunpack.c.h.b16 %v919
        %v2253 = vunpack.c.l.b16 %v920
        %v2254 = vunpack.c.h.b16 %v920
        %v2255 = vunpack.c.l.b16 %v921
        %v2256 = vunpack.c.h.b16 %v921
        %v2257 = vunpack.c.l.b16 %v922
        %v2258 = vunpack.c.h.b16 %v922
        %v2259 = vunpack.c.l.b16 %v923
        %v2260 = vunpack.c.h.b16 %v923
        %v2261 = vunpack.c.l.b16 %v924
        %v2262 = vunpack.c.h.b16 %v924
        %v2263 = vunpack.c.l.b16 %v925
        %v2264 = vunpack.c.h.b16 %v925
        %v2265 = vunpack.c.l.b16 %v926
        %v2266 = vunpack.c.h.b16 %v926
        %v2267 = vunpack.c.l.b16 %v927
        %v2268 = vunpack.c.h.b16 %v927
        %v2269 = vunpack.c.l.b16 %v928
        %v2270 = vunpack.c.h.b16 %v928
        %v2271 = vunpack.c.l.b16 %v929
        %v2272 = vunpack.c.h.b16 %v929
        %v2273 = vunpack.c.l.b16 %v930
        %v2274 = vunpack.c.h.b16 %v930
        %v2275 = vunpack.c.l.b16 %v931
        %v2276 = vunpack.c.h.b16 %v931
        %v2277 = vunpack.c.l.b16 %v932
        %v2278 = vunpack.c.h.b16 %v932
        %v2279 = vunpack.c.l.b16 %v933
        %v2280 = vunpack.c.h.b16 %v933
        %v2281 = vunpack.c.l.b16 %v934
        %v2282 = vunpack.c.h.b16 %v934
        %v2283 = vunpack.c.l.b16 %v935
        %v2284 = vunpack.c.h.b16 %v935
        %v2285 = vunpack.c.l.b16 %v936
        %v2286 = vunpack.c.h.b16 %v936
        %v2287 = vunpack.c.l.b16 %v937
        %v2288 = vunpack.c.h.b16 %v937
        %v2289 = vunpack.c.l.b16 %v938
        %v2290 = vunpack.c.h.b16 %v938
        %v2291 = vunpack.c.l.b16 %v939
        %v2292 = vunpack.c.h.b16 %v939
        %v2293 = vunpack.c.l.b16 %v940
        %v2294 = vunpack.c.h.b16 %v940
        %v2295 = vunpack.c.l.b16 %v941
        %v2296 = vunpack.c.h.b16 %v941
        %v2297 = vunpack.c.l.b16 %v942
        %v2298 = vunpack.c.h.b16 %v942
        %v2299 = vunpack.c.l.b16 %v943
        %v2300 = vunpack.c.h.b16 %v943
        %v2301 = vunpack.c.l.b16 %v944
        %v2302 = vunpack.c.h.b16 %v944
        %v2303 = vunpack.c.l.b16 %v945
        %v2304 = vunpack.c.h.b16 %v945
        %v2305 = vunpack.c.l.b16 %v946
        %v2306 = vunpack.c.h.b16 %v946
        %v2307 = vunpack.c.l.b16 %v947
        %v2308 = vunpack.c.h.b16 %v947
        %v2309 = vunpack.c.l.b16 %v948
        %v2310 = vunpack.c.h.b16 %v948
        %v2311 = vunpack.c.l.b16 %v949
        %v2312 = vunpack.c.h.b16 %v949
        %v2313 = vunpack.c.l.b16 %v950
        %v2314 = vunpack.c.h.b16 %v950
        %v2315 = vunpack.c.l.b16 %v951
        %v2316 = vunpack.c.h.b16 %v951
        %v2317 = vunpack.c.l.b16 %v952
        %v2318 = vunpack.c.h.b16 %v952
        %v2319 = vunpack.c.l.b16 %v953
        %v2320 = vunpack.c.h.b16 %v953
        %v2321 = vunpack.c.l.b16 %v954
        %v2322 = vunpack.c.h.b16 %v954
        %v2323 = vunpack.c.l.b16 %v955
        %v2324 = vunpack.c.h.b16 %v955
        %v2325 = vunpack.c.l.b16 %v956
        %v2326 = vunpack.c.h.b16 %v956
        %v2327 = vunpack.c.l.b16 %v957
        %v2328 = vunpack.c.h.b16 %v957
        %v2329 = vunpack.c.l.b16 %v958
        %v2330 = vunpack.c.h.b16 %v958
        %v2331 = vunpack.c.l.b16 %v959
        %v2332 = vunpack.c.h.b16 %v959
        %v2333 = vunpack.c.l.b16 %v960
        %v2334 = vunpack.c.h.b16 %v960
        %v2335 = vunpack.c.l.b16 %v961
        %v2336 = vunpack.c.h.b16 %v961
        %v2337 = vunpack.c.l.b16 %v962
        %v2338 = vunpack.c.h.b16 %v962
        %v2339 = vunpack.c.l.b16 %v963
        %v2340 = vunpack.c.h.b16 %v963
        %v2341 = vunpack.c.l.b16 %v964
        %v2342 = vunpack.c.h.b16 %v964
        %v2343 = vunpack.c.l.b16 %v965
        %v2344 = vunpack.c.h.b16 %v965
        %v2345 = vunpack.c.l.b16 %v966
        %v2346 = vunpack.c.h.b16 %v966
        %v2347 = vunpack.c.l.b16 %v967
        %v2348 = vunpack.c.h.b16 %v967
        %v2349 = vunpack.c.l.b16 %v968
        %v2350 = vunpack.c.h.b16 %v968
        %v2351 = vunpack.c.l.b16 %v969
        %v2352 = vunpack.c.h.b16 %v969
        %v2353 = vunpack.c.l.b16 %v970
        %v2354 = vunpack.c.h.b16 %v970
        %v2355 = vunpack.c.l.b16 %v971
        %v2356 = vunpack.c.h.b16 %v971
        %v2357 = vunpack.c.l.b16 %v972
        %v2358 = vunpack.c.h.b16 %v972
        %v2359 = vunpack.c.l.b16 %v973
        %v2360 = vunpack.c.h.b16 %v973
        %v2361 = vunpack.c.l.b16 %v974
        %v2362 = vunpack.c.h.b16 %v974
        %v2363 = vunpack.c.l.b16 %v975
        %v2364 = vunpack.c.h.b16 %v975
        %v2365 = vunpack.c.l.b16 %v976
        %v2366 = vunpack.c.h.b16 %v976
        %v2367 = vunpack.c.l.b16 %v977
        %v2368 = vunpack.c.h.b16 %v977
        %v2369 = vunpack.c.l.b16 %v978
        %v2370 = vunpack.c.h.b16 %v978
        %v2371 = vunpack.c.l.b16 %v979
        %v2372 = vunpack.c.h.b16 %v979
        %v2373 = vunpack.c.l.b16 %v980
        %v2374 = vunpack.c.h.b16 %v980
        %v2375 = vunpack.c.l.b16 %v981
        %v2376 = vunpack.c.h.b16 %v981
        %v2377 = vunpack.c.l.b16 %v982
        %v2378 = vunpack.c.h.b16 %v982
        %v2379 = vunpack.c.l.b16 %v983
        %v2380 = vunpack.c.h.b16 %v983
        %v2381 = vunpack.c.l.b16 %v984
        %v2382 = vunpack.c.h.b16 %v984
        %v2383 = vunpack.c.l.b16 %v985
        %v2384 = vunpack.c.h.b16 %v985
        %v2385 = vunpack.c.l.b16 %v986
        %v2386 = vunpack.c.h.b16 %v986
        %v2387 = vunpack.c.l.b16 %v987
        %v2388 = vunpack.c.h.b16 %v987
        %v2389 = vunpack.c.l.b16 %v988
        %v2390 = vunpack.c.h.b16 %v988
        %v2391 = vunpack.c.l.b16 %v989
        %v2392 = vunpack.c.h.b16 %v989
        %v2393 = vunpack.c.l.b16 %v990
        %v2394 = vunpack.c.h.b16 %v990
        %v2395 = vunpack.c.l.b16 %v991
        %v2396 = vunpack.c.h.b16 %v991
        %v2397 = vunpack.c.l.b16 %v992
        %v2398 = vunpack.c.h.b16 %v992
        %v2399 = vunpack.c.l.b16 %v993
        %v2400 = vunpack.c.h.b16 %v993
        %v2401 = vunpack.c.l.b16 %v994
        %v2402 = vunpack.c.h.b16 %v994
        %v2403 = vunpack.c.l.b16 %v995
        %v2404 = vunpack.c.h.b16 %v995
        %v2405 = vunpack.c.l.b16 %v996
        %v2406 = vunpack.c.h.b16 %v996
        %v2407 = vunpack.c.l.b16 %v997
        %v2408 = vunpack.c.h.b16 %v997
        %v2409 = vunpack.c.l.b16 %v998
        %v2410 = vunpack.c.h.b16 %v998
        %v2411 = vunpack.c.l.b16 %v999
        %v2412 = vunpack.c.h.b16 %v999
        %v2413 = vunpack.c.l.b16 %v1000
        %v2414 = vunpack.c.h.b16 %v1000
        %v2415 = vunpack.c.l.b16 %v1001
        %v2416 = vunpack.c.h.b16 %v1001
        %v2417 = vunpack.c.l.b16 %v1002
        %v2418 = vunpack.c.h.b16 %v1002
        %v2419 = vunpack.c.l.b16 %v1003
        %v2420 = vunpack.c.h.b16 %v1003
        %v2421 = vunpack.c.l.b16 %v1004
        %v2422 = vunpack.c.h.b16 %v1004
        %v2423 = vunpack.c.l.b16 %v1005
        %v2424 = vunpack.c.h.b16 %v1005
        %v2425 = vunpack.c.l.b16 %v1006
        %v2426 = vunpack.c.h.b16 %v1006
        %v2427 = vunpack.c.l.b16 %v1007
        %v2428 = vunpack.c.h.b16 %v1007
        %v2429 = vunpack.c.l.b16 %v1008
        %v2430 = vunpack.c.h.b16 %v1008
        %v2431 = vunpack.c.l.b16 %v1009
        %v2432 = vunpack.c.h.b16 %v1009
        %v2433 = vunpack.c.l.b16 %v1010
        %v2434 = vunpack.c.h.b16 %v1010
        %v2435 = vunpack.c.l.b16 %v1011
        %v2436 = vunpack.c.h.b16 %v1011
        %v2437 = vunpack.c.l.b16 %v1012
        %v2438 = vunpack.c.h.b16 %v1012
        %v2439 = vunpack.c.l.b16 %v1013
        %v2440 = vunpack.c.h.b16 %v1013
        %v2441 = vunpack.c.l.b16 %v1014
        %v2442 = vunpack.c.h.b16 %v1014
        %v2443 = vunpack.c.l.b16 %v1015
        %v2444 = vunpack.c.h.b16 %v1015
        %v2445 = vunpack.c.l.b16 %v1016
        %v2446 = vunpack.c.h.b16 %v1016
        %v2447 = vunpack.c.l.b16 %v1017
        %v2448 = vunpack.c.h.b16 %v1017
        %v2449 = vunpack.c.l.b16 %v1018
        %v2450 = vunpack.c.h.b16 %v1018
        %v2451 = vunpack.c.l.b16 %v1019
        %v2452 = vunpack.c.h.b16 %v1019
        %v2453 = vunpack.c.l.b16 %v1020
        %v2454 = vunpack.c.h.b16 %v1020
        %v2455 = vunpack.c.l.b16 %v1021
        %v2456 = vunpack.c.h.b16 %v1021
        %v2457 = vunpack.c.l.b16 %v1022
        %v2458 = vunpack.c.h.b16 %v1022
        %v2459 = vunpack.c.l.b16 %v1023
        %v2460 = vunpack.c.h.b16 %v1023
        %v2461 = vunpack.c.l.b16 %v1024
        %v2462 = vunpack.c.h.b16 %v1024
        %v2463 = vunpack.c.l.b16 %v1025
        %v2464 = vunpack.c.h.b16 %v1025
        %v2465 = vunpack.c.l.b16 %v1026
        %v2466 = vunpack.c.h.b16 %v1026
        %v2467 = vunpack.c.l.b16 %v1027
        %v2468 = vunpack.c.h.b16 %v1027
        %v2469 = vunpack.c.l.b16 %v1028
        %v2470 = vunpack.c.h.b16 %v1028
        %v2471 = vunpack.c.l.b16 %v1029
        %v2472 = vunpack.c.h.b16 %v1029
        %v2473 = vunpack.c.l.b16 %v1030
        %v2474 = vunpack.c.h.b16 %v1030
        %v2475 = vunpack.c.l.b16 %v1031
        %v2476 = vunpack.c.h.b16 %v1031
        %v2477 = vunpack.c.l.b16 %v1032
        %v2478 = vunpack.c.h.b16 %v1032
        %v2479 = vunpack.c.l.b16 %v1033
        %v2480 = vunpack.c.h.b16 %v1033
        %v2481 = vunpack.c.l.b16 %v1034
        %v2482 = vunpack.c.h.b16 %v1034
        %v2483 = vunpack.c.l.b16 %v1035
        %v2484 = vunpack.c.h.b16 %v1035
        %v2485 = vunpack.c.l.b16 %v1036
        %v2486 = vunpack.c.h.b16 %v1036
        %v2487 = vunpack.c.l.b16 %v1037
        %v2488 = vunpack.c.h.b16 %v1037
        %v2489 = vunpack.c.l.b16 %v1038
        %v2490 = vunpack.c.h.b16 %v1038
        %v2491 = vunpack.c.l.b16 %v1039
        %v2492 = vunpack.c.h.b16 %v1039
        %v2493 = vunpack.c.l.b16 %v1040
        %v2494 = vunpack.c.h.b16 %v1040
        %v2495 = vunpack.c.l.b16 %v1041
        %v2496 = vunpack.c.h.b16 %v1041
        %v2497 = vunpack.c.l.b16 %v1042
        %v2498 = vunpack.c.h.b16 %v1042
        %v2499 = vunpack.c.l.b16 %v1043
        %v2500 = vunpack.c.h.b16 %v1043
        %v2501 = vunpack.c.l.b16 %v1044
        %v2502 = vunpack.c.h.b16 %v1044
        %v2503 = vunpack.c.l.b16 %v1045
        %v2504 = vunpack.c.h.b16 %v1045
        %v2505 = vunpack.c.l.b16 %v1046
        %v2506 = vunpack.c.h.b16 %v1046
        %v2507 = vunpack.c.l.b16 %v1047
        %v2508 = vunpack.c.h.b16 %v1047
        %v2509 = vunpack.c.l.b16 %v1048
        %v2510 = vunpack.c.h.b16 %v1048
        %v2511 = vunpack.c.l.b16 %v1049
        %v2512 = vunpack.c.h.b16 %v1049
        %v2513 = vunpack.c.l.b16 %v1050
        %v2514 = vunpack.c.h.b16 %v1050
        %v2515 = vunpack.c.l.b16 %v1051
        %v2516 = vunpack.c.h.b16 %v1051
        %v2517 = vunpack.c.l.b16 %v1052
        %v2518 = vunpack.c.h.b16 %v1052
        %v2519 = vunpack.c.l.b16 %v1053
        %v2520 = vunpack.c.h.b16 %v1053
        %v2521 = vunpack.c.l.b16 %v1054
        %v2522 = vunpack.c.h.b16 %v1054
        %v2523 = vunpack.c.l.b16 %v1055
        %v2524 = vunpack.c.h.b16 %v1055
        %v2525 = vunpack.c.l.b16 %v1056
        %v2526 = vunpack.c.h.b16 %v1056
        %v2527 = vunpack.c.l.b16 %v1057
        %v2528 = vunpack.c.h.b16 %v1057
        %v2529 = vunpack.c.l.b16 %v1058
        %v2530 = vunpack.c.h.b16 %v1058
        %v2531 = vunpack.c.l.b16 %v1059
        %v2532 = vunpack.c.h.b16 %v1059
        %v2533 = vunpack.c.l.b16 %v1060
        %v2534 = vunpack.c.h.b16 %v1060
        %v2535 = vunpack.c.l.b16 %v1061
        %v2536 = vunpack.c.h.b16 %v1061
        %v2537 = vunpack.c.l.b16 %v1062
        %v2538 = vunpack.c.h.b16 %v1062
        %v2539 = vunpack.c.l.b16 %v1063
        %v2540 = vunpack.c.h.b16 %v1063
        %v2541 = vunpack.c.l.b16 %v1064
        %v2542 = vunpack.c.h.b16 %v1064
        %v2543 = vunpack.c.l.b16 %v1065
        %v2544 = vunpack.c.h.b16 %v1065
        %v2545 = vunpack.c.l.b16 %v1066
        %v2546 = vunpack.c.h.b16 %v1066
        %v2547 = vunpack.c.l.b16 %v1067
        %v2548 = vunpack.c.h.b16 %v1067
        %v2549 = vunpack.c.l.b16 %v1068
        %v2550 = vunpack.c.h.b16 %v1068
        %v2551 = vunpack.c.l.b16 %v1069
        %v2552 = vunpack.c.h.b16 %v1069
        %v2553 = vunpack.c.l.b16 %v1070
        %v2554 = vunpack.c.h.b16 %v1070
        %v2555 = vunpack.c.l.b16 %v1071
        %v2556 = vunpack.c.h.b16 %v1071
        %v2557 = vunpack.c.l.b16 %v1072
        %v2558 = vunpack.c.h.b16 %v1072
        %v2559 = vunpack.c.l.b16 %v1073
        %v2560 = vunpack.c.h.b16 %v1073
        %v2561 = vunpack.c.l.b16 %v1074
        %v2562 = vunpack.c.h.b16 %v1074
        %v2563 = vunpack.c.l.b16 %v1075
        %v2564 = vunpack.c.h.b16 %v1075
        %v2565 = vunpack.c.l.b16 %v1076
        %v2566 = vunpack.c.h.b16 %v1076
        %v2567 = vunpack.c.l.b16 %v1077
        %v2568 = vunpack.c.h.b16 %v1077
        %v2569 = vunpack.c.l.b16 %v1078
        %v2570 = vunpack.c.h.b16 %v1078
        %v2571 = vunpack.c.l.b16 %v1079
        %v2572 = vunpack.c.h.b16 %v1079
        %v2573 = vunpack.c.l.b16 %v1080
        %v2574 = vunpack.c.h.b16 %v1080
        %v2575 = vunpack.c.l.b16 %v1081
        %v2576 = vunpack.c.h.b16 %v1081
        %v2577 = vunpack.c.l.b16 %v1082
        %v2578 = vunpack.c.h.b16 %v1082
        %v2579 = vunpack.c.l.b16 %v1083
        %v2580 = vunpack.c.h.b16 %v1083
        %v2581 = vunpack.c.l.b16 %v1084
        %v2582 = vunpack.c.h.b16 %v1084
        %v2583 = vunpack.c.l.b16 %v1085
        %v2584 = vunpack.c.h.b16 %v1085
        %v2585 = vunpack.c.l.b16 %v1086
        %v2586 = vunpack.c.h.b16 %v1086
        %v2587 = vunpack.c.l.b16 %v1087
        %v2588 = vunpack.c.h.b16 %v1087
        %v2589 = vunpack.c.l.b16 %v1088
        %v2590 = vunpack.c.h.b16 %v1088
        %v2591 = vunpack.c.l.b16 %v1089
        %v2592 = vunpack.c.h.b16 %v1089
        %v2593 = vunpack.c.l.b16 %v1090
        %v2594 = vunpack.c.h.b16 %v1090
        %v2595 = vunpack.c.l.b16 %v1091
        %v2596 = vunpack.c.h.b16 %v1091
        %v2597 = vunpack.c.l.b16 %v1092
        %v2598 = vunpack.c.h.b16 %v1092
        %v2599 = vunpack.c.l.b16 %v1093
        %v2600 = vunpack.c.h.b16 %v1093
        %v2601 = vunpack.c.l.b16 %v1094
        %v2602 = vunpack.c.h.b16 %v1094
        %v2603 = vunpack.c.l.b16 %v1095
        %v2604 = vunpack.c.h.b16 %v1095
        %v2605 = vunpack.c.l.b16 %v1096
        %v2606 = vunpack.c.h.b16 %v1096
        %v2607 = vunpack.c.l.b16 %v1097
        %v2608 = vunpack.c.h.b16 %v1097
        %v2609 = vunpack.c.l.b16 %v1098
        %v2610 = vunpack.c.h.b16 %v1098
        %v2611 = vunpack.c.l.b16 %v1099
        %v2612 = vunpack.c.h.b16 %v1099
        %v2613 = vunpack.c.l.b16 %v1100
        %v2614 = vunpack.c.h.b16 %v1100
        %v2615 = vunpack.c.l.b16 %v1101
        %v2616 = vunpack.c.h.b16 %v1101
        %v2617 = vunpack.c.l.b16 %v1102
        %v2618 = vunpack.c.h.b16 %v1102
        %v2619 = vunpack.c.l.b16 %v1103
        %v2620 = vunpack.c.h.b16 %v1103
        %v2621 = vunpack.c.l.b16 %v1104
        %v2622 = vunpack.c.h.b16 %v1104
        %v2623 = vunpack.c.l.b16 %v1105
        %v2624 = vunpack.c.h.b16 %v1105
        %v2625 = vunpack.c.l.b16 %v1106
        %v2626 = vunpack.c.h.b16 %v1106
        %v2627 = vunpack.c.l.b16 %v1107
        %v2628 = vunpack.c.h.b16 %v1107
        %v2629 = vunpack.c.l.b16 %v1108
        %v2630 = vunpack.c.h.b16 %v1108
        %v2631 = vunpack.c.l.b16 %v1109
        %v2632 = vunpack.c.h.b16 %v1109
        %v2633 = vunpack.c.l.b16 %v1110
        %v2634 = vunpack.c.h.b16 %v1110
        %v2635 = vunpack.c.l.b16 %v1111
        %v2636 = vunpack.c.h.b16 %v1111
        %v2637 = vunpack.c.l.b16 %v1112
        %v2638 = vunpack.c.h.b16 %v1112
        %v2639 = vunpack.c.l.b16 %v1113
        %v2640 = vunpack.c.h.b16 %v1113
        %v2641 = vunpack.c.l.b16 %v1114
        %v2642 = vunpack.c.h.b16 %v1114
        %v2643 = vunpack.c.l.b16 %v1115
        %v2644 = vunpack.c.h.b16 %v1115
        %v2645 = vunpack.c.l.b16 %v1116
        %v2646 = vunpack.c.h.b16 %v1116
        %v2647 = vunpack.c.l.b16 %v1117
        %v2648 = vunpack.c.h.b16 %v1117
        %v2649 = vunpack.c.l.b16 %v1118
        %v2650 = vunpack.c.h.b16 %v1118
        %v2651 = vunpack.c.l.b16 %v1119
        %v2652 = vunpack.c.h.b16 %v1119
        %v2653 = vunpack.c.l.b16 %v1120
        %v2654 = vunpack.c.h.b16 %v1120
        %v2655 = vunpack.c.l.b16 %v1121
        %v2656 = vunpack.c.h.b16 %v1121
        %v2657 = vunpack.c.l.b16 %v1122
        %v2658 = vunpack.c.h.b16 %v1122
        %v2659 = vunpack.c.l.b16 %v1123
        %v2660 = vunpack.c.h.b16 %v1123
        %v2661 = vunpack.c.l.b16 %v1124
        %v2662 = vunpack.c.h.b16 %v1124
        %v2663 = vunpack.c.l.b16 %v1125
        %v2664 = vunpack.c.h.b16 %v1125
        %v2665 = vunpack.c.l.b16 %v1126
        %v2666 = vunpack.c.h.b16 %v1126
        %v2667 = vunpack.c.l.b16 %v1127
        %v2668 = vunpack.c.h.b16 %v1127
        %v2669 = vunpack.c.l.b16 %v1128
        %v2670 = vunpack.c.h.b16 %v1128
        %v2671 = vunpack.c.l.b16 %v1129
        %v2672 = vunpack.c.h.b16 %v1129
        %v2673 = vunpack.c.l.b16 %v1130
        %v2674 = vunpack.c.h.b16 %v1130
        %v2675 = vunpack.c.l.b16 %v1131
        %v2676 = vunpack.c.h.b16 %v1131
        %v2677 = vunpack.c.l.b16 %v1132
        %v2678 = vunpack.c.h.b16 %v1132
        %v2679 = vunpack.c.l.b16 %v1133
        %v2680 = vunpack.c.h.b16 %v1133
        %v2681 = vunpack.c.l.b16 %v1134
        %v2682 = vunpack.c.h.b16 %v1134
        %v2683 = vunpack.c.l.b16 %v1135
        %v2684 = vunpack.c.h.b16 %v1135
        %v2685 = vunpack.c.l.b16 %v1136
        %v2686 = vunpack.c.h.b16 %v1136
        %v2687 = vunpack.c.l.b16 %v1137
        %v2688 = vunpack.c.h.b16 %v1137
        %v2689 = vunpack.c.l.b16 %v1138
        %v2690 = vunpack.c.h.b16 %v1138
        %v2691 = vunpack.c.l.b16 %v1139
        %v2692 = vunpack.c.h.b16 %v1139
        %v2693 = vunpack.c.l.b16 %v1140
        %v2694 = vunpack.c.h.b16 %v1140
        %v2695 = vunpack.c.l.b16 %v1141
        %v2696 = vunpack.c.h.b16 %v1141
        %v2697 = vunpack.c.l.b16 %v1142
        %v2698 = vunpack.c.h.b16 %v1142
        %v2699 = vunpack.c.l.b16 %v1143
        %v2700 = vunpack.c.h.b16 %v1143
        %v2701 = vunpack.c.l.b16 %v1144
        %v2702 = vunpack.c.h.b16 %v1144
        %v2703 = vunpack.c.l.b16 %v1145
        %v2704 = vunpack.c.h.b16 %v1145
        %v2705 = vunpack.c.l.b16 %v1146
        %v2706 = vunpack.c.h.b16 %v1146
        %v2707 = vunpack.c.l.b16 %v1147
        %v2708 = vunpack.c.h.b16 %v1147
        %v2709 = vunpack.c.l.b16 %v1148
        %v2710 = vunpack.c.h.b16 %v1148
        %v2711 = vunpack.c.l.b16 %v1149
        %v2712 = vunpack.c.h.b16 %v1149
        %v2713 = vunpack.c.l.b16 %v1150
        %v2714 = vunpack.c.h.b16 %v1150
        %v2715 = vunpack.c.l.b16 %v1151
        %v2716 = vunpack.c.h.b16 %v1151
        %v2717 = vunpack.c.l.b16 %v1152
        %v2718 = vunpack.c.h.b16 %v1152
        %v2719 = vunpack.c.l.b16 %v1153
        %v2720 = vunpack.c.h.b16 %v1153
        %v2721 = vunpack.c.l.b16 %v1154
        %v2722 = vunpack.c.h.b16 %v1154
        %v2723 = vunpack.c.l.b16 %v1155
        %v2724 = vunpack.c.h.b16 %v1155
        %v2725 = vunpack.c.l.b16 %v1156
        %v2726 = vunpack.c.h.b16 %v1156
        %v2727 = vunpack.c.l.b16 %v1157
        %v2728 = vunpack.c.h.b16 %v1157
        %v2729 = vunpack.c.l.b16 %v1158
        %v2730 = vunpack.c.h.b16 %v1158
        %v2731 = vunpack.c.l.b16 %v1159
        %v2732 = vunpack.c.h.b16 %v1159
        %v2733 = vunpack.c.l.b16 %v1160
        %v2734 = vunpack.c.h.b16 %v1160
        %v2735 = vunpack.c.l.b16 %v1161
        %v2736 = vunpack.c.h.b16 %v1161
        %v2737 = vunpack.c.l.b16 %v1162
        %v2738 = vunpack.c.h.b16 %v1162
        %v2739 = vunpack.c.l.b16 %v1163
        %v2740 = vunpack.c.h.b16 %v1163
        %v2741 = vunpack.c.l.b16 %v1164
        %v2742 = vunpack.c.h.b16 %v1164
        %v2743 = vunpack.c.l.b16 %v1165
        %v2744 = vunpack.c.h.b16 %v1165
        %v2745 = vunpack.c.l.b16 %v1166
        %v2746 = vunpack.c.h.b16 %v1166
        %v2747 = vunpack.c.l.b16 %v1167
        %v2748 = vunpack.c.h.b16 %v1167
        %v2749 = vunpack.c.l.b16 %v1168
        %v2750 = vunpack.c.h.b16 %v1168
        %v2751 = vunpack.c.l.b16 %v1169
        %v2752 = vunpack.c.h.b16 %v1169
        %v2753 = vunpack.c.l.b16 %v1170
        %v2754 = vunpack.c.h.b16 %v1170
        %v2755 = vunpack.c.l.b16 %v1171
        %v2756 = vunpack.c.h.b16 %v1171
        %v2757 = vunpack.c.l.b16 %v1172
        %v2758 = vunpack.c.h.b16 %v1172
        %v2759 = vunpack.c.l.b16 %v1173
        %v2760 = vunpack.c.h.b16 %v1173
        %v2761 = vunpack.c.l.b16 %v1174
        %v2762 = vunpack.c.h.b16 %v1174
        %v2763 = vunpack.c.l.b16 %v1175
        %v2764 = vunpack.c.h.b16 %v1175
        %v2765 = vunpack.c.l.b16 %v1176
        %v2766 = vunpack.c.h.b16 %v1176
        %v2767 = vunpack.c.l.b16 %v1177
        %v2768 = vunpack.c.h.b16 %v1177
        %v2769 = vunpack.c.l.b16 %v1178
        %v2770 = vunpack.c.h.b16 %v1178
        %v2771 = vunpack.c.l.b16 %v1179
        %v2772 = vunpack.c.h.b16 %v1179
        %v2773 = vunpack.c.l.b16 %v1180
        %v2774 = vunpack.c.h.b16 %v1180
        %v2775 = vunpack.c.l.b16 %v1181
        %v2776 = vunpack.c.h.b16 %v1181
        %v2777 = vunpack.c.l.b16 %v1182
        %v2778 = vunpack.c.h.b16 %v1182
        %v2779 = vunpack.c.l.b16 %v1183
        %v2780 = vunpack.c.h.b16 %v1183
        %v2781 = vunpack.c.l.b16 %v1184
        %v2782 = vunpack.c.h.b16 %v1184
        %v2783 = vunpack.c.l.b16 %v1185
        %v2784 = vunpack.c.h.b16 %v1185
        %v2785 = vunpack.c.l.b16 %v1186
        %v2786 = vunpack.c.h.b16 %v1186
        %v2787 = vunpack.c.l.b16 %v1187
        %v2788 = vunpack.c.h.b16 %v1187
        %v2789 = vunpack.c.l.b16 %v1188
        %v2790 = vunpack.c.h.b16 %v1188
        %v2791 = vunpack.c.l.b16 %v1189
        %v2792 = vunpack.c.h.b16 %v1189
        %v2793 = vunpack.c.l.b16 %v1190
        %v2794 = vunpack.c.h.b16 %v1190
        %v2795 = vunpack.c.l.b16 %v1191
        %v2796 = vunpack.c.h.b16 %v1191
        %v2797 = vunpack.c.l.b16 %v1192
        %v2798 = vunpack.c.h.b16 %v1192
        %v2799 = vunpack.c.l.b16 %v1193
        %v2800 = vunpack.c.h.b16 %v1193
        %v2801 = vunpack.c.l.b16 %v1194
        %v2802 = vunpack.c.h.b16 %v1194
        %v2803 = vunpack.c.l.b16 %v1195
        %v2804 = vunpack.c.h.b16 %v1195
        %v2805 = vunpack.c.l.b16 %v1196
        %v2806 = vunpack.c.h.b16 %v1196
        %v2807 = vunpack.c.l.b16 %v1197
        %v2808 = vunpack.c.h.b16 %v1197
        %v2809 = vunpack.c.l.b16 %v1198
        %v2810 = vunpack.c.h.b16 %v1198
        %v2811 = vunpack.c.l.b16 %v1199
        %v2812 = vunpack.c.h.b16 %v1199
        %v2813 = vunpack.c.l.b16 %v1200
        %v2814 = vunpack.c.h.b16 %v1200
        %v2815 = vunpack.c.l.b16 %v1201
        %v2816 = vunpack.c.h.b16 %v1201
        %v2817 = vunpack.c.l.b16 %v1202
        %v2818 = vunpack.c.h.b16 %v1202
        %v2819 = vpack.c.b16 %v1799, %v1795
        %v2820 = vpack.c.b16 %v1800, %v1796
        %v2821 = vpack.c.b16 %v1801, %v1797
        %v2822 = vpack.c.b16 %v1802, %v1798
        %v2823 = vpack.c.b16 %v1807, %v1803
        %v2824 = vpack.c.b16 %v1808, %v1804
        %v2825 = vpack.c.b16 %v1809, %v1805
        %v2826 = vpack.c.b16 %v1810, %v1806
        %v2827 = vpack.c.b16 %v1815, %v1811
        %v2828 = vpack.c.b16 %v1816, %v1812
        %v2829 = vpack.c.b16 %v1817, %v1813
        %v2830 = vpack.c.b16 %v1818, %v1814
        %v2831 = vpack.c.b16 %v1823, %v1819
        %v2832 = vpack.c.b16 %v1824, %v1820
        %v2833 = vpack.c.b16 %v1825, %v1821
        %v2834 = vpack.c.b16 %v1826, %v1822
        %v2835 = vpack.c.b16 %v1831, %v1827
        %v2836 = vpack.c.b16 %v1832, %v1828
        %v2837 = vpack.c.b16 %v1833, %v1829
        %v2838 = vpack.c.b16 %v1834, %v1830
        %v2839 = vpack.c.b16 %v1839, %v1835
        %v2840 = vpack.c.b16 %v1840, %v1836
        %v2841 = vpack.c.b16 %v1841, %v1837
        %v2842 = vpack.c.b16 %v1842, %v1838
        %v2843 = vpack.c.b16 %v1847, %v1843
        %v2844 = vpack.c.b16 %v1848, %v1844
        %v2845 = vpack.c.b16 %v1849, %v1845
        %v2846 = vpack.c.b16 %v1850, %v1846
        %v2847 = vpack.c.b16 %v1855, %v1851
        %v2848 = vpack.c.b16 %v1856, %v1852
        %v2849 = vpack.c.b16 %v1857, %v1853
        %v2850 = vpack.c.b16 %v1858, %v1854
        %v2851 = vpack.c.b16 %v1863, %v1859
        %v2852 = vpack.c.b16 %v1864, %v1860
        %v2853 = vpack.c.b16 %v1865, %v1861
        %v2854 = vpack.c.b16 %v1866, %v1862
        %v2855 = vpack.c.b16 %v1871, %v1867
        %v2856 = vpack.c.b16 %v1872, %v1868
        %v2857 = vpack.c.b16 %v1873, %v1869
        %v2858 = vpack.c.b16 %v1874, %v1870
        %v2859 = vpack.c.b16 %v1879, %v1875
        %v2860 = vpack.c.b16 %v1880, %v1876
        %v2861 = vpack.c.b16 %v1881, %v1877
        %v2862 = vpack.c.b16 %v1882, %v1878
        %v2863 = vpack.c.b16 %v1887, %v1883
        %v2864 = vpack.c.b16 %v1888, %v1884
        %v2865 = vpack.c.b16 %v1889, %v1885
        %v2866 = vpack.c.b16 %v1890, %v1886
        %v2867 = vpack.c.b16 %v1895, %v1891
        %v2868 = vpack.c.b16 %v1896, %v1892
        %v2869 = vpack.c.b16 %v1897, %v1893
        %v2870 = vpack.c.b16 %v1898, %v1894
        %v2871 = vpack.c.b16 %v1903, %v1899
        %v2872 = vpack.c.b16 %v1904, %v1900
        %v2873 = vpack.c.b16 %v1905, %v1901
        %v2874 = vpack.c.b16 %v1906, %v1902
        %v2875 = vpack.c.b16 %v1911, %v1907
        %v2876 = vpack.c.b16 %v1912, %v1908
        %v2877 = vpack.c.b16 %v1913, %v1909
        %v2878 = vpack.c.b16 %v1914, %v1910
        %v2879 = vpack.c.b16 %v1919, %v1915
        %v2880 = vpack.c.b16 %v1920, %v1916
        %v2881 = vpack.c.b16 %v1921, %v1917
        %v2882 = vpack.c.b16 %v1922, %v1918
        %v2883 = vpack.c.b16 %v1927, %v1923
        %v2884 = vpack.c.b16 %v1928, %v1924
        %v2885 = vpack.c.b16 %v1929, %v1925
        %v2886 = vpack.c.b16 %v1930, %v1926
        %v2887 = vpack.c.b16 %v1935, %v1931
        %v2888 = vpack.c.b16 %v1936, %v1932
        %v2889 = vpack.c.b16 %v1937, %v1933
        %v2890 = vpack.c.b16 %v1938, %v1934
        %v2891 = vpack.c.b16 %v1943, %v1939
        %v2892 = vpack.c.b16 %v1944, %v1940
        %v2893 = vpack.c.b16 %v1945, %v1941
        %v2894 = vpack.c.b16 %v1946, %v1942
        %v2895 = vpack.c.b16 %v1951, %v1947
        %v2896 = vpack.c.b16 %v1952, %v1948
        %v2897 = vpack.c.b16 %v1953, %v1949
        %v2898 = vpack.c.b16 %v1954, %v1950
        %v2899 = vpack.c.b16 %v1959, %v1955
        %v2900 = vpack.c.b16 %v1960, %v1956
        %v2901 = vpack.c.b16 %v1961, %v1957
        %v2902 = vpack.c.b16 %v1962, %v1958
        %v2903 = vpack.c.b16 %v1967, %v1963
        %v2904 = vpack.c.b16 %v1968, %v1964
        %v2905 = vpack.c.b16 %v1969, %v1965
        %v2906 = vpack.c.b16 %v1970, %v1966
        %v2907 = vpack.c.b16 %v1975, %v1971
        %v2908 = vpack.c.b16 %v1976, %v1972
        %v2909 = vpack.c.b16 %v1977, %v1973
        %v2910 = vpack.c.b16 %v1978, %v1974
        %v2911 = vpack.c.b16 %v1983, %v1979
        %v2912 = vpack.c.b16 %v1984, %v1980
        %v2913 = vpack.c.b16 %v1985, %v1981
        %v2914 = vpack.c.b16 %v1986, %v1982
        %v2915 = vpack.c.b16 %v1991, %v1987
        %v2916 = vpack.c.b16 %v1992, %v1988
        %v2917 = vpack.c.b16 %v1993, %v1989
        %v2918 = vpack.c.b16 %v1994, %v1990
        %v2919 = vpack.c.b16 %v1999, %v1995
        %v2920 = vpack.c.b16 %v2000, %v1996
        %v2921 = vpack.c.b16 %v2001, %v1997
        %v2922 = vpack.c.b16 %v2002, %v1998
        %v2923 = vpack.c.b16 %v2007, %v2003
        %v2924 = vpack.c.b16 %v2008, %v2004
        %v2925 = vpack.c.b16 %v2009, %v2005
        %v2926 = vpack.c.b16 %v2010, %v2006
        %v2927 = vpack.c.b16 %v2015, %v2011
        %v2928 = vpack.c.b16 %v2016, %v2012
        %v2929 = vpack.c.b16 %v2017, %v2013
        %v2930 = vpack.c.b16 %v2018, %v2014
        %v2931 = vpack.c.b16 %v2023, %v2019
        %v2932 = vpack.c.b16 %v2024, %v2020
        %v2933 = vpack.c.b16 %v2025, %v2021
        %v2934 = vpack.c.b16 %v2026, %v2022
        %v2935 = vpack.c.b16 %v2031, %v2027
        %v2936 = vpack.c.b16 %v2032, %v2028
        %v2937 = vpack.c.b16 %v2033, %v2029
        %v2938 = vpack.c.b16 %v2034, %v2030
        %v2939 = vpack.c.b16 %v2039, %v2035
        %v2940 = vpack.c.b16 %v2040, %v2036
        %v2941 = vpack.c.b16 %v2041, %v2037
        %v2942 = vpack.c.b16 %v2042, %v2038
        %v2943 = vpack.c.b16 %v2047, %v2043
        %v2944 = vpack.c.b16 %v2048, %v2044
        %v2945 = vpack.c.b16 %v2049, %v2045
        %v2946 = vpack.c.b16 %v2050, %v2046
        %v2947 = vpack.c.b16 %v2055, %v2051
        %v2948 = vpack.c.b16 %v2056, %v2052
        %v2949 = vpack.c.b16 %v2057, %v2053
        %v2950 = vpack.c.b16 %v2058, %v2054
        %v2951 = vpack.c.b16 %v2063, %v2059
        %v2952 = vpack.c.b16 %v2064, %v2060
        %v2953 = vpack.c.b16 %v2065, %v2061
        %v2954 = vpack.c.b16 %v2066, %v2062
        %v2955 = vpack.c.b16 %v2071, %v2067
        %v2956 = vpack.c.b16 %v2072, %v2068
        %v2957 = vpack.c.b16 %v2073, %v2069
        %v2958 = vpack.c.b16 %v2074, %v2070
        %v2959 = vpack.c.b16 %v2079, %v2075
        %v2960 = vpack.c.b16 %v2080, %v2076
        %v2961 = vpack.c.b16 %v2081, %v2077
        %v2962 = vpack.c.b16 %v2082, %v2078
        %v2963 = vpack.c.b16 %v2087, %v2083
        %v2964 = vpack.c.b16 %v2088, %v2084
        %v2965 = vpack.c.b16 %v2089, %v2085
        %v2966 = vpack.c.b16 %v2090, %v2086
        %v2967 = vpack.c.b16 %v2095, %v2091
        %v2968 = vpack.c.b16 %v2096, %v2092
        %v2969 = vpack.c.b16 %v2097, %v2093
        %v2970 = vpack.c.b16 %v2098, %v2094
        %v2971 = vpack.c.b16 %v2103, %v2099
        %v2972 = vpack.c.b16 %v2104, %v2100
        %v2973 = vpack.c.b16 %v2105, %v2101
        %v2974 = vpack.c.b16 %v2106, %v2102
        %v2975 = vpack.c.b16 %v2111, %v2107
        %v2976 = vpack.c.b16 %v2112, %v2108
        %v2977 = vpack.c.b16 %v2113, %v2109
        %v2978 = vpack.c.b16 %v2114, %v2110
        %v2979 = vpack.c.b16 %v2119, %v2115
        %v2980 = vpack.c.b16 %v2120, %v2116
        %v2981 = vpack.c.b16 %v2121, %v2117
        %v2982 = vpack.c.b16 %v2122, %v2118
        %v2983 = vpack.c.b16 %v2127, %v2123
        %v2984 = vpack.c.b16 %v2128, %v2124
        %v2985 = vpack.c.b16 %v2129, %v2125
        %v2986 = vpack.c.b16 %v2130, %v2126
        %v2987 = vpack.c.b16 %v2135, %v2131
        %v2988 = vpack.c.b16 %v2136, %v2132
        %v2989 = vpack.c.b16 %v2137, %v2133
        %v2990 = vpack.c.b16 %v2138, %v2134
        %v2991 = vpack.c.b16 %v2143, %v2139
        %v2992 = vpack.c.b16 %v2144, %v2140
        %v2993 = vpack.c.b16 %v2145, %v2141
        %v2994 = vpack.c.b16 %v2146, %v2142
        %v2995 = vpack.c.b16 %v2151, %v2147
        %v2996 = vpack.c.b16 %v2152, %v2148
        %v2997 = vpack.c.b16 %v2153, %v2149
        %v2998 = vpack.c.b16 %v2154, %v2150
        %v2999 = vpack.c.b16 %v2159, %v2155
        %v3000 = vpack.c.b16 %v2160, %v2156
        %v3001 = vpack.c.b16 %v2161, %v2157
        %v3002 = vpack.c.b16 %v2162, %v2158
        %v3003 = vpack.c.b16 %v2167, %v2163
        %v3004 = vpack.c.b16 %v2168, %v2164
        %v3005 = vpack.c.b16 %v2169, %v2165
        %v3006 = vpack.c.b16 %v2170, %v2166
        %v3007 = vpack.c.b16 %v2175, %v2171
        %v3008 = vpack.c.b16 %v2176, %v2172
        %v3009 = vpack.c.b16 %v2177, %v2173
        %v3010 = vpack.c.b16 %v2178, %v2174
        %v3011 = vpack.c.b16 %v2183, %v2179
        %v3012 = vpack.c.b16 %v2184, %v2180
        %v3013 = vpack.c.b16 %v2185, %v2181
        %v3014 = vpack.c.b16 %v2186, %v2182
        %v3015 = vpack.c.b16 %v2191, %v2187
        %v3016 = vpack.c.b16 %v2192, %v2188
        %v3017 = vpack.c.b16 %v2193, %v2189
        %v3018 = vpack.c.b16 %v2194, %v2190
        %v3019 = vpack.c.b16 %v2199, %v2195
        %v3020 = vpack.c.b16 %v2200, %v2196
        %v3021 = vpack.c.b16 %v2201, %v2197
        %v3022 = vpack.c.b16 %v2202, %v2198
        %v3023 = vpack.c.b16 %v2207, %v2203
        %v3024 = vpack.c.b16 %v2208, %v2204
        %v3025 = vpack.c.b16 %v2209, %v2205
        %v3026 = vpack.c.b16 %v2210, %v2206
        %v3027 = vpack.c.b16 %v2215, %v2211
        %v3028 = vpack.c.b16 %v2216, %v2212
        %v3029 = vpack.c.b16 %v2217, %v2213
        %v3030 = vpack.c.b16 %v2218, %v2214
        %v3031 = vpack.c.b16 %v2223, %v2219
        %v3032 = vpack.c.b16 %v2224, %v2220
        %v3033 = vpack.c.b16 %v2225, %v2221
        %v3034 = vpack.c.b16 %v2226, %v2222
        %v3035 = vpack.c.b16 %v2231, %v2227
        %v3036 = vpack.c.b16 %v2232, %v2228
        %v3037 = vpack.c.b16 %v2233, %v2229
        %v3038 = vpack.c.b16 %v2234, %v2230
        %v3039 = vpack.c.b16 %v2239, %v2235
        %v3040 = vpack.c.b16 %v2240, %v2236
        %v3041 = vpack.c.b16 %v2241, %v2237
        %v3042 = vpack.c.b16 %v2242, %v2238
        %v3043 = vpack.c.b16 %v2247, %v2243
        %v3044 = vpack.c.b16 %v2248, %v2244
        %v3045 = vpack.c.b16 %v2249, %v2245
        %v3046 = vpack.c.b16 %v2250, %v2246
        %v3047 = vpack.c.b16 %v2255, %v2251
        %v3048 = vpack.c.b16 %v2256, %v2252
        %v3049 = vpack.c.b16 %v2257, %v2253
        %v3050 = vpack.c.b16 %v2258, %v2254
        %v3051 = vpack.c.b16 %v2263, %v2259
        %v3052 = vpack.c.b16 %v2264, %v2260
        %v3053 = vpack.c.b16 %v2265, %v2261
        %v3054 = vpack.c.b16 %v2266, %v2262
        %v3055 = vpack.c.b16 %v2271, %v2267
        %v3056 = vpack.c.b16 %v2272, %v2268
        %v3057 = vpack.c.b16 %v2273, %v2269
        %v3058 = vpack.c.b16 %v2274, %v2270
        %v3059 = vpack.c.b16 %v2279, %v2275
        %v3060 = vpack.c.b16 %v2280, %v2276
        %v3061 = vpack.c.b16 %v2281, %v2277
        %v3062 = vpack.c.b16 %v2282, %v2278
        %v3063 = vpack.c.b16 %v2287, %v2283
        %v3064 = vpack.c.b16 %v2288, %v2284
        %v3065 = vpack.c.b16 %v2289, %v2285
        %v3066 = vpack.c.b16 %v2290, %v2286
        %v3067 = vpack.c.b16 %v2295, %v2291
        %v3068 = vpack.c.b16 %v2296, %v2292
        %v3069 = vpack.c.b16 %v2297, %v2293
        %v3070 = vpack.c.b16 %v2298, %v2294
        %v3071 = vpack.c.b16 %v2303, %v2299
        %v3072 = vpack.c.b16 %v2304, %v2300
        %v3073 = vpack.c.b16 %v2305, %v2301
        %v3074 = vpack.c.b16 %v2306, %v2302
        %v3075 = vpack.c.b16 %v2311, %v2307
        %v3076 = vpack.c.b16 %v2312, %v2308
        %v3077 = vpack.c.b16 %v2313, %v2309
        %v3078 = vpack.c.b16 %v2314, %v2310
        %v3079 = vpack.c.b16 %v2319, %v2315
        %v3080 = vpack.c.b16 %v2320, %v2316
        %v3081 = vpack.c.b16 %v2321, %v2317
        %v3082 = vpack.c.b16 %v2322, %v2318
        %v3083 = vpack.c.b16 %v2327, %v2323
        %v3084 = vpack.c.b16 %v2328, %v2324
        %v3085 = vpack.c.b16 %v2329, %v2325
        %v3086 = vpack.c.b16 %v2330, %v2326
        %v3087 = vpack.c.b16 %v2335, %v2331
        %v3088 = vpack.c.b16 %v2336, %v2332
        %v3089 = vpack.c.b16 %v2337, %v2333
        %v3090 = vpack.c.b16 %v2338, %v2334
        %v3091 = vpack.c.b16 %v2343, %v2339
        %v3092 = vpack.c.b16 %v2344, %v2340
        %v3093 = vpack.c.b16 %v2345, %v2341
        %v3094 = vpack.c.b16 %v2346, %v2342
        %v3095 = vpack.c.b16 %v2351, %v2347
        %v3096 = vpack.c.b16 %v2352, %v2348
        %v3097 = vpack.c.b16 %v2353, %v2349
        %v3098 = vpack.c.b16 %v2354, %v2350
        %v3099 = vpack.c.b16 %v2359, %v2355
        %v3100 = vpack.c.b16 %v2360, %v2356
        %v3101 = vpack.c.b16 %v2361, %v2357
        %v3102 = vpack.c.b16 %v2362, %v2358
        %v3103 = vpack.c.b16 %v2367, %v2363
        %v3104 = vpack.c.b16 %v2368, %v2364
        %v3105 = vpack.c.b16 %v2369, %v2365
        %v3106 = vpack.c.b16 %v2370, %v2366
        %v3107 = vpack.c.b16 %v2375, %v2371
        %v3108 = vpack.c.b16 %v2376, %v2372
        %v3109 = vpack.c.b16 %v2377, %v2373
        %v3110 = vpack.c.b16 %v2378, %v2374
        %v3111 = vpack.c.b16 %v2383, %v2379
        %v3112 = vpack.c.b16 %v2384, %v2380
        %v3113 = vpack.c.b16 %v2385, %v2381
        %v3114 = vpack.c.b16 %v2386, %v2382
        %v3115 = vpack.c.b16 %v2391, %v2387
        %v3116 = vpack.c.b16 %v2392, %v2388
        %v3117 = vpack.c.b16 %v2393, %v2389
        %v3118 = vpack.c.b16 %v2394, %v2390
        %v3119 = vpack.c.b16 %v2399, %v2395
        %v3120 = vpack.c.b16 %v2400, %v2396
        %v3121 = vpack.c.b16 %v2401, %v2397
        %v3122 = vpack.c.b16 %v2402, %v2398
        %v3123 = vpack.c.b16 %v2407, %v2403
        %v3124 = vpack.c.b16 %v2408, %v2404
        %v3125 = vpack.c.b16 %v2409, %v2405
        %v3126 = vpack.c.b16 %v2410, %v2406
        %v3127 = vpack.c.b16 %v2415, %v2411
        %v3128 = vpack.c.b16 %v2416, %v2412
        %v3129 = vpack.c.b16 %v2417, %v2413
        %v3130 = vpack.c.b16 %v2418, %v2414
        %v3131 = vpack.c.b16 %v2423, %v2419
        %v3132 = vpack.c.b16 %v2424, %v2420
        %v3133 = vpack.c.b16 %v2425, %v2421
        %v3134 = vpack.c.b16 %v2426, %v2422
        %v3135 = vpack.c.b16 %v2431, %v2427
        %v3136 = vpack.c.b16 %v2432, %v2428
        %v3137 = vpack.c.b16 %v2433, %v2429
        %v3138 = vpack.c.b16 %v2434, %v2430
        %v3139 = vpack.c.b16 %v2439, %v2435
        %v3140 = vpack.c.b16 %v2440, %v2436
        %v3141 = vpack.c.b16 %v2441, %v2437
        %v3142 = vpack.c.b16 %v2442, %v2438
        %v3143 = vpack.c.b16 %v2447, %v2443
        %v3144 = vpack.c.b16 %v2448, %v2444
        %v3145 = vpack.c.b16 %v2449, %v2445
        %v3146 = vpack.c.b16 %v2450, %v2446
        %v3147 = vpack.c.b16 %v2455, %v2451
        %v3148 = vpack.c.b16 %v2456, %v2452
        %v3149 = vpack.c.b16 %v2457, %v2453
        %v3150 = vpack.c.b16 %v2458, %v2454
        %v3151 = vpack.c.b16 %v2463, %v2459
        %v3152 = vpack.c.b16 %v2464, %v2460
        %v3153 = vpack.c.b16 %v2465, %v2461
        %v3154 = vpack.c.b16 %v2466, %v2462
        %v3155 = vpack.c.b16 %v2471, %v2467
        %v3156 = vpack.c.b16 %v2472, %v2468
        %v3157 = vpack.c.b16 %v2473, %v2469
        %v3158 = vpack.c.b16 %v2474, %v2470
        %v3159 = vpack.c.b16 %v2479, %v2475
        %v3160 = vpack.c.b16 %v2480, %v2476
        %v3161 = vpack.c.b16 %v2481, %v2477
        %v3162 = vpack.c.b16 %v2482, %v2478
        %v3163 = vpack.c.b16 %v2487, %v2483
        %v3164 = vpack.c.b16 %v2488, %v2484
        %v3165 = vpack.c.b16 %v2489, %v2485
        %v3166 = vpack.c.b16 %v2490, %v2486
        %v3167 = vpack.c.b16 %v2495, %v2491
        %v3168 = vpack.c.b16 %v2496, %v2492
        %v3169 = vpack.c.b16 %v2497, %v2493
        %v3170 = vpack.c.b16 %v2498, %v2494
        %v3171 = vpack.c.b16 %v2503, %v2499
        %v3172 = vpack.c.b16 %v2504, %v2500
        %v3173 = vpack.c.b16 %v2505, %v2501
        %v3174 = vpack.c.b16 %v2506, %v2502
        %v3175 = vpack.c.b16 %v2511, %v2507
        %v3176 = vpack.c.b16 %v2512, %v2508
        %v3177 = vpack.c.b16 %v2513, %v2509
        %v3178 = vpack.c.b16 %v2514, %v2510
        %v3179 = vpack.c.b16 %v2519, %v2515
        %v3180 = vpack.c.b16 %v2520, %v2516
        %v3181 = vpack.c.b16 %v2521, %v2517
        %v3182 = vpack.c.b16 %v2522, %v2518
        %v3183 = vpack.c.b16 %v2527, %v2523
        %v3184 = vpack.c.b16 %v2528, %v2524
        %v3185 = vpack.c.b16 %v2529, %v2525
        %v3186 = vpack.c.b16 %v2530, %v2526
        %v3187 = vpack.c.b16 %v2535, %v2531
        %v3188 = vpack.c.b16 %v2536, %v2532
        %v3189 = vpack.c.b16 %v2537, %v2533
        %v3190 = vpack.c.b16 %v2538, %v2534
        %v3191 = vpack.c.b16 %v2543, %v2539
        %v3192 = vpack.c.b16 %v2544, %v2540
        %v3193 = vpack.c.b16 %v2545, %v2541
        %v3194 = vpack.c.b16 %v2546, %v2542
        %v3195 = vpack.c.b16 %v2551, %v2547
        %v3196 = vpack.c.b16 %v2552, %v2548
        %v3197 = vpack.c.b16 %v2553, %v2549
        %v3198 = vpack.c.b16 %v2554, %v2550
        %v3199 = vpack.c.b16 %v2559, %v2555
        %v3200 = vpack.c.b16 %v2560, %v2556
        %v3201 = vpack.c.b16 %v2561, %v2557
        %v3202 = vpack.c.b16 %v2562, %v2558
        %v3203 = vpack.c.b16 %v2567, %v2563
        %v3204 = vpack.c.b16 %v2568, %v2564
        %v3205 = vpack.c.b16 %v2569, %v2565
        %v3206 = vpack.c.b16 %v2570, %v2566
        %v3207 = vpack.c.b16 %v2575, %v2571
        %v3208 = vpack.c.b16 %v2576, %v2572
        %v3209 = vpack.c.b16 %v2577, %v2573
        %v3210 = vpack.c.b16 %v2578, %v2574
        %v3211 = vpack.c.b16 %v2583, %v2579
        %v3212 = vpack.c.b16 %v2584, %v2580
        %v3213 = vpack.c.b16 %v2585, %v2581
        %v3214 = vpack.c.b16 %v2586, %v2582
        %v3215 = vpack.c.b16 %v2591, %v2587
        %v3216 = vpack.c.b16 %v2592, %v2588
        %v3217 = vpack.c.b16 %v2593, %v2589
        %v3218 = vpack.c.b16 %v2594, %v2590
        %v3219 = vpack.c.b16 %v2599, %v2595
        %v3220 = vpack.c.b16 %v2600, %v2596
        %v3221 = vpack.c.b16 %v2601, %v2597
        %v3222 = vpack.c.b16 %v2602, %v2598
        %v3223 = vpack.c.b16 %v2607, %v2603
        %v3224 = vpack.c.b16 %v2608, %v2604
        %v3225 = vpack.c.b16 %v2609, %v2605
        %v3226 = vpack.c.b16 %v2610, %v2606
        %v3227 = vpack.c.b16 %v2615, %v2611
        %v3228 = vpack.c.b16 %v2616, %v2612
        %v3229 = vpack.c.b16 %v2617, %v2613
        %v3230 = vpack.c.b16 %v2618, %v2614
        %v3231 = vpack.c.b16 %v2623, %v2619
        %v3232 = vpack.c.b16 %v2624, %v2620
        %v3233 = vpack.c.b16 %v2625, %v2621
        %v3234 = vpack.c.b16 %v2626, %v2622
        %v3235 = vpack.c.b16 %v2631, %v2627
        %v3236 = vpack.c.b16 %v2632, %v2628
        %v3237 = vpack.c.b16 %v2633, %v2629
        %v3238 = vpack.c.b16 %v2634, %v2630
        %v3239 = vpack.c.b16 %v2639, %v2635
        %v3240 = vpack.c.b16 %v2640, %v2636
        %v3241 = vpack.c.b16 %v2641, %v2637
        %v3242 = vpack.c.b16 %v2642, %v2638
        %v3243 = vpack.c.b16 %v2647, %v2643
        %v3244 = vpack.c.b16 %v2648, %v2644
        %v3245 = vpack.c.b16 %v2649, %v2645
        %v3246 = vpack.c.b16 %v2650, %v2646
        %v3247 = vpack.c.b16 %v2655, %v2651
        %v3248 = vpack.c.b16 %v2656, %v2652
        %v3249 = vpack.c.b16 %v2657, %v2653
        %v3250 = vpack.c.b16 %v2658, %v2654
        %v3251 = vpack.c.b16 %v2663, %v2659
        %v3252 = vpack.c.b16 %v2664, %v2660
        %v3253 = vpack.c.b16 %v2665, %v2661
        %v3254 = vpack.c.b16 %v2666, %v2662
        %v3255 = vpack.c.b16 %v2671, %v2667
        %v3256 = vpack.c.b16 %v2672, %v2668
        %v3257 = vpack.c.b16 %v2673, %v2669
        %v3258 = vpack.c.b16 %v2674, %v2670
        %v3259 = vpack.c.b16 %v2679, %v2675
        %v3260 = vpack.c.b16 %v2680, %v2676
        %v3261 = vpack.c.b16 %v2681, %v2677
        %v3262 = vpack.c.b16 %v2682, %v2678
        %v3263 = vpack.c.b16 %v2687, %v2683
        %v3264 = vpack.c.b16 %v2688, %v2684
        %v3265 = vpack.c.b16 %v2689, %v2685
        %v3266 = vpack.c.b16 %v2690, %v2686
        %v3267 = vpack.c.b16 %v2695, %v2691
        %v3268 = vpack.c.b16 %v2696, %v2692
        %v3269 = vpack.c.b16 %v2697, %v2693
        %v3270 = vpack.c.b16 %v2698, %v2694
        %v3271 = vpack.c.b16 %v2703, %v2699
        %v3272 = vpack.c.b16 %v2704, %v2700
        %v3273 = vpack.c.b16 %v2705, %v2701
        %v3274 = vpack.c.b16 %v2706, %v2702
        %v3275 = vpack.c.b16 %v2711, %v2707
        %v3276 = vpack.c.b16 %v2712, %v2708
        %v3277 = vpack.c.b16 %v2713, %v2709
        %v3278 = vpack.c.b16 %v2714, %v2710
        %v3279 = vpack.c.b16 %v2719, %v2715
        %v3280 = vpack.c.b16 %v2720, %v2716
        %v3281 = vpack.c.b16 %v2721, %v2717
        %v3282 = vpack.c.b16 %v2722, %v2718
        %v3283 = vpack.c.b16 %v2727, %v2723
        %v3284 = vpack.c.b16 %v2728, %v2724
        %v3285 = vpack.c.b16 %v2729, %v2725
        %v3286 = vpack.c.b16 %v2730, %v2726
        %v3287 = vpack.c.b16 %v2735, %v2731
        %v3288 = vpack.c.b16 %v2736, %v2732
        %v3289 = vpack.c.b16 %v2737, %v2733
        %v3290 = vpack.c.b16 %v2738, %v2734
        %v3291 = vpack.c.b16 %v2743, %v2739
        %v3292 = vpack.c.b16 %v2744, %v2740
        %v3293 = vpack.c.b16 %v2745, %v2741
        %v3294 = vpack.c.b16 %v2746, %v2742
        %v3295 = vpack.c.b16 %v2751, %v2747
        %v3296 = vpack.c.b16 %v2752, %v2748
        %v3297 = vpack.c.b16 %v2753, %v2749
        %v3298 = vpack.c.b16 %v2754, %v2750
        %v3299 = vpack.c.b16 %v2759, %v2755
        %v3300 = vpack.c.b16 %v2760, %v2756
        %v3301 = vpack.c.b16 %v2761, %v2757
        %v3302 = vpack.c.b16 %v2762, %v2758
        %v3303 = vpack.c.b16 %v2767, %v2763
        %v3304 = vpack.c.b16 %v2768, %v2764
        %v3305 = vpack.c.b16 %v2769, %v2765
        %v3306 = vpack.c.b16 %v2770, %v2766
        %v3307 = vpack.c.b16 %v2775, %v2771
        %v3308 = vpack.c.b16 %v2776, %v2772
        %v3309 = vpack.c.b16 %v2777, %v2773
        %v3310 = vpack.c.b16 %v2778, %v2774
        %v3311 = vpack.c.b16 %v2783, %v2779
        %v3312 = vpack.c.b16 %v2784, %v2780
        %v3313 = vpack.c.b16 %v2785, %v2781
        %v3314 = vpack.c.b16 %v2786, %v2782
        %v3315 = vpack.c.b16 %v2791, %v2787
        %v3316 = vpack.c.b16 %v2792, %v2788
        %v3317 = vpack.c.b16 %v2793, %v2789
        %v3318 = vpack.c.b16 %v2794, %v2790
        %v3319 = vpack.c.b16 %v2799, %v2795
        %v3320 = vpack.c.b16 %v2800, %v2796
        %v3321 = vpack.c.b16 %v2801, %v2797
        %v3322 = vpack.c.b16 %v2802, %v2798
        %v3323 = vpack.c.b16 %v2807, %v2803
        %v3324 = vpack.c.b16 %v2808, %v2804
        %v3325 = vpack.c.b16 %v2809, %v2805
        %v3326 = vpack.c.b16 %v2810, %v2806
        %v3327 = vpack.c.b16 %v2815, %v2811
        %v3328 = vpack.c.b16 %v2816, %v2812
        %v3329 = vpack.c.b16 %v2817, %v2813
        %v3330 = vpack.c.b16 %v2818, %v2814
        %3843 = vmatprep.subr.bf16.mxu0 %v2820
        %3844 = vmatpush1.bf16.msra.mxu0 %v2819
        %3845 = vmatprep.subr.bf16.mxu0 %v2824
        %3846 = vmatpush1.bf16.msra.mxu0 %v2823
        %3847 = vmatprep.subr.bf16.mxu0 %v2828
        %3848 = vmatpush1.bf16.msra.mxu0 %v2827
        %3849 = vmatprep.subr.bf16.mxu0 %v2832
        %3850 = vmatpush1.bf16.msra.mxu0 %v2831
        %3851 = vmatprep.subr.bf16.mxu0 %v2836
        %3852 = vmatpush1.bf16.msra.mxu0 %v2835
        %3853 = vmatprep.subr.bf16.mxu0 %v2840
        %3854 = vmatpush1.bf16.msra.mxu0 %v2839
        %3855 = vmatprep.subr.bf16.mxu0 %v2844
        %3856 = vmatpush1.bf16.msra.mxu0 %v2843
        %3857 = vmatprep.subr.bf16.mxu0 %v2848
        %3858 = vmatpush1.bf16.msra.mxu0 %v2847
        %3859 = vmatprep.subr.bf16.mxu0 %v2852
        %3860 = vmatpush1.bf16.msra.mxu0 %v2851
        %3861 = vmatprep.subr.bf16.mxu0 %v2856
        %3862 = vmatpush1.bf16.msra.mxu0 %v2855
        %3863 = vmatprep.subr.bf16.mxu0 %v2860
        %3864 = vmatpush1.bf16.msra.mxu0 %v2859
        %3865 = vmatprep.subr.bf16.mxu0 %v2864
        %3866 = vmatpush1.bf16.msra.mxu0 %v2863
        %3867 = vmatprep.subr.bf16.mxu0 %v2868
        %3868 = vmatpush1.bf16.msra.mxu0 %v2867
        %3869 = vmatprep.subr.bf16.mxu0 %v2872
        %3870 = vmatpush1.bf16.msra.mxu0 %v2871
        %3871 = vmatprep.subr.bf16.mxu0 %v2876
        %3872 = vmatpush1.bf16.msra.mxu0 %v2875
        %3873 = vmatprep.subr.bf16.mxu0 %v2880
        %3874 = vmatpush1.bf16.msra.mxu0 %v2879
        %3875 = vmatprep.mubr.bf16.mxu0 %v1252
        %3876 = vmatmul.mubr.bf16.gmra.mrb[0].mxu0 %v1251
        %v3877 = vpop.f32.mrb[0].mxu0
        %v3878 = vadd.f32 %v1210, %v3877
        %v3879 = vpop.f32.mrb[0].mxu0
        %v3880 = vadd.f32 %v1214, %v3879
        %v3881 = vpop.f32.mrb[0].mxu0
        %v3882 = vpop.f32.mrb[0].mxu0
        %3883 = vdwg.mxu0
        %3884 = vmatprep.subr.bf16.mxu0 %v2884
        %3885 = vmatpush1.bf16.msra.mxu0 %v2883
        %3886 = vmatprep.subr.bf16.mxu0 %v2888
        %3887 = vmatpush1.bf16.msra.mxu0 %v2887
        %3888 = vmatprep.subr.bf16.mxu0 %v2892
        %3889 = vmatpush1.bf16.msra.mxu0 %v2891
        %3890 = vmatprep.subr.bf16.mxu0 %v2896
        %3891 = vmatpush1.bf16.msra.mxu0 %v2895
        %3892 = vmatprep.subr.bf16.mxu0 %v2900
        %3893 = vmatpush1.bf16.msra.mxu0 %v2899
        %3894 = vmatprep.subr.bf16.mxu0 %v2904
        %3895 = vmatpush1.bf16.msra.mxu0 %v2903
        %3896 = vmatprep.subr.bf16.mxu0 %v2908
        %3897 = vmatpush1.bf16.msra.mxu0 %v2907
        %3898 = vmatprep.subr.bf16.mxu0 %v2912
        %3899 = vmatpush1.bf16.msra.mxu0 %v2911
        %3900 = vmatprep.subr.bf16.mxu0 %v2916
        %3901 = vmatpush1.bf16.msra.mxu0 %v2915
        %3902 = vmatprep.subr.bf16.mxu0 %v2920
        %3903 = vmatpush1.bf16.msra.mxu0 %v2919
        %3904 = vmatprep.subr.bf16.mxu0 %v2924
        %3905 = vmatpush1.bf16.msra.mxu0 %v2923
        %3906 = vmatprep.subr.bf16.mxu0 %v2928
        %3907 = vmatpush1.bf16.msra.mxu0 %v2927
        %3908 = vmatprep.subr.bf16.mxu0 %v2932
        %3909 = vmatpush1.bf16.msra.mxu0 %v2931
        %3910 = vmatprep.subr.bf16.mxu0 %v2936
        %3911 = vmatpush1.bf16.msra.mxu0 %v2935
        %3912 = vmatprep.subr.bf16.mxu0 %v2940
        %3913 = vmatpush1.bf16.msra.mxu0 %v2939
        %3914 = vmatprep.subr.bf16.mxu0 %v2944
        %3915 = vmatpush1.bf16.msra.mxu0 %v2943
        %3916 = vmatprep.mubr.bf16.mxu0 %v1254
        %3917 = vmatmul.mubr.bf16.gmra.mrb[0].mxu0 %v1253
        %v3918 = vpop.f32.mrb[0].mxu0
        %v3919 = vadd.f32 %v3878, %v3918
        %v3920 = vpop.f32.mrb[0].mxu0
        %v3921 = vadd.f32 %v3880, %v3920
        %v3922 = vpop.f32.mrb[0].mxu0
        %v3923 = vpop.f32.mrb[0].mxu0
        %3924 = vdwg.mxu0
        %3925 = vmatprep.subr.bf16.mxu0 %v2948
        %3926 = vmatpush1.bf16.msra.mxu0 %v2947
        %3927 = vmatprep.subr.bf16.mxu0 %v2952
        %3928 = vmatpush1.bf16.msra.mxu0 %v2951
        %3929 = vmatprep.subr.bf16.mxu0 %v2956
        %3930 = vmatpush1.bf16.msra.mxu0 %v2955
        %3931 = vmatprep.subr.bf16.mxu0 %v2960
        %3932 = vmatpush1.bf16.msra.mxu0 %v2959
        %3933 = vmatprep.subr.bf16.mxu0 %v2964
        %3934 = vmatpush1.bf16.msra.mxu0 %v2963
        %3935 = vmatprep.subr.bf16.mxu0 %v2968
        %3936 = vmatpush1.bf16.msra.mxu0 %v2967
        %3937 = vmatprep.subr.bf16.mxu0 %v2972
        %3938 = vmatpush1.bf16.msra.mxu0 %v2971
        %3939 = vmatprep.subr.bf16.mxu0 %v2976
        %3940 = vmatpush1.bf16.msra.mxu0 %v2975
        %3941 = vmatprep.subr.bf16.mxu0 %v2980
        %3942 = vmatpush1.bf16.msra.mxu0 %v2979
        %3943 = vmatprep.subr.bf16.mxu0 %v2984
        %3944 = vmatpush1.bf16.msra.mxu0 %v2983
        %3945 = vmatprep.subr.bf16.mxu0 %v2988
        %3946 = vmatpush1.bf16.msra.mxu0 %v2987
        %3947 = vmatprep.subr.bf16.mxu0 %v2992
        %3948 = vmatpush1.bf16.msra.mxu0 %v2991
        %3949 = vmatprep.subr.bf16.mxu0 %v2996
        %3950 = vmatpush1.bf16.msra.mxu0 %v2995
        %3951 = vmatprep.subr.bf16.mxu0 %v3000
        %3952 = vmatpush1.bf16.msra.mxu0 %v2999
        %3953 = vmatprep.subr.bf16.mxu0 %v3004
        %3954 = vmatpush1.bf16.msra.mxu0 %v3003
        %3955 = vmatprep.subr.bf16.mxu0 %v3008
        %3956 = vmatpush1.bf16.msra.mxu0 %v3007
        %3957 = vmatprep.mubr.bf16.mxu0 %v1256
        %3958 = vmatmul.mubr.bf16.gmra.mrb[0].mxu0 %v1255
        %v3959 = vpop.f32.mrb[0].mxu0
        %v3960 = vadd.f32 %v3919, %v3959
        %v3961 = vpop.f32.mrb[0].mxu0
        %v3962 = vadd.f32 %v3921, %v3961
        %v3963 = vpop.f32.mrb[0].mxu0
        %v3964 = vpop.f32.mrb[0].mxu0
        %3965 = vdwg.mxu0
        %3966 = vmatprep.subr.bf16.mxu0 %v3012
        %3967 = vmatpush1.bf16.msra.mxu0 %v3011
        %3968 = vmatprep.subr.bf16.mxu0 %v3016
        %3969 = vmatpush1.bf16.msra.mxu0 %v3015
        %3970 = vmatprep.subr.bf16.mxu0 %v3020
        %3971 = vmatpush1.bf16.msra.mxu0 %v3019
        %3972 = vmatprep.subr.bf16.mxu0 %v3024
        %3973 = vmatpush1.bf16.msra.mxu0 %v3023
        %3974 = vmatprep.subr.bf16.mxu0 %v3028
        %3975 = vmatpush1.bf16.msra.mxu0 %v3027
        %3976 = vmatprep.subr.bf16.mxu0 %v3032
        %3977 = vmatpush1.bf16.msra.mxu0 %v3031
        %3978 = vmatprep.subr.bf16.mxu0 %v3036
        %3979 = vmatpush1.bf16.msra.mxu0 %v3035
        %3980 = vmatprep.subr.bf16.mxu0 %v3040
        %3981 = vmatpush1.bf16.msra.mxu0 %v3039
        %3982 = vmatprep.subr.bf16.mxu0 %v3044
        %3983 = vmatpush1.bf16.msra.mxu0 %v3043
        %3984 = vmatprep.subr.bf16.mxu0 %v3048
        %3985 = vmatpush1.bf16.msra.mxu0 %v3047
        %3986 = vmatprep.subr.bf16.mxu0 %v3052
        %3987 = vmatpush1.bf16.msra.mxu0 %v3051
        %3988 = vmatprep.subr.bf16.mxu0 %v3056
        %3989 = vmatpush1.bf16.msra.mxu0 %v3055
        %3990 = vmatprep.subr.bf16.mxu0 %v3060
        %3991 = vmatpush1.bf16.msra.mxu0 %v3059
        %3992 = vmatprep.subr.bf16.mxu0 %v3064
        %3993 = vmatpush1.bf16.msra.mxu0 %v3063
        %3994 = vmatprep.subr.bf16.mxu0 %v3068
        %3995 = vmatpush1.bf16.msra.mxu0 %v3067
        %3996 = vmatprep.subr.bf16.mxu0 %v3072
        %3997 = vmatpush1.bf16.msra.mxu0 %v3071
        %3998 = vmatprep.mubr.bf16.mxu0 %v1258
        %3999 = vmatmul.mubr.bf16.gmra.mrb[0].mxu0 %v1257
        %v4000 = vpop.f32.mrb[0].mxu0
        %v4001 = vadd.f32 %v3960, %v4000
        %v4002 = vpop.f32.mrb[0].mxu0
        %v4003 = vadd.f32 %v3962, %v4002
        %v4004 = vpop.f32.mrb[0].mxu0
        %v4005 = vpop.f32.mrb[0].mxu0
        %4006 = vdwg.mxu0
        %4007 = vmatprep.subr.bf16.mxu0 %v3076
        %4008 = vmatpush1.bf16.msra.mxu0 %v3075
        %4009 = vmatprep.subr.bf16.mxu0 %v3080
        %4010 = vmatpush1.bf16.msra.mxu0 %v3079
        %4011 = vmatprep.subr.bf16.mxu0 %v3084
        %4012 = vmatpush1.bf16.msra.mxu0 %v3083
        %4013 = vmatprep.subr.bf16.mxu0 %v3088
        %4014 = vmatpush1.bf16.msra.mxu0 %v3087
        %4015 = vmatprep.subr.bf16.mxu0 %v3092
        %4016 = vmatpush1.bf16.msra.mxu0 %v3091
        %4017 = vmatprep.subr.bf16.mxu0 %v3096
        %4018 = vmatpush1.bf16.msra.mxu0 %v3095
        %4019 = vmatprep.subr.bf16.mxu0 %v3100
        %4020 = vmatpush1.bf16.msra.mxu0 %v3099
        %4021 = vmatprep.subr.bf16.mxu0 %v3104
        %4022 = vmatpush1.bf16.msra.mxu0 %v3103
        %4023 = vmatprep.subr.bf16.mxu0 %v3108
        %4024 = vmatpush1.bf16.msra.mxu0 %v3107
        %4025 = vmatprep.subr.bf16.mxu0 %v3112
        %4026 = vmatpush1.bf16.msra.mxu0 %v3111
        %4027 = vmatprep.subr.bf16.mxu0 %v3116
        %4028 = vmatpush1.bf16.msra.mxu0 %v3115
        %4029 = vmatprep.subr.bf16.mxu0 %v3120
        %4030 = vmatpush1.bf16.msra.mxu0 %v3119
        %4031 = vmatprep.subr.bf16.mxu0 %v3124
        %4032 = vmatpush1.bf16.msra.mxu0 %v3123
        %4033 = vmatprep.subr.bf16.mxu0 %v3128
        %4034 = vmatpush1.bf16.msra.mxu0 %v3127
        %4035 = vmatprep.subr.bf16.mxu0 %v3132
        %4036 = vmatpush1.bf16.msra.mxu0 %v3131
        %4037 = vmatprep.subr.bf16.mxu0 %v3136
        %4038 = vmatpush1.bf16.msra.mxu0 %v3135
        %4039 = vmatprep.mubr.bf16.mxu0 %v1260
        %4040 = vmatmul.mubr.bf16.gmra.mrb[0].mxu0 %v1259
        %v4041 = vpop.f32.mrb[0].mxu0
        %v4042 = vadd.f32 %v4001, %v4041
        %v4043 = vpop.f32.mrb[0].mxu0
        %v4044 = vadd.f32 %v4003, %v4043
        %v4045 = vpop.f32.mrb[0].mxu0
        %v4046 = vpop.f32.mrb[0].mxu0
        %4047 = vdwg.mxu0
        %4048 = vmatprep.subr.bf16.mxu0 %v3140
        %4049 = vmatpush1.bf16.msra.mxu0 %v3139
        %4050 = vmatprep.subr.bf16.mxu0 %v3144
        %4051 = vmatpush1.bf16.msra.mxu0 %v3143
        %4052 = vmatprep.subr.bf16.mxu0 %v3148
        %4053 = vmatpush1.bf16.msra.mxu0 %v3147
        %4054 = vmatprep.subr.bf16.mxu0 %v3152
        %4055 = vmatpush1.bf16.msra.mxu0 %v3151
        %4056 = vmatprep.subr.bf16.mxu0 %v3156
        %4057 = vmatpush1.bf16.msra.mxu0 %v3155
        %4058 = vmatprep.subr.bf16.mxu0 %v3160
        %4059 = vmatpush1.bf16.msra.mxu0 %v3159
        %4060 = vmatprep.subr.bf16.mxu0 %v3164
        %4061 = vmatpush1.bf16.msra.mxu0 %v3163
        %4062 = vmatprep.subr.bf16.mxu0 %v3168
        %4063 = vmatpush1.bf16.msra.mxu0 %v3167
        %4064 = vmatprep.subr.bf16.mxu0 %v3172
        %4065 = vmatpush1.bf16.msra.mxu0 %v3171
        %4066 = vmatprep.subr.bf16.mxu0 %v3176
        %4067 = vmatpush1.bf16.msra.mxu0 %v3175
        %4068 = vmatprep.subr.bf16.mxu0 %v3180
        %4069 = vmatpush1.bf16.msra.mxu0 %v3179
        %4070 = vmatprep.subr.bf16.mxu0 %v3184
        %4071 = vmatpush1.bf16.msra.mxu0 %v3183
        %4072 = vmatprep.subr.bf16.mxu0 %v3188
        %4073 = vmatpush1.bf16.msra.mxu0 %v3187
        %4074 = vmatprep.subr.bf16.mxu0 %v3192
        %4075 = vmatpush1.bf16.msra.mxu0 %v3191
        %4076 = vmatprep.subr.bf16.mxu0 %v3196
        %4077 = vmatpush1.bf16.msra.mxu0 %v3195
        %4078 = vmatprep.subr.bf16.mxu0 %v3200
        %4079 = vmatpush1.bf16.msra.mxu0 %v3199
        %4080 = vmatprep.mubr.bf16.mxu0 %v1262
        %4081 = vmatmul.mubr.bf16.gmra.mrb[0].mxu0 %v1261
        %v4082 = vpop.f32.mrb[0].mxu0
        %v4083 = vadd.f32 %v4042, %v4082
        %v4084 = vpop.f32.mrb[0].mxu0
        %v4085 = vadd.f32 %v4044, %v4084
        %v4086 = vpop.f32.mrb[0].mxu0
        %v4087 = vpop.f32.mrb[0].mxu0
        %4088 = vdwg.mxu0
        %4089 = vmatprep.subr.bf16.mxu0 %v3204
        %4090 = vmatpush1.bf16.msra.mxu0 %v3203
        %4091 = vmatprep.subr.bf16.mxu0 %v3208
        %4092 = vmatpush1.bf16.msra.mxu0 %v3207
        %4093 = vmatprep.subr.bf16.mxu0 %v3212
        %4094 = vmatpush1.bf16.msra.mxu0 %v3211
        %4095 = vmatprep.subr.bf16.mxu0 %v3216
        %4096 = vmatpush1.bf16.msra.mxu0 %v3215
        %4097 = vmatprep.subr.bf16.mxu0 %v3220
        %4098 = vmatpush1.bf16.msra.mxu0 %v3219
        %4099 = vmatprep.subr.bf16.mxu0 %v3224
        %4100 = vmatpush1.bf16.msra.mxu0 %v3223
        %4101 = vmatprep.subr.bf16.mxu0 %v3228
        %4102 = vmatpush1.bf16.msra.mxu0 %v3227
        %4103 = vmatprep.subr.bf16.mxu0 %v3232
        %4104 = vmatpush1.bf16.msra.mxu0 %v3231
        %4105 = vmatprep.subr.bf16.mxu0 %v3236
        %4106 = vmatpush1.bf16.msra.mxu0 %v3235
        %4107 = vmatprep.subr.bf16.mxu0 %v3240
        %4108 = vmatpush1.bf16.msra.mxu0 %v3239
        %4109 = vmatprep.subr.bf16.mxu0 %v3244
        %4110 = vmatpush1.bf16.msra.mxu0 %v3243
        %4111 = vmatprep.subr.bf16.mxu0 %v3248
        %4112 = vmatpush1.bf16.msra.mxu0 %v3247
        %4113 = vmatprep.subr.bf16.mxu0 %v3252
        %4114 = vmatpush1.bf16.msra.mxu0 %v3251
        %4115 = vmatprep.subr.bf16.mxu0 %v3256
        %4116 = vmatpush1.bf16.msra.mxu0 %v3255
        %4117 = vmatprep.subr.bf16.mxu0 %v3260
        %4118 = vmatpush1.bf16.msra.mxu0 %v3259
        %4119 = vmatprep.subr.bf16.mxu0 %v3264
        %4120 = vmatpush1.bf16.msra.mxu0 %v3263
        %4121 = vmatprep.mubr.bf16.mxu0 %v1264
        %4122 = vmatmul.mubr.bf16.gmra.mrb[0].mxu0 %v1263
        %v4123 = vpop.f32.mrb[0].mxu0
        %v4124 = vadd.f32 %v4083, %v4123
        %v4125 = vpop.f32.mrb[0].mxu0
        %v4126 = vadd.f32 %v4085, %v4125
        %v4127 = vpop.f32.mrb[0].mxu0
        %v4128 = vpop.f32.mrb[0].mxu0
        %4129 = vdwg.mxu0
        %4130 = vmatprep.subr.bf16.mxu0 %v3268
        %4131 = vmatpush1.bf16.msra.mxu0 %v3267
        %4132 = vmatprep.subr.bf16.mxu0 %v3272
        %4133 = vmatpush1.bf16.msra.mxu0 %v3271
        %4134 = vmatprep.subr.bf16.mxu0 %v3276
        %4135 = vmatpush1.bf16.msra.mxu0 %v3275
        %4136 = vmatprep.subr.bf16.mxu0 %v3280
        %4137 = vmatpush1.bf16.msra.mxu0 %v3279
        %4138 = vmatprep.subr.bf16.mxu0 %v3284
        %4139 = vmatpush1.bf16.msra.mxu0 %v3283
        %4140 = vmatprep.subr.bf16.mxu0 %v3288
        %4141 = vmatpush1.bf16.msra.mxu0 %v3287
        %4142 = vmatprep.subr.bf16.mxu0 %v3292
        %4143 = vmatpush1.bf16.msra.mxu0 %v3291
        %4144 = vmatprep.subr.bf16.mxu0 %v3296
        %4145 = vmatpush1.bf16.msra.mxu0 %v3295
        %4146 = vmatprep.subr.bf16.mxu0 %v3300
        %4147 = vmatpush1.bf16.msra.mxu0 %v3299
        %4148 = vmatprep.subr.bf16.mxu0 %v3304
        %4149 = vmatpush1.bf16.msra.mxu0 %v3303
        %4150 = vmatprep.subr.bf16.mxu0 %v3308
        %4151 = vmatpush1.bf16.msra.mxu0 %v3307
        %4152 = vmatprep.subr.bf16.mxu0 %v3312
        %4153 = vmatpush1.bf16.msra.mxu0 %v3311
        %4154 = vmatprep.subr.bf16.mxu0 %v3316
        %4155 = vmatpush1.bf16.msra.mxu0 %v3315
        %4156 = vmatprep.subr.bf16.mxu0 %v3320
        %4157 = vmatpush1.bf16.msra.mxu0 %v3319
        %4158 = vmatprep.subr.bf16.mxu0 %v3324
        %4159 = vmatpush1.bf16.msra.mxu0 %v3323
        %4160 = vmatprep.subr.bf16.mxu0 %v3328
        %4161 = vmatpush1.bf16.msra.mxu0 %v3327
        %4162 = vmatprep.mubr.bf16.mxu0 %v1266
        %4163 = vmatmul.mubr.bf16.gmra.mrb[0].mxu0 %v1265
        %v4164 = vpop.f32.mrb[0].mxu0
        %v4165 = vadd.f32 %v4124, %v4164
        %v4166 = vpop.f32.mrb[0].mxu0
        %v4167 = vadd.f32 %v4126, %v4166
        %v4168 = vpop.f32.mrb[0].mxu0
        %v4169 = vpop.f32.mrb[0].mxu0
        %4170 = vdwg.mxu0
        %4171 = vmatprep.subr.bf16.mxu0 %v2822
        %4172 = vmatpush1.bf16.msra.mxu0 %v2821
        %4173 = vmatprep.subr.bf16.mxu0 %v2826
        %4174 = vmatpush1.bf16.msra.mxu0 %v2825
        %4175 = vmatprep.subr.bf16.mxu0 %v2830
        %4176 = vmatpush1.bf16.msra.mxu0 %v2829
        %4177 = vmatprep.subr.bf16.mxu0 %v2834
        %4178 = vmatpush1.bf16.msra.mxu0 %v2833
        %4179 = vmatprep.subr.bf16.mxu0 %v2838
        %4180 = vmatpush1.bf16.msra.mxu0 %v2837
        %4181 = vmatprep.subr.bf16.mxu0 %v2842
        %4182 = vmatpush1.bf16.msra.mxu0 %v2841
        %4183 = vmatprep.subr.bf16.mxu0 %v2846
        %4184 = vmatpush1.bf16.msra.mxu0 %v2845
        %4185 = vmatprep.subr.bf16.mxu0 %v2850
        %4186 = vmatpush1.bf16.msra.mxu0 %v2849
        %4187 = vmatprep.subr.bf16.mxu0 %v2854
        %4188 = vmatpush1.bf16.msra.mxu0 %v2853
        %4189 = vmatprep.subr.bf16.mxu0 %v2858
        %4190 = vmatpush1.bf16.msra.mxu0 %v2857
        %4191 = vmatprep.subr.bf16.mxu0 %v2862
        %4192 = vmatpush1.bf16.msra.mxu0 %v2861
        %4193 = vmatprep.subr.bf16.mxu0 %v2866
        %4194 = vmatpush1.bf16.msra.mxu0 %v2865
        %4195 = vmatprep.subr.bf16.mxu0 %v2870
        %4196 = vmatpush1.bf16.msra.mxu0 %v2869
        %4197 = vmatprep.subr.bf16.mxu0 %v2874
        %4198 = vmatpush1.bf16.msra.mxu0 %v2873
        %4199 = vmatprep.subr.bf16.mxu0 %v2878
        %4200 = vmatpush1.bf16.msra.mxu0 %v2877
        %4201 = vmatprep.subr.bf16.mxu0 %v2882
        %4202 = vmatpush1.bf16.msra.mxu0 %v2881
        %4203 = vmatprep.mubr.bf16.mxu0 %v1252
        %4204 = vmatmul.mubr.bf16.gmra.mrb[0].mxu0 %v1251
        %v4205 = vpop.f32.mrb[0].mxu0
        %v4206 = vadd.f32 %v1218, %v4205
        %v4207 = vpop.f32.mrb[0].mxu0
        %v4208 = vadd.f32 %v1222, %v4207
        %v4209 = vpop.f32.mrb[0].mxu0
        %v4210 = vpop.f32.mrb[0].mxu0
        %4211 = vdwg.mxu0
        %4212 = vmatprep.subr.bf16.mxu0 %v2886
        %4213 = vmatpush1.bf16.msra.mxu0 %v2885
        %4214 = vmatprep.subr.bf16.mxu0 %v2890
        %4215 = vmatpush1.bf16.msra.mxu0 %v2889
        %4216 = vmatprep.subr.bf16.mxu0 %v2894
        %4217 = vmatpush1.bf16.msra.mxu0 %v2893
        %4218 = vmatprep.subr.bf16.mxu0 %v2898
        %4219 = vmatpush1.bf16.msra.mxu0 %v2897
        %4220 = vmatprep.subr.bf16.mxu0 %v2902
        %4221 = vmatpush1.bf16.msra.mxu0 %v2901
        %4222 = vmatprep.subr.bf16.mxu0 %v2906
        %4223 = vmatpush1.bf16.msra.mxu0 %v2905
        %4224 = vmatprep.subr.bf16.mxu0 %v2910
        %4225 = vmatpush1.bf16.msra.mxu0 %v2909
        %4226 = vmatprep.subr.bf16.mxu0 %v2914
        %4227 = vmatpush1.bf16.msra.mxu0 %v2913
        %4228 = vmatprep.subr.bf16.mxu0 %v2918
        %4229 = vmatpush1.bf16.msra.mxu0 %v2917
        %4230 = vmatprep.subr.bf16.mxu0 %v2922
        %4231 = vmatpush1.bf16.msra.mxu0 %v2921
        %4232 = vmatprep.subr.bf16.mxu0 %v2926
        %4233 = vmatpush1.bf16.msra.mxu0 %v2925
        %4234 = vmatprep.subr.bf16.mxu0 %v2930
        %4235 = vmatpush1.bf16.msra.mxu0 %v2929
        %4236 = vmatprep.subr.bf16.mxu0 %v2934
        %4237 = vmatpush1.bf16.msra.mxu0 %v2933
        %4238 = vmatprep.subr.bf16.mxu0 %v2938
        %4239 = vmatpush1.bf16.msra.mxu0 %v2937
        %4240 = vmatprep.subr.bf16.mxu0 %v2942
        %4241 = vmatpush1.bf16.msra.mxu0 %v2941
        %4242 = vmatprep.subr.bf16.mxu0 %v2946
        %4243 = vmatpush1.bf16.msra.mxu0 %v2945
        %4244 = vmatprep.mubr.bf16.mxu0 %v1254
        %4245 = vmatmul.mubr.bf16.gmra.mrb[0].mxu0 %v1253
        %v4246 = vpop.f32.mrb[0].mxu0
        %v4247 = vadd.f32 %v4206, %v4246
        %v4248 = vpop.f32.mrb[0].mxu0
        %v4249 = vadd.f32 %v4208, %v4248
        %v4250 = vpop.f32.mrb[0].mxu0
        %v4251 = vpop.f32.mrb[0].mxu0
        %4252 = vdwg.mxu0
        %4253 = vmatprep.subr.bf16.mxu0 %v2950
        %4254 = vmatpush1.bf16.msra.mxu0 %v2949
        %4255 = vmatprep.subr.bf16.mxu0 %v2954
        %4256 = vmatpush1.bf16.msra.mxu0 %v2953
        %4257 = vmatprep.subr.bf16.mxu0 %v2958
        %4258 = vmatpush1.bf16.msra.mxu0 %v2957
        %4259 = vmatprep.subr.bf16.mxu0 %v2962
        %4260 = vmatpush1.bf16.msra.mxu0 %v2961
        %4261 = vmatprep.subr.bf16.mxu0 %v2966
        %4262 = vmatpush1.bf16.msra.mxu0 %v2965
        %4263 = vmatprep.subr.bf16.mxu0 %v2970
        %4264 = vmatpush1.bf16.msra.mxu0 %v2969
        %4265 = vmatprep.subr.bf16.mxu0 %v2974
        %4266 = vmatpush1.bf16.msra.mxu0 %v2973
        %4267 = vmatprep.subr.bf16.mxu0 %v2978
        %4268 = vmatpush1.bf16.msra.mxu0 %v2977
        %4269 = vmatprep.subr.bf16.mxu0 %v2982
        %4270 = vmatpush1.bf16.msra.mxu0 %v2981
        %4271 = vmatprep.subr.bf16.mxu0 %v2986
        %4272 = vmatpush1.bf16.msra.mxu0 %v2985
        %4273 = vmatprep.subr.bf16.mxu0 %v2990
        %4274 = vmatpush1.bf16.msra.mxu0 %v2989
        %4275 = vmatprep.subr.bf16.mxu0 %v2994
        %4276 = vmatpush1.bf16.msra.mxu0 %v2993
        %4277 = vmatprep.subr.bf16.mxu0 %v2998
        %4278 = vmatpush1.bf16.msra.mxu0 %v2997
        %4279 = vmatprep.subr.bf16.mxu0 %v3002
        %4280 = vmatpush1.bf16.msra.mxu0 %v3001
        %4281 = vmatprep.subr.bf16.mxu0 %v3006
        %4282 = vmatpush1.bf16.msra.mxu0 %v3005
        %4283 = vmatprep.subr.bf16.mxu0 %v3010
        %4284 = vmatpush1.bf16.msra.mxu0 %v3009
        %4285 = vmatprep.mubr.bf16.mxu0 %v1256
        %4286 = vmatmul.mubr.bf16.gmra.mrb[0].mxu0 %v1255
        %v4287 = vpop.f32.mrb[0].mxu0
        %v4288 = vadd.f32 %v4247, %v4287
        %v4289 = vpop.f32.mrb[0].mxu0
        %v4290 = vadd.f32 %v4249, %v4289
        %v4291 = vpop.f32.mrb[0].mxu0
        %v4292 = vpop.f32.mrb[0].mxu0
        %4293 = vdwg.mxu0
        %4294 = vmatprep.subr.bf16.mxu0 %v3014
        %4295 = vmatpush1.bf16.msra.mxu0 %v3013
        %4296 = vmatprep.subr.bf16.mxu0 %v3018
        %4297 = vmatpush1.bf16.msra.mxu0 %v3017
        %4298 = vmatprep.subr.bf16.mxu0 %v3022
        %4299 = vmatpush1.bf16.msra.mxu0 %v3021
        %4300 = vmatprep.subr.bf16.mxu0 %v3026
        %4301 = vmatpush1.bf16.msra.mxu0 %v3025
        %4302 = vmatprep.subr.bf16.mxu0 %v3030
        %4303 = vmatpush1.bf16.msra.mxu0 %v3029
        %4304 = vmatprep.subr.bf16.mxu0 %v3034
        %4305 = vmatpush1.bf16.msra.mxu0 %v3033
        %4306 = vmatprep.subr.bf16.mxu0 %v3038
        %4307 = vmatpush1.bf16.msra.mxu0 %v3037
        %4308 = vmatprep.subr.bf16.mxu0 %v3042
        %4309 = vmatpush1.bf16.msra.mxu0 %v3041
        %4310 = vmatprep.subr.bf16.mxu0 %v3046
        %4311 = vmatpush1.bf16.msra.mxu0 %v3045
        %4312 = vmatprep.subr.bf16.mxu0 %v3050
        %4313 = vmatpush1.bf16.msra.mxu0 %v3049
        %4314 = vmatprep.subr.bf16.mxu0 %v3054
        %4315 = vmatpush1.bf16.msra.mxu0 %v3053
        %4316 = vmatprep.subr.bf16.mxu0 %v3058
        %4317 = vmatpush1.bf16.msra.mxu0 %v3057
        %4318 = vmatprep.subr.bf16.mxu0 %v3062
        %4319 = vmatpush1.bf16.msra.mxu0 %v3061
        %4320 = vmatprep.subr.bf16.mxu0 %v3066
        %4321 = vmatpush1.bf16.msra.mxu0 %v3065
        %4322 = vmatprep.subr.bf16.mxu0 %v3070
        %4323 = vmatpush1.bf16.msra.mxu0 %v3069
        %4324 = vmatprep.subr.bf16.mxu0 %v3074
        %4325 = vmatpush1.bf16.msra.mxu0 %v3073
        %4326 = vmatprep.mubr.bf16.mxu0 %v1258
        %4327 = vmatmul.mubr.bf16.gmra.mrb[0].mxu0 %v1257
        %v4328 = vpop.f32.mrb[0].mxu0
        %v4329 = vadd.f32 %v4288, %v4328
        %v4330 = vpop.f32.mrb[0].mxu0
        %v4331 = vadd.f32 %v4290, %v4330
        %v4332 = vpop.f32.mrb[0].mxu0
        %v4333 = vpop.f32.mrb[0].mxu0
        %4334 = vdwg.mxu0
        %4335 = vmatprep.subr.bf16.mxu0 %v3078
        %4336 = vmatpush1.bf16.msra.mxu0 %v3077
        %4337 = vmatprep.subr.bf16.mxu0 %v3082
        %4338 = vmatpush1.bf16.msra.mxu0 %v3081
        %4339 = vmatprep.subr.bf16.mxu0 %v3086
        %4340 = vmatpush1.bf16.msra.mxu0 %v3085
        %4341 = vmatprep.subr.bf16.mxu0 %v3090
        %4342 = vmatpush1.bf16.msra.mxu0 %v3089
        %4343 = vmatprep.subr.bf16.mxu0 %v3094
        %4344 = vmatpush1.bf16.msra.mxu0 %v3093
        %4345 = vmatprep.subr.bf16.mxu0 %v3098
        %4346 = vmatpush1.bf16.msra.mxu0 %v3097
        %4347 = vmatprep.subr.bf16.mxu0 %v3102
        %4348 = vmatpush1.bf16.msra.mxu0 %v3101
        %4349 = vmatprep.subr.bf16.mxu0 %v3106
        %4350 = vmatpush1.bf16.msra.mxu0 %v3105
        %4351 = vmatprep.subr.bf16.mxu0 %v3110
        %4352 = vmatpush1.bf16.msra.mxu0 %v3109
        %4353 = vmatprep.subr.bf16.mxu0 %v3114
        %4354 = vmatpush1.bf16.msra.mxu0 %v3113
        %4355 = vmatprep.subr.bf16.mxu0 %v3118
        %4356 = vmatpush1.bf16.msra.mxu0 %v3117
        %4357 = vmatprep.subr.bf16.mxu0 %v3122
        %4358 = vmatpush1.bf16.msra.mxu0 %v3121
        %4359 = vmatprep.subr.bf16.mxu0 %v3126
        %4360 = vmatpush1.bf16.msra.mxu0 %v3125
        %4361 = vmatprep.subr.bf16.mxu0 %v3130
        %4362 = vmatpush1.bf16.msra.mxu0 %v3129
        %4363 = vmatprep.subr.bf16.mxu0 %v3134
        %4364 = vmatpush1.bf16.msra.mxu0 %v3133
        %4365 = vmatprep.subr.bf16.mxu0 %v3138
        %4366 = vmatpush1.bf16.msra.mxu0 %v3137
        %4367 = vmatprep.mubr.bf16.mxu0 %v1260
        %4368 = vmatmul.mubr.bf16.gmra.mrb[0].mxu0 %v1259
        %v4369 = vpop.f32.mrb[0].mxu0
        %v4370 = vadd.f32 %v4329, %v4369
        %v4371 = vpop.f32.mrb[0].mxu0
        %v4372 = vadd.f32 %v4331, %v4371
        %v4373 = vpop.f32.mrb[0].mxu0
        %v4374 = vpop.f32.mrb[0].mxu0
        %4375 = vdwg.mxu0
        %4376 = vmatprep.subr.bf16.mxu0 %v3142
        %4377 = vmatpush1.bf16.msra.mxu0 %v3141
        %4378 = vmatprep.subr.bf16.mxu0 %v3146
        %4379 = vmatpush1.bf16.msra.mxu0 %v3145
        %4380 = vmatprep.subr.bf16.mxu0 %v3150
        %4381 = vmatpush1.bf16.msra.mxu0 %v3149
        %4382 = vmatprep.subr.bf16.mxu0 %v3154
        %4383 = vmatpush1.bf16.msra.mxu0 %v3153
        %4384 = vmatprep.subr.bf16.mxu0 %v3158
        %4385 = vmatpush1.bf16.msra.mxu0 %v3157
        %4386 = vmatprep.subr.bf16.mxu0 %v3162
        %4387 = vmatpush1.bf16.msra.mxu0 %v3161
        %4388 = vmatprep.subr.bf16.mxu0 %v3166
        %4389 = vmatpush1.bf16.msra.mxu0 %v3165
        %4390 = vmatprep.subr.bf16.mxu0 %v3170
        %4391 = vmatpush1.bf16.msra.mxu0 %v3169
        %4392 = vmatprep.subr.bf16.mxu0 %v3174
        %4393 = vmatpush1.bf16.msra.mxu0 %v3173
        %4394 = vmatprep.subr.bf16.mxu0 %v3178
        %4395 = vmatpush1.bf16.msra.mxu0 %v3177
        %4396 = vmatprep.subr.bf16.mxu0 %v3182
        %4397 = vmatpush1.bf16.msra.mxu0 %v3181
        %4398 = vmatprep.subr.bf16.mxu0 %v3186
        %4399 = vmatpush1.bf16.msra.mxu0 %v3185
        %4400 = vmatprep.subr.bf16.mxu0 %v3190
        %4401 = vmatpush1.bf16.msra.mxu0 %v3189
        %4402 = vmatprep.subr.bf16.mxu0 %v3194
        %4403 = vmatpush1.bf16.msra.mxu0 %v3193
        %4404 = vmatprep.subr.bf16.mxu0 %v3198
        %4405 = vmatpush1.bf16.msra.mxu0 %v3197
        %4406 = vmatprep.subr.bf16.mxu0 %v3202
        %4407 = vmatpush1.bf16.msra.mxu0 %v3201
        %4408 = vmatprep.mubr.bf16.mxu0 %v1262
        %4409 = vmatmul.mubr.bf16.gmra.mrb[0].mxu0 %v1261
        %v4410 = vpop.f32.mrb[0].mxu0
        %v4411 = vadd.f32 %v4370, %v4410
        %v4412 = vpop.f32.mrb[0].mxu0
        %v4413 = vadd.f32 %v4372, %v4412
        %v4414 = vpop.f32.mrb[0].mxu0
        %v4415 = vpop.f32.mrb[0].mxu0
        %4416 = vdwg.mxu0
        %4417 = vmatprep.subr.bf16.mxu0 %v3206
        %4418 = vmatpush1.bf16.msra.mxu0 %v3205
        %4419 = vmatprep.subr.bf16.mxu0 %v3210
        %4420 = vmatpush1.bf16.msra.mxu0 %v3209
        %4421 = vmatprep.subr.bf16.mxu0 %v3214
        %4422 = vmatpush1.bf16.msra.mxu0 %v3213
        %4423 = vmatprep.subr.bf16.mxu0 %v3218
        %4424 = vmatpush1.bf16.msra.mxu0 %v3217
        %4425 = vmatprep.subr.bf16.mxu0 %v3222
        %4426 = vmatpush1.bf16.msra.mxu0 %v3221
        %4427 = vmatprep.subr.bf16.mxu0 %v3226
        %4428 = vmatpush1.bf16.msra.mxu0 %v3225
        %4429 = vmatprep.subr.bf16.mxu0 %v3230
        %4430 = vmatpush1.bf16.msra.mxu0 %v3229
        %4431 = vmatprep.subr.bf16.mxu0 %v3234
        %4432 = vmatpush1.bf16.msra.mxu0 %v3233
        %4433 = vmatprep.subr.bf16.mxu0 %v3238
        %4434 = vmatpush1.bf16.msra.mxu0 %v3237
        %4435 = vmatprep.subr.bf16.mxu0 %v3242
        %4436 = vmatpush1.bf16.msra.mxu0 %v3241
        %4437 = vmatprep.subr.bf16.mxu0 %v3246
        %4438 = vmatpush1.bf16.msra.mxu0 %v3245
        %4439 = vmatprep.subr.bf16.mxu0 %v3250
        %4440 = vmatpush1.bf16.msra.mxu0 %v3249
        %4441 = vmatprep.subr.bf16.mxu0 %v3254
        %4442 = vmatpush1.bf16.msra.mxu0 %v3253
        %4443 = vmatprep.subr.bf16.mxu0 %v3258
        %4444 = vmatpush1.bf16.msra.mxu0 %v3257
        %4445 = vmatprep.subr.bf16.mxu0 %v3262
        %4446 = vmatpush1.bf16.msra.mxu0 %v3261
        %4447 = vmatprep.subr.bf16.mxu0 %v3266
        %4448 = vmatpush1.bf16.msra.mxu0 %v3265
        %4449 = vmatprep.mubr.bf16.mxu0 %v1264
        %4450 = vmatmul.mubr.bf16.gmra.mrb[0].mxu0 %v1263
        %v4451 = vpop.f32.mrb[0].mxu0
        %v4452 = vadd.f32 %v4411, %v4451
        %v4453 = vpop.f32.mrb[0].mxu0
        %v4454 = vadd.f32 %v4413, %v4453
        %v4455 = vpop.f32.mrb[0].mxu0
        %v4456 = vpop.f32.mrb[0].mxu0
        %4457 = vdwg.mxu0
        %4458 = vmatprep.subr.bf16.mxu0 %v3270
        %4459 = vmatpush1.bf16.msra.mxu0 %v3269
        %4460 = vmatprep.subr.bf16.mxu0 %v3274
        %4461 = vmatpush1.bf16.msra.mxu0 %v3273
        %4462 = vmatprep.subr.bf16.mxu0 %v3278
        %4463 = vmatpush1.bf16.msra.mxu0 %v3277
        %4464 = vmatprep.subr.bf16.mxu0 %v3282
        %4465 = vmatpush1.bf16.msra.mxu0 %v3281
        %4466 = vmatprep.subr.bf16.mxu0 %v3286
        %4467 = vmatpush1.bf16.msra.mxu0 %v3285
        %4468 = vmatprep.subr.bf16.mxu0 %v3290
        %4469 = vmatpush1.bf16.msra.mxu0 %v3289
        %4470 = vmatprep.subr.bf16.mxu0 %v3294
        %4471 = vmatpush1.bf16.msra.mxu0 %v3293
        %4472 = vmatprep.subr.bf16.mxu0 %v3298
        %4473 = vmatpush1.bf16.msra.mxu0 %v3297
        %4474 = vmatprep.subr.bf16.mxu0 %v3302
        %4475 = vmatpush1.bf16.msra.mxu0 %v3301
        %4476 = vmatprep.subr.bf16.mxu0 %v3306
        %4477 = vmatpush1.bf16.msra.mxu0 %v3305
        %4478 = vmatprep.subr.bf16.mxu0 %v3310
        %4479 = vmatpush1.bf16.msra.mxu0 %v3309
        %4480 = vmatprep.subr.bf16.mxu0 %v3314
        %4481 = vmatpush1.bf16.msra.mxu0 %v3313
        %4482 = vmatprep.subr.bf16.mxu0 %v3318
        %4483 = vmatpush1.bf16.msra.mxu0 %v3317
        %4484 = vmatprep.subr.bf16.mxu0 %v3322
        %4485 = vmatpush1.bf16.msra.mxu0 %v3321
        %4486 = vmatprep.subr.bf16.mxu0 %v3326
        %4487 = vmatpush1.bf16.msra.mxu0 %v3325
        %4488 = vmatprep.subr.bf16.mxu0 %v3330
        %4489 = vmatpush1.bf16.msra.mxu0 %v3329
        %4490 = vmatprep.mubr.bf16.mxu0 %v1266
        %4491 = vmatmul.mubr.bf16.gmra.mrb[0].mxu0 %v1265
        %v4492 = vpop.f32.mrb[0].mxu0
        %v4493 = vadd.f32 %v4452, %v4492
        %v4494 = vpop.f32.mrb[0].mxu0
        %v4495 = vadd.f32 %v4454, %v4494
        %v4496 = vpop.f32.mrb[0].mxu0
        %v4497 = vpop.f32.mrb[0].mxu0
        %4498 = vdwg.mxu0
        %v4499 = vmax.f32 %v4165, 0.0
        %v4500 = vmax.f32 %v4167, 0.0
        %v4501 = vmax.f32 %v4493, 0.0
        %v4502 = vmax.f32 %v4495, 0.0
        %v4503 = vld [vmem:[%s370] sm:$0xff]
        %v4504 = vld [vmem:[%s370 + $0x8] sm:$0xff]
        %v4505 = vld [vmem:[%s370 + $0x10] sm:$0xff]
        %v4506 = vld [vmem:[%s370 + $0x18] sm:$0xff]
        %v4507 = vld [vmem:[%s370 + $0x20] sm:$0xff]
        %v4508 = vld [vmem:[%s370 + $0x28] sm:$0xff]
        %v4509 = vld [vmem:[%s370 + $0x30] sm:$0xff]
        %v4510 = vld [vmem:[%s370 + $0x38] sm:$0xff]
        %v4511 = vld [vmem:[%s370 + $0x40] sm:$0xff]
        %v4512 = vld [vmem:[%s370 + $0x48] sm:$0xff]
        %v4513 = vld [vmem:[%s370 + $0x50] sm:$0xff]
        %v4514 = vld [vmem:[%s370 + $0x58] sm:$0xff]
        %v4515 = vld [vmem:[%s370 + $0x60] sm:$0xff]
        %v4516 = vld [vmem:[%s370 + $0x68] sm:$0xff]
        %v4517 = vld [vmem:[%s370 + $0x70] sm:$0xff]
        %v4518 = vld [vmem:[%s370 + $0x78] sm:$0xff]
        %v4519 = vld [vmem:[%s370 + $0x80] sm:$0xff]
        %v4520 = vld [vmem:[%s370 + $0x88] sm:$0xff]
        %v4521 = vld [vmem:[%s370 + $0x90] sm:$0xff]
        %v4522 = vld [vmem:[%s370 + $0x98] sm:$0xff]
        %v4523 = vld [vmem:[%s370 + $0xa0] sm:$0xff]
        %v4524 = vld [vmem:[%s370 + $0xa8] sm:$0xff]
        %v4525 = vld [vmem:[%s370 + $0xb0] sm:$0xff]
        %v4526 = vld [vmem:[%s370 + $0xb8] sm:$0xff]
        %v4527 = vld [vmem:[%s370 + $0xc0] sm:$0xff]
        %v4528 = vld [vmem:[%s370 + $0xc8] sm:$0xff]
        %v4529 = vld [vmem:[%s370 + $0xd0] sm:$0xff]
        %v4530 = vld [vmem:[%s370 + $0xd8] sm:$0xff]
        %v4531 = vld [vmem:[%s370 + $0xe0] sm:$0xff]
        %v4532 = vld [vmem:[%s370 + $0xe8] sm:$0xff]
        %v4533 = vld [vmem:[%s370 + $0xf0] sm:$0xff]
        %v4534 = vld [vmem:[%s370 + $0xf8] sm:$0xff]
        %v4535 = vld [vmem:[%s370 + $0x100] sm:$0xff]
        %v4536 = vld [vmem:[%s370 + $0x108] sm:$0xff]
        %v4537 = vld [vmem:[%s370 + $0x110] sm:$0xff]
        %v4538 = vld [vmem:[%s370 + $0x118] sm:$0xff]
        %v4539 = vld [vmem:[%s370 + $0x120] sm:$0xff]
        %v4540 = vld [vmem:[%s370 + $0x128] sm:$0xff]
        %v4541 = vld [vmem:[%s370 + $0x130] sm:$0xff]
        %v4542 = vld [vmem:[%s370 + $0x138] sm:$0xff]
        %v4543 = vld [vmem:[%s370 + $0x140] sm:$0xff]
        %v4544 = vld [vmem:[%s370 + $0x148] sm:$0xff]
        %v4545 = vld [vmem:[%s370 + $0x150] sm:$0xff]
        %v4546 = vld [vmem:[%s370 + $0x158] sm:$0xff]
        %v4547 = vld [vmem:[%s370 + $0x160] sm:$0xff]
        %v4548 = vld [vmem:[%s370 + $0x168] sm:$0xff]
        %v4549 = vld [vmem:[%s370 + $0x170] sm:$0xff]
        %v4550 = vld [vmem:[%s370 + $0x178] sm:$0xff]
        %v4551 = vld [vmem:[%s370 + $0x180] sm:$0xff]
        %v4552 = vld [vmem:[%s370 + $0x188] sm:$0xff]
        %v4553 = vld [vmem:[%s370 + $0x190] sm:$0xff]
        %v4554 = vld [vmem:[%s370 + $0x198] sm:$0xff]
        %v4555 = vld [vmem:[%s370 + $0x1a0] sm:$0xff]
        %v4556 = vld [vmem:[%s370 + $0x1a8] sm:$0xff]
        %v4557 = vld [vmem:[%s370 + $0x1b0] sm:$0xff]
        %v4558 = vld [vmem:[%s370 + $0x1b8] sm:$0xff]
        %v4559 = vld [vmem:[%s370 + $0x1c0] sm:$0xff]
        %v4560 = vld [vmem:[%s370 + $0x1c8] sm:$0xff]
        %v4561 = vld [vmem:[%s370 + $0x1d0] sm:$0xff]
        %v4562 = vld [vmem:[%s370 + $0x1d8] sm:$0xff]
        %v4563 = vld [vmem:[%s370 + $0x1e0] sm:$0xff]
        %v4564 = vld [vmem:[%s370 + $0x1e8] sm:$0xff]
        %v4565 = vld [vmem:[%s370 + $0x1f0] sm:$0xff]
        %v4566 = vld [vmem:[%s370 + $0x1f8] sm:$0xff]
        %4567 = vmatprep.subr.mxu0 0.0
        %4568 = vmatpush1.msra.mxu0 %v4503
        %4569 = vmatprep.subr.mxu0 0.0
        %4570 = vmatpush1.msra.mxu0 %v4504
        %4571 = vmatprep.subr.mxu0 0.0
        %4572 = vmatpush1.msra.mxu0 %v4505
        %4573 = vmatprep.subr.mxu0 0.0
        %4574 = vmatpush1.msra.mxu0 %v4506
        %4575 = vmatprep.subr.mxu0 0.0
        %4576 = vmatpush1.msra.mxu0 %v4507
        %4577 = vmatprep.subr.mxu0 0.0
        %4578 = vmatpush1.msra.mxu0 %v4508
        %4579 = vmatprep.subr.mxu0 0.0
        %4580 = vmatpush1.msra.mxu0 %v4509
        %4581 = vmatprep.subr.mxu0 0.0
        %4582 = vmatpush1.msra.mxu0 %v4510
        %4583 = vmatprep.subr.mxu0 0.0
        %4584 = vmatpush1.msra.mxu0 %v4511
        %4585 = vmatprep.subr.mxu0 0.0
        %4586 = vmatpush1.msra.mxu0 %v4512
        %4587 = vmatprep.subr.mxu0 0.0
        %4588 = vmatpush1.msra.mxu0 %v4513
        %4589 = vmatprep.subr.mxu0 0.0
        %4590 = vmatpush1.msra.mxu0 %v4514
        %4591 = vmatprep.subr.mxu0 0.0
        %4592 = vmatpush1.msra.mxu0 %v4515
        %4593 = vmatprep.subr.mxu0 0.0
        %4594 = vmatpush1.msra.mxu0 %v4516
        %4595 = vmatprep.subr.mxu0 0.0
        %4596 = vmatpush1.msra.mxu0 %v4517
        %4597 = vmatprep.subr.mxu0 0.0
        %4598 = vmatpush1.msra.mxu0 %v4518
        %4599 = vmatprep.subr.mxu0 0.0
        %4600 = vmatpush1.msra.mxu0 %v4519
        %4601 = vmatprep.subr.mxu0 0.0
        %4602 = vmatpush1.msra.mxu0 %v4520
        %4603 = vmatprep.subr.mxu0 0.0
        %4604 = vmatpush1.msra.mxu0 %v4521
        %4605 = vmatprep.subr.mxu0 0.0
        %4606 = vmatpush1.msra.mxu0 %v4522
        %4607 = vmatprep.subr.mxu0 0.0
        %4608 = vmatpush1.msra.mxu0 %v4523
        %4609 = vmatprep.subr.mxu0 0.0
        %4610 = vmatpush1.msra.mxu0 %v4524
        %4611 = vmatprep.subr.mxu0 0.0
        %4612 = vmatpush1.msra.mxu0 %v4525
        %4613 = vmatprep.subr.mxu0 0.0
        %4614 = vmatpush1.msra.mxu0 %v4526
        %4615 = vmatprep.subr.mxu0 0.0
        %4616 = vmatpush1.msra.mxu0 %v4527
        %4617 = vmatprep.subr.mxu0 0.0
        %4618 = vmatpush1.msra.mxu0 %v4528
        %4619 = vmatprep.subr.mxu0 0.0
        %4620 = vmatpush1.msra.mxu0 %v4529
        %4621 = vmatprep.subr.mxu0 0.0
        %4622 = vmatpush1.msra.mxu0 %v4530
        %4623 = vmatprep.subr.mxu0 0.0
        %4624 = vmatpush1.msra.mxu0 %v4531
        %4625 = vmatprep.subr.mxu0 0.0
        %4626 = vmatpush1.msra.mxu0 %v4532
        %4627 = vmatprep.subr.mxu0 0.0
        %4628 = vmatpush1.msra.mxu0 %v4533
        %4629 = vmatprep.subr.mxu0 0.0
        %4630 = vmatpush1.msra.mxu0 %v4534
        %4631 = vmatprep.mubr.f32.mxu0 %v4500
        %4632 = vmatmul.mubr.f32.gmra.mrb[0].mxu0 %v4499
        %v4633 = vpop.f32.mrb[0].mxu0
        %v4634 = vadd.f32 0.0, %v4633
        %v4635 = vpop.f32.mrb[0].mxu0
        %4636 = vdwg.mxu0
        %4637 = vmatprep.subr.mxu0 0.0
        %4638 = vmatpush1.msra.mxu0 %v4535
        %4639 = vmatprep.subr.mxu0 0.0
        %4640 = vmatpush1.msra.mxu0 %v4536
        %4641 = vmatprep.subr.mxu0 0.0
        %4642 = vmatpush1.msra.mxu0 %v4537
        %4643 = vmatprep.subr.mxu0 0.0
        %4644 = vmatpush1.msra.mxu0 %v4538
        %4645 = vmatprep.subr.mxu0 0.0
        %4646 = vmatpush1.msra.mxu0 %v4539
        %4647 = vmatprep.subr.mxu0 0.0
        %4648 = vmatpush1.msra.mxu0 %v4540
        %4649 = vmatprep.subr.mxu0 0.0
        %4650 = vmatpush1.msra.mxu0 %v4541
        %4651 = vmatprep.subr.mxu0 0.0
        %4652 = vmatpush1.msra.mxu0 %v4542
        %4653 = vmatprep.subr.mxu0 0.0
        %4654 = vmatpush1.msra.mxu0 %v4543
        %4655 = vmatprep.subr.mxu0 0.0
        %4656 = vmatpush1.msra.mxu0 %v4544
        %4657 = vmatprep.subr.mxu0 0.0
        %4658 = vmatpush1.msra.mxu0 %v4545
        %4659 = vmatprep.subr.mxu0 0.0
        %4660 = vmatpush1.msra.mxu0 %v4546
        %4661 = vmatprep.subr.mxu0 0.0
        %4662 = vmatpush1.msra.mxu0 %v4547
        %4663 = vmatprep.subr.mxu0 0.0
        %4664 = vmatpush1.msra.mxu0 %v4548
        %4665 = vmatprep.subr.mxu0 0.0
        %4666 = vmatpush1.msra.mxu0 %v4549
        %4667 = vmatprep.subr.mxu0 0.0
        %4668 = vmatpush1.msra.mxu0 %v4550
        %4669 = vmatprep.subr.mxu0 0.0
        %4670 = vmatpush1.msra.mxu0 %v4551
        %4671 = vmatprep.subr.mxu0 0.0
        %4672 = vmatpush1.msra.mxu0 %v4552
        %4673 = vmatprep.subr.mxu0 0.0
        %4674 = vmatpush1.msra.mxu0 %v4553
        %4675 = vmatprep.subr.mxu0 0.0
        %4676 = vmatpush1.msra.mxu0 %v4554
        %4677 = vmatprep.subr.mxu0 0.0
        %4678 = vmatpush1.msra.mxu0 %v4555
        %4679 = vmatprep.subr.mxu0 0.0
        %4680 = vmatpush1.msra.mxu0 %v4556
        %4681 = vmatprep.subr.mxu0 0.0
        %4682 = vmatpush1.msra.mxu0 %v4557
        %4683 = vmatprep.subr.mxu0 0.0
        %4684 = vmatpush1.msra.mxu0 %v4558
        %4685 = vmatprep.subr.mxu0 0.0
        %4686 = vmatpush1.msra.mxu0 %v4559
        %4687 = vmatprep.subr.mxu0 0.0
        %4688 = vmatpush1.msra.mxu0 %v4560
        %4689 = vmatprep.subr.mxu0 0.0
        %4690 = vmatpush1.msra.mxu0 %v4561
        %4691 = vmatprep.subr.mxu0 0.0
        %4692 = vmatpush1.msra.mxu0 %v4562
        %4693 = vmatprep.subr.mxu0 0.0
        %4694 = vmatpush1.msra.mxu0 %v4563
        %4695 = vmatprep.subr.mxu0 0.0
        %4696 = vmatpush1.msra.mxu0 %v4564
        %4697 = vmatprep.subr.mxu0 0.0
        %4698 = vmatpush1.msra.mxu0 %v4565
        %4699 = vmatprep.subr.mxu0 0.0
        %4700 = vmatpush1.msra.mxu0 %v4566
        %4701 = vmatprep.mubr.f32.mxu0 %v4502
        %4702 = vmatmul.mubr.f32.gmra.mrb[0].mxu0 %v4501
        %v4703 = vpop.f32.mrb[0].mxu0
        %v4704 = vadd.f32 %v4634, %v4703
        %v4705 = vpop.f32.mrb[0].mxu0
        %4706 = vdwg.mxu0
        // Predicated region
        $region77: #{tpu_custom_call.1} parent=47 // pred_check
          %p4707 = pneg %p407
        $region78: #{tpu_custom_call.1} parent=47 // pred_check_branch
          %4709 = sbr.rel (%p4707) target = $region80
        $region79: #{tpu_custom_call.1} parent=47 // pred_region
          %4710 = vst [vmem:[#allocation13] sm:$0xff] %v4704
        $region80: #{tpu_custom_call.1} parent=47 // pred_fallthru
          _
        %p4711 = scmp.gt.s32.totalorder %s27, 0
        // Predicated region
        $region81: #{tpu_custom_call.1} parent=47 // pred_check
          %p4712 = pneg %p4711
        $region82: #{tpu_custom_call.1} parent=47 // pred_check_branch
          %4714 = sbr.rel (%p4712) target = $region84
        $region83: #{tpu_custom_call.1} parent=47 // pred_region
          %v4715 = vld [vmem:[#allocation13] sm:$0xff]
          %v4716 = vadd.f32 %v4715, %v4704
          %4717 = vst [vmem:[#allocation13] sm:$0xff] %v4716
        $region84: #{tpu_custom_call.1} parent=47 // pred_fallthru
          _
        %p4718 = scmp.eq.s32.totalorder %s27, 1
        %p4719 = scmp.eq.s32.totalorder %s26, 0
        %p4720 = pnand %p4718, %p4719
        %p4721 = pneg %p4720
        // Predicated region
        $region85: #{tpu_custom_call.1} parent=47 // pred_check
          _
        $region86: #{tpu_custom_call.1} parent=47 // pred_check_branch
          %4723 = sbr.rel (%p4720) target = $region88
        $region87: #{tpu_custom_call.1} parent=47 // pred_region
          %v4724 = vld [vmem:[#allocation13] sm:$0xff]
          %v4725 = vld [vmem:[#allocation9] sm:$0x1]
          %v4727 = vlaneseq
          %v4728 = vshrl.u32 %v4727, 7
          %v4729 = vsub.s32 0, %v4728
          %v4730 = vrot.slane %v4725, %v4729
          %v4732 = vadd.f32 %v4724, %v4730
          %4733 = vst [vmem:[#allocation13] sm:$0xff] %v4732
        $region88: #{tpu_custom_call.1} parent=47 // pred_fallthru
          _
        // Predicated region
        $region89: #{tpu_custom_call.1} parent=47 // pred_check
          %p4734 = pneg %p217
        $region90: #{tpu_custom_call.1} parent=47 // pred_check_branch
          %4736 = sbr.rel (%p4734) target = $region92
        $region91: #{tpu_custom_call.1} parent=47 // pred_region
          %s4738 = ssub.s32 128, 128
          %4739 = vsyncadd [#allocation5], %s4738
          %s4740 = smul.addr %s26, 128
          %s4741 = scalar_lea.hbm %s7, %s4740
          %s4743 = sshll.u32 [#allocation13], 4
          %s4744 = int_to_ptr.vmem [resolvable:$true] %s4743
          %4746 = dma.vmem_to_hbm [thread:$0]  %s4744, 128, %s4741, [#allocation5]
        $region92: #{tpu_custom_call.1} parent=47 // pred_fallthru
          _
        // Predicated region
        $region93: #{tpu_custom_call.1} parent=47 // pred_check
          %p4747 = pneg %p217
        $region94: #{tpu_custom_call.1} parent=47 // pred_check_branch
          %4749 = sbr.rel (%p4747) target = $region96
        $region95: #{tpu_custom_call.1} parent=47 // pred_region
          %4750 = dma.done [#allocation5], 128
        $region96: #{tpu_custom_call.1} parent=47 // pred_fallthru
          _
      $region48: #{tpu_custom_call.1} parent=5 // pred_fallthru
        _
      %p4751 = scmp.le.s32.totalorder 2, %s17
      // Predicated region
      $region97: #{tpu_custom_call.1} parent=5 // pred_check
        %p4752 = pneg %p4751
      $region98: #{tpu_custom_call.1} parent=5 // pred_check_branch
        %4754 = sbr.rel (%p4752) target = $region100
      $region99: #{tpu_custom_call.1} parent=5 // pred_region
        %s4755 = ssub.s32 %s17, 2
      $region100: #{tpu_custom_call.1} parent=5 // pred_fallthru
        _
    $region6: #{tpu_custom_call.1} parent=1 // loop_footer
      %s21 = sadd.s32 1, %s17
    $region7: #{tpu_custom_call.1} parent=1 // loop_footer_branch
      %16 = sbr.rel target = $region3
    $region8: #{tpu_custom_call.1} parent=1 // loop_exit
      _
    %4756 = vsyncpa [#allocation4], 1
    %s4757 = scalar_lea.sflag [#allocation4], 1
    %4758 = vsyncpa %s4757, 1
    %4759 = vsyncpa [#allocation7], 1
    %4760 = vsyncpa [#allocation10], 1
    %4761 = vsyncpa [#allocation5], 1
    %s4762 = scalar_lea.sflag [#allocation5], 1
    %4763 = vsyncpa %s4762, 1

</llo_original>
